<compile_context>
chip_gen: v7x
topology: tpu7x:2x2x1
jax: 0.10.0
libtpu: 0.0.40
codegen_flags: <defaults>
</compile_context>

<pallas_src>
import functools

import jax
import jax.numpy as jnp
from jax.experimental import pallas as pl
from jax.experimental.pallas import tpu as pltpu

NEG_SLOPE = 0.2
BN_EPS = 1e-5
LANE = 128                          # lane width (matmul output padding)
SUB = 8                             # sublane multiple (stored channel padding)
TM_MAX = 512                        # max M-tile rows
VMEM_LIMIT = 48 * 1024 * 1024       # scoped VMEM cap: safe on v7x, roomy on v5e/v6e

_CONV_CPARAMS = pltpu.CompilerParams(
    dimension_semantics=("parallel",), vmem_limit_bytes=VMEM_LIMIT)
_TAIL_CPARAMS = pltpu.CompilerParams(
    dimension_semantics=("arbitrary",), vmem_limit_bytes=VMEM_LIMIT)


def _round_up(v, m):
    return (v + m - 1) // m * m


def _choose_tm(m):
    """Largest tile <= TM_MAX that divides m (multiple of 8), else TM_MAX."""
    if m <= TM_MAX:
        return m
    for tm in range(TM_MAX, SUB - 1, -SUB):
        if m % tm == 0:
            return tm
    return TM_MAX                     # ragged: last tile handled by zero rows


# ---------------------------------------------------------------------------
# Pallas kernels
# ---------------------------------------------------------------------------
def _conv_lrelu_kernel(p_ref, w_ref, o_ref):
    """im2col-matmul tile + LeakyReLU (no BatchNorm)."""
    acc = jnp.dot(p_ref[...], w_ref[...], preferred_element_type=jnp.float32)
    acc = acc[:, : o_ref.shape[-1]]               # drop lane padding of matmul
    o_ref[...] = jnp.maximum(acc, NEG_SLOPE * acc).astype(o_ref.dtype)


def _conv_bn_lrelu_kernel(p_ref, w_ref, g_ref, b_ref, o_ref, *, m_rows):
    """Fully fused matmul + training-mode BatchNorm + LeakyReLU (single M tile)."""
    acc = jnp.dot(p_ref[...], w_ref[...], preferred_element_type=jnp.float32)
    acc = acc[:, : o_ref.shape[-1]]               # drop lane padding of matmul
    inv_m = jnp.float32(1.0 / m_rows)
    mean = jnp.sum(acc, axis=0, keepdims=True) * inv_m
    var = jnp.maximum(
        jnp.sum(acc * acc, axis=0, keepdims=True) * inv_m - mean * mean, 0.0)
    scale = g_ref[...] * jax.lax.rsqrt(var + BN_EPS)
    shift = b_ref[...] - mean * scale
    y = acc * scale + shift
    o_ref[...] = jnp.maximum(y, NEG_SLOPE * y).astype(o_ref.dtype)


def _conv_stats_kernel(p_ref, w_ref, y_ref, s_ref):
    """Pass 1 (multi-tile BN fallback): matmul tile + per-tile (sum, sum_sq)."""
    acc = jnp.dot(p_ref[...], w_ref[...], preferred_element_type=jnp.float32)
    acc = acc[:, : y_ref.shape[-1]]
    y_ref[...] = acc.astype(y_ref.dtype)          # bf16 intermediate
    s_ref[0, 0, :] = jnp.sum(acc, axis=0)
    s_ref[0, 1, :] = jnp.sum(acc * acc, axis=0)


def _bn_lrelu_kernel(y_ref, sc_ref, sh_ref, o_ref):
    """Pass 2 (multi-tile BN fallback): affine BatchNorm + LeakyReLU."""
    y = y_ref[...].astype(jnp.float32) * sc_ref[...] + sh_ref[...]
    o_ref[...] = jnp.maximum(y, NEG_SLOPE * y).astype(o_ref.dtype)


def _tail_kernel(x_ref, w5_ref, wl_ref, bl_ref, o_ref, *, n_valid):
    """Fused conv5 (1x1 spatial output) + aux_linear + LogSoftmax."""
    h = jnp.dot(x_ref[...], w5_ref[...], preferred_element_type=jnp.float32)
    logits = jnp.dot(h.astype(jnp.bfloat16), wl_ref[...],
                     preferred_element_type=jnp.float32) + bl_ref[...]
    col = jax.lax.broadcasted_iota(jnp.int32, logits.shape, 1)
    logits = jnp.where(col < n_valid, logits, -1e30)   # mask padded classes
    m = jnp.max(logits, axis=-1, keepdims=True)
    s = logits - m
    lse = jnp.log(jnp.sum(jnp.exp(s), axis=-1, keepdims=True))
    o_ref[...] = s - lse


# ---------------------------------------------------------------------------
# im2col patch extraction (plain JAX, bf16)
# ---------------------------------------------------------------------------
def _im2col(x_nhwc, kh, kw, stride, pad):
    # TODO(synk): XLA still materialises the 4x-duplicated patch matrix; an
    # in-kernel strided patch gather would remove that HBM round trip.
    if pad:
        x_nhwc = jnp.pad(x_nhwc, ((0, 0), (pad, pad), (pad, pad), (0, 0)))
    N, Hp, Wp, C = x_nhwc.shape
    Ho = (Hp - kh) // stride + 1
    Wo = (Wp - kw) // stride + 1
    cols = []
    for i in range(kh):
        for j in range(kw):
            cols.append(x_nhwc[:, i:i + stride * Ho:stride,
                               j:j + stride * Wo:stride, :])
    patches = jnp.stack(cols, axis=-2)                # (N, Ho, Wo, kh*kw, C)
    return patches.reshape(N * Ho * Wo, kh * kw * C), N, Ho, Wo


# ---------------------------------------------------------------------------
# Conv layer: tiled matmul (+ fused or two-pass BatchNorm) + LeakyReLU
# ---------------------------------------------------------------------------
def _conv_layer(x_nhwc, w_p, gamma_p, beta_p, *, stride, pad, bn, cout):
    kin, cmm = w_p.shape                 # K and lane-padded matmul width
    p, N, Ho, Wo = _im2col(x_nhwc, 4, 4, stride, pad)
    M, k0 = p.shape
    assert k0 == kin, (k0, kin)
    TM = _choose_tm(M)
    Mp = _round_up(M, TM)
    if Mp != M:                          # ragged last tile -> zero rows
        p = jnp.pad(p, ((0, Mp - M), (0, 0)))
    nt = Mp // TM

    p_spec = pl.BlockSpec((TM, kin), lambda i: (i, 0))
    w_spec = pl.BlockSpec((kin, cmm), lambda i: (0, 0))
    o_spec = pl.BlockSpec((TM, cout), lambda i: (i, 0))
    c_spec = pl.BlockSpec((1, cout), lambda i: (0, 0))

    if not bn:
        out = pl.pallas_call(
            _conv_lrelu_kernel,
            out_shape=jax.ShapeDtypeStruct((Mp, cout), jnp.bfloat16),
            grid=(nt,), in_specs=[p_spec, w_spec], out_specs=o_spec,
            compiler_params=_CONV_CPARAMS,
        )(p, w_p)
    elif nt == 1:
        # Single fused call: matmul + batch stats + affine BN + LeakyReLU.
        out = pl.pallas_call(
            functools.partial(_conv_bn_lrelu_kernel, m_rows=M),
            out_shape=jax.ShapeDtypeStruct((Mp, cout), jnp.bfloat16),
            grid=(1,),
            in_specs=[p_spec, w_spec, c_spec, c_spec],
            out_specs=o_spec,
            compiler_params=_CONV_CPARAMS,
        )(p, w_p, gamma_p, beta_p)
    else:
        # Two-pass fallback for large M: bf16 intermediate + per-tile stats.
        y, stats = pl.pallas_call(
            _conv_stats_kernel,
            out_shape=(jax.ShapeDtypeStruct((Mp, cout), jnp.bfloat16),
                       jax.ShapeDtypeStruct((nt, 2, cout), jnp.float32)),
            grid=(nt,),
            in_specs=[p_spec, w_spec],
            out_specs=(o_spec,
                       pl.BlockSpec((1, 2, cout), lambda i: (i, 0, 0))),
            compiler_params=_CONV_CPARAMS,
        )(p, w_p)
        tot = jnp.sum(stats, axis=0)                  # (2, cout)
        inv_m = 1.0 / jnp.float32(M)                  # padded rows are zero
        mean = tot[0] * inv_m
        var = jnp.maximum(tot[1] * inv_m - mean * mean, 0.0)
        scale = gamma_p[0] * jax.lax.rsqrt(var + BN_EPS)
        shift = beta_p[0] - mean * scale
        out = pl.pallas_call(
            _bn_lrelu_kernel,
            out_shape=jax.ShapeDtypeStruct((Mp, cout), jnp.bfloat16),
            grid=(nt,),
            in_specs=[o_spec, c_spec, c_spec],
            out_specs=o_spec,
            compiler_params=_CONV_CPARAMS,
        )(y, scale.reshape(1, cout), shift.reshape(1, cout))

    if Mp != M:
        out = out[:M]
    return out.reshape(N, Ho, Wo, cout)


# ---------------------------------------------------------------------------
# Fused tail: conv5 + x.view(-1, 2*ndf) + aux_linear + LogSoftmax
# ---------------------------------------------------------------------------
def _tail(x4_nhwc, w5_p, lin_w_p, lin_b_p, *, nb_label):
    N, H, W, c4 = x4_nhwc.shape
    assert H == 4 and W == 4, \
        "conv5 expects a 4x4 spatial input (use 64x64 network input)"
    k5, c5 = w5_p.shape
    assert k5 == H * W * c4
    chp = lin_w_p.shape[1]
    n_cls = nb_label + 1
    x5 = x4_nhwc.reshape(N, k5)                       # bf16 already
    out = pl.pallas_call(
        functools.partial(_tail_kernel, n_valid=n_cls),
        out_shape=jax.ShapeDtypeStruct((N, chp), jnp.float32),
        grid=(1,),
        in_specs=[pl.BlockSpec((N, k5), lambda i: (0, 0)),
                  pl.BlockSpec((k5, c5), lambda i: (0, 0)),
                  pl.BlockSpec((c5, chp), lambda i: (0, 0)),
                  pl.BlockSpec((1, chp), lambda i: (0, 0))],
        out_specs=pl.BlockSpec((N, chp), lambda i: (0, 0)),
        compiler_params=_TAIL_CPARAMS,
    )(x5, w5_p, lin_w_p, lin_b_p)
    return out[:, :n_cls]


# ---------------------------------------------------------------------------
# Parameters (synthetic init mirroring weights_init) + one-time packing
# ---------------------------------------------------------------------------
def init_params(key, ndf, nc, nb_label):
    ks = jax.random.split(key, 10)
    n = lambda k, s, std: std * jax.random.normal(k, s, jnp.float32)
    p = {}
    p["conv1_w"] = n(ks[0], (4, 4, nc, ndf), 0.01)
    p["conv2_w"] = n(ks[1], (4, 4, ndf, ndf * 2), 0.01)
    p["conv3_w"] = n(ks[2], (4, 4, ndf * 2, ndf * 4), 0.01)
    p["conv4_w"] = n(ks[3], (4, 4, ndf * 4, ndf * 8), 0.01)
    p["conv5_w"] = n(ks[4], (4, 4, ndf * 8, ndf * 2), 0.01)
    p["bn2_g"] = 1.0 + n(ks[5], (ndf * 2,), 0.01)
    p["bn3_g"] = 1.0 + n(ks[6], (ndf * 4,), 0.01)
    p["bn4_g"] = 1.0 + n(ks[7], (ndf * 8,), 0.01)
    p["bn2_b"] = jnp.zeros((ndf * 2,), jnp.float32)
    p["bn3_b"] = jnp.zeros((ndf * 4,), jnp.float32)
    p["bn4_b"] = jnp.zeros((ndf * 8,), jnp.float32)
    bound = 1.0 / jnp.sqrt(jnp.float32(ndf * 2))
    p["lin_w"] = jax.random.uniform(ks[8], (ndf * 2, nb_label + 1),
                                    jnp.float32, -bound, bound)
    p["lin_b"] = jax.random.uniform(ks[9], (nb_label + 1,),
                                    jnp.float32, -bound, bound)
    return p


def pack_params(p):
    """One-time packing (outside the jitted forward): reshape conv weights to
    (K, Cout_mm) with cin sublane-padded and cout lane-padded, cast matmul
    operands to bf16, and pre-pad BN/linear parameters."""
    def pack_conv(w):
        kh, kw, cin, cout = w.shape
        cin_p = _round_up(cin, SUB)          # matches previous layer's stores
        cout_mm = _round_up(cout, LANE)      # lane-padded matmul width
        w = jnp.pad(w, ((0, 0), (0, 0), (0, cin_p - cin), (0, cout_mm - cout)))
        return w.reshape(kh * kw * cin_p, cout_mm).astype(jnp.bfloat16)

    def pack_bn(g, b):
        c = g.shape[0]
        cp = _round_up(c, SUB)               # zero-pad -> padded channels stay 0
        return (jnp.pad(g, (0, cp - c)).reshape(1, cp).astype(jnp.float32),
                jnp.pad(b, (0, cp - c)).reshape(1, cp).astype(jnp.float32))

    q = {k: pack_conv(p[k]) for k in
         ("conv1_w", "conv2_w", "conv3_w", "conv4_w", "conv5_w")}
    q["bn2_g"], q["bn2_b"] = pack_bn(p["bn2_g"], p["bn2_b"])
    q["bn3_g"], q["bn3_b"] = pack_bn(p["bn3_g"], p["bn3_b"])
    q["bn4_g"], q["bn4_b"] = pack_bn(p["bn4_g"], p["bn4_b"])
    cin, n_cls = p["lin_w"].shape
    cin_p = _round_up(cin, LANE)             # matches conv5 matmul width
    chp = _round_up(n_cls, LANE)
    q["lin_w"] = jnp.pad(p["lin_w"],
                         ((0, cin_p - cin), (0, chp - n_cls))).astype(jnp.bfloat16)
    q["lin_b"] = jnp.pad(p["lin_b"], (0, chp - n_cls)).reshape(1, chp) \
                    .astype(jnp.float32)
    return q


# ---------------------------------------------------------------------------
# Forward pass (mirrors netD.forward; BatchNorm1 is unused, as in the module)
# ---------------------------------------------------------------------------
@functools.partial(jax.jit, static_argnames=("ndf", "nb_label"))
def netd_forward(x_nchw, packed, *, ndf, nb_label):
    x = jnp.transpose(x_nchw, (0, 2, 3, 1)).astype(jnp.bfloat16)   # NCHW->NHWC
    nc = x.shape[-1]
    nc_p = packed["conv1_w"].shape[0] // 16        # conv1 packed input channels
    if nc_p != nc:                                  # pad once so conv1 K = 16*nc_p
        x = jnp.pad(x, ((0, 0), (0, 0), (0, 0), (0, nc_p - nc)))
    c1 = _round_up(ndf, SUB)
    c2 = _round_up(ndf * 2, SUB)
    c3 = _round_up(ndf * 4, SUB)
    c4 = _round_up(ndf * 8, SUB)
    # conv1 + LeakyReLU (no BatchNorm in the reference forward)
    x = _conv_layer(x, packed["conv1_w"], None, None,
                    stride=2, pad=1, bn=False, cout=c1)
    # conv2 + BN2 + LeakyReLU (fully fused when M fits one tile)
    x = _conv_layer(x, packed["conv2_w"], packed["bn2_g"], packed["bn2_b"],
                    stride=2, pad=1, bn=True, cout=c2)
    # TODO(synk): DropBlock2D is not defined in the reference snippet; with
    # drop_prob=0 / eval it is the identity, so it is treated as such here.
    # conv3 + BN3 + LeakyReLU
    x = _conv_layer(x, packed["conv3_w"], packed["bn3_g"], packed["bn3_b"],
                    stride=2, pad=1, bn=True, cout=c3)
    # conv4 + BN4 + LeakyReLU
    x = _conv_layer(x, packed["conv4_w"], packed["bn4_g"], packed["bn4_b"],
                    stride=2, pad=1, bn=True, cout=c4)
    # conv5 + view(-1, 2*ndf) + aux_linear + LogSoftmax, fused in one kernel
    return _tail(x, packed["conv5_w"], packed["lin_w"], packed["lin_b"],
                 nb_label=nb_label)


if __name__ == "__main__":
    ndf, nc, nb_label = 8, 3, 9
    batch, spatial = 2, 64  # conv stack needs 64x64 input to reach 4x4 at conv5

    key = jax.random.PRNGKey(0)
    k_params, k_x = jax.random.split(key)
    params = init_params(k_params, ndf, nc, nb_label)
    packed = pack_params(params)          # one-time packing, outside the forward
    x = jax.random.normal(k_x, (batch, nc, spatial, spatial), jnp.float32)

    out = netd_forward(x, packed, ndf=ndf, nb_label=nb_label)
    out = jax.block_until_ready(out)
    assert out.shape == (batch, nb_label + 1), out.shape
    assert bool(jnp.isfinite(out).all())
    # log-softmax rows must sum to 1 in probability space
    assert bool(jnp.allclose(jnp.sum(jnp.exp(out), axis=-1), 1.0, atol=1e-3))
    print("KERNEL_OK")
</pallas_src>

<mosaic_0001>
module attributes {stable_mosaic.version = 11 : i64} {
  func.func @_conv_lrelu_kernel(%arg0: i32, %arg1: memref<512x128xbf16, #tpu.memory_space<vmem>>, %arg2: memref<128x128xbf16, #tpu.memory_space<vmem>>, %arg3: memref<512x8xbf16, #tpu.memory_space<vmem>>) attributes {dimension_semantics = [#tpu.dimension_semantics<parallel>], iteration_bounds = array<i64: 4>, scalar_prefetch = 0 : i64, scratch_operands = 0 : i64, tpu.core_type = #tpu.core_type<tc>, window_params = [{transform_indices = @transform_0, window_bounds = array<i64: 512, 128>}, {pipeline_mode = #tpu.pipeline_mode<synchronous>, transform_indices = @transform_1, window_bounds = array<i64: 128, 128>}, {transform_indices = @transform_2, window_bounds = array<i64: 512, 8>}]} {
    %c0 = arith.constant 0 : index
    %c0_0 = arith.constant 0 : index
    %0 = vector.load %arg1[%c0, %c0_0] : memref<512x128xbf16, #tpu.memory_space<vmem>>, vector<512x128xbf16>
    %c0_1 = arith.constant 0 : index
    %c0_2 = arith.constant 0 : index
    %1 = vector.load %arg2[%c0_1, %c0_2] : memref<128x128xbf16, #tpu.memory_space<vmem>>, vector<128x128xbf16>
    %cst = arith.constant dense<0.000000e+00> : vector<512x128xf32>
    %2 = tpu.matmul %0, %1, %cst {dimension_numbers = #tpu.dot_dimension_numbers<[1], [0], [0], [1], [0, 0, 1, 1], [], []>} : vector<512x128xbf16>, vector<128x128xbf16>, vector<512x128xf32> -> vector<512x128xf32>
    %3 = vector.extract_strided_slice %2 {offsets = [0, 0], sizes = [512, 8], strides = [1, 1]} : vector<512x128xf32> to vector<512x8xf32>
    %cst_3 = arith.constant 2.000000e-01 : f32
    %4 = vector.broadcast %cst_3 : f32 to vector<512x8xf32>
    %5 = arith.mulf %4, %3 : vector<512x8xf32>
    %6 = arith.maximumf %3, %5 : vector<512x8xf32>
    %7 = arith.truncf %6 : vector<512x8xf32> to vector<512x8xbf16>
    %c0_4 = arith.constant 0 : index
    %c0_5 = arith.constant 0 : index
    %8 = vector.load %arg3[%c0_4, %c0_5] : memref<512x8xbf16, #tpu.memory_space<vmem>>, vector<512x8xbf16>
    tpu.vector_store %arg3[%c0_4, %c0_5], %7 {strides = array<i32>} : memref<512x8xbf16, #tpu.memory_space<vmem>>, vector<512x8xbf16>,
    return
  }
  func.func @transform_0(%arg0: i32) -> (i32, i32) {
    %c0_i32 = arith.constant 0 : i32
    %c0_i32_0 = arith.constant 0 : i32
    return %arg0, %c0_i32 : i32, i32
  }
  func.func @transform_1(%arg0: i32) -> (i32, i32) {
    %c0_i32 = arith.constant 0 : i32
    %c0_i32_0 = arith.constant 0 : i32
    %c0_i32_1 = arith.constant 0 : i32
    return %c0_i32, %c0_i32_0 : i32, i32
  }
  func.func @transform_2(%arg0: i32) -> (i32, i32) {
    %c0_i32 = arith.constant 0 : i32
    %c0_i32_0 = arith.constant 0 : i32
    return %arg0, %c0_i32 : i32, i32
  }
}

module attributes {stable_mosaic.version = 11 : i64} {
  func.func @_conv_bn_lrelu_kernel(%arg0: i32, %arg1: memref<512x128xbf16, #tpu.memory_space<vmem>>, %arg2: memref<128x128xbf16, #tpu.memory_space<vmem>>, %arg3: memref<1x16xf32, #tpu.memory_space<vmem>>, %arg4: memref<1x16xf32, #tpu.memory_space<vmem>>, %arg5: memref<512x16xbf16, #tpu.memory_space<vmem>>) attributes {dimension_semantics = [#tpu.dimension_semantics<parallel>], iteration_bounds = array<i64: 1>, scalar_prefetch = 0 : i64, scratch_operands = 0 : i64, tpu.core_type = #tpu.core_type<tc>, window_params = [{transform_indices = @transform_0, window_bounds = array<i64: 512, 128>}, {pipeline_mode = #tpu.pipeline_mode<synchronous>, transform_indices = @transform_1, window_bounds = array<i64: 128, 128>}, {pipeline_mode = #tpu.pipeline_mode<synchronous>, transform_indices = @transform_2, window_bounds = array<i64: 1, 16>}, {pipeline_mode = #tpu.pipeline_mode<synchronous>, transform_indices = @transform_3, window_bounds = array<i64: 1, 16>}, {transform_indices = @transform_4, window_bounds = array<i64: 512, 16>}]} {
    %c0 = arith.constant 0 : index
    %c0_0 = arith.constant 0 : index
    %0 = vector.load %arg1[%c0, %c0_0] : memref<512x128xbf16, #tpu.memory_space<vmem>>, vector<512x128xbf16>
    %c0_1 = arith.constant 0 : index
    %c0_2 = arith.constant 0 : index
    %1 = vector.load %arg2[%c0_1, %c0_2] : memref<128x128xbf16, #tpu.memory_space<vmem>>, vector<128x128xbf16>
    %cst = arith.constant dense<0.000000e+00> : vector<512x128xf32>
    %2 = tpu.matmul %0, %1, %cst {dimension_numbers = #tpu.dot_dimension_numbers<[1], [0], [0], [1], [0, 0, 1, 1], [], []>} : vector<512x128xbf16>, vector<128x128xbf16>, vector<512x128xf32> -> vector<512x128xf32>
    %3 = vector.extract_strided_slice %2 {offsets = [0, 0], sizes = [512, 16], strides = [1, 1]} : vector<512x128xf32> to vector<512x16xf32>
    %cst_3 = arith.constant dense<0.000000e+00> : vector<16xf32>
    %4 = vector.multi_reduction <add>, %3, %cst_3 [0] : vector<512x16xf32> to vector<16xf32>
    %5 = vector.shape_cast %4 : vector<16xf32> to vector<1x16xf32>
    %cst_4 = arith.constant 0.001953125 : f32
    %6 = vector.broadcast %cst_4 : f32 to vector<1x16xf32>
    %7 = arith.mulf %5, %6 : vector<1x16xf32>
    %8 = arith.mulf %3, %3 : vector<512x16xf32>
    %cst_5 = arith.constant dense<0.000000e+00> : vector<16xf32>
    %9 = vector.multi_reduction <add>, %8, %cst_5 [0] : vector<512x16xf32> to vector<16xf32>
    %10 = vector.shape_cast %9 : vector<16xf32> to vector<1x16xf32>
    %cst_6 = arith.constant 0.001953125 : f32
    %11 = vector.broadcast %cst_6 : f32 to vector<1x16xf32>
    %12 = arith.mulf %10, %11 : vector<1x16xf32>
    %13 = arith.mulf %7, %7 : vector<1x16xf32>
    %14 = arith.subf %12, %13 : vector<1x16xf32>
    %cst_7 = arith.constant 0.000000e+00 : f32
    %15 = vector.broadcast %cst_7 : f32 to vector<1x16xf32>
    %16 = arith.maximumf %14, %15 : vector<1x16xf32>
    %c0_8 = arith.constant 0 : index
    %c0_9 = arith.constant 0 : index
    %17 = vector.load %arg3[%c0_8, %c0_9] : memref<1x16xf32, #tpu.memory_space<vmem>>, vector<1x16xf32>
    %cst_10 = arith.constant 9.99999974E-6 : f32
    %18 = vector.broadcast %cst_10 : f32 to vector<1x16xf32>
    %19 = arith.addf %16, %18 : vector<1x16xf32>
    %20 = math.rsqrt %19 : vector<1x16xf32>
    %21 = arith.mulf %17, %20 : vector<1x16xf32>
    %c0_11 = arith.constant 0 : index
    %c0_12 = arith.constant 0 : index
    %22 = vector.load %arg4[%c0_11, %c0_12] : memref<1x16xf32, #tpu.memory_space<vmem>>, vector<1x16xf32>
    %23 = arith.mulf %7, %21 : vector<1x16xf32>
    %24 = arith.subf %22, %23 : vector<1x16xf32>
    %25 = vector.broadcast %21 : vector<1x16xf32> to vector<512x16xf32>
    %26 = arith.mulf %3, %25 : vector<512x16xf32>
    %27 = vector.broadcast %24 : vector<1x16xf32> to vector<512x16xf32>
    %28 = arith.addf %26, %27 : vector<512x16xf32>
    %cst_13 = arith.constant 2.000000e-01 : f32
    %29 = vector.broadcast %cst_13 : f32 to vector<512x16xf32>
    %30 = arith.mulf %29, %28 : vector<512x16xf32>
    %31 = arith.maximumf %28, %30 : vector<512x16xf32>
    %32 = arith.truncf %31 : vector<512x16xf32> to vector<512x16xbf16>
    %c0_14 = arith.constant 0 : index
    %c0_15 = arith.constant 0 : index
    %33 = vector.load %arg5[%c0_14, %c0_15] : memref<512x16xbf16, #tpu.memory_space<vmem>>, vector<512x16xbf16>
    tpu.vector_store %arg5[%c0_14, %c0_15], %32 {strides = array<i32>} : memref<512x16xbf16, #tpu.memory_space<vmem>>, vector<512x16xbf16>,
    return
  }
  func.func @transform_0(%arg0: i32) -> (i32, i32) {
    %c0_i32 = arith.constant 0 : i32
    %c0_i32_0 = arith.constant 0 : i32
    return %arg0, %c0_i32 : i32, i32
  }
  func.func @transform_1(%arg0: i32) -> (i32, i32) {
    %c0_i32 = arith.constant 0 : i32
    %c0_i32_0 = arith.constant 0 : i32
    %c0_i32_1 = arith.constant 0 : i32
    return %c0_i32, %c0_i32_0 : i32, i32
  }
  func.func @transform_2(%arg0: i32) -> (i32, i32) {
    %c0_i32 = arith.constant 0 : i32
    %c0_i32_0 = arith.constant 0 : i32
    %c0_i32_1 = arith.constant 0 : i32
    return %c0_i32, %c0_i32_0 : i32, i32
  }
  func.func @transform_3(%arg0: i32) -> (i32, i32) {
    %c0_i32 = arith.constant 0 : i32
    %c0_i32_0 = arith.constant 0 : i32
    %c0_i32_1 = arith.constant 0 : i32
    return %c0_i32, %c0_i32_0 : i32, i32
  }
  func.func @transform_4(%arg0: i32) -> (i32, i32) {
    %c0_i32 = arith.constant 0 : i32
    %c0_i32_0 = arith.constant 0 : i32
    return %arg0, %c0_i32 : i32, i32
  }
}

module attributes {stable_mosaic.version = 11 : i64} {
  func.func @_conv_bn_lrelu_kernel(%arg0: i32, %arg1: memref<128x256xbf16, #tpu.memory_space<vmem>>, %arg2: memref<256x128xbf16, #tpu.memory_space<vmem>>, %arg3: memref<1x32xf32, #tpu.memory_space<vmem>>, %arg4: memref<1x32xf32, #tpu.memory_space<vmem>>, %arg5: memref<128x32xbf16, #tpu.memory_space<vmem>>) attributes {dimension_semantics = [#tpu.dimension_semantics<parallel>], iteration_bounds = array<i64: 1>, scalar_prefetch = 0 : i64, scratch_operands = 0 : i64, tpu.core_type = #tpu.core_type<tc>, window_params = [{transform_indices = @transform_0, window_bounds = array<i64: 128, 256>}, {pipeline_mode = #tpu.pipeline_mode<synchronous>, transform_indices = @transform_1, window_bounds = array<i64: 256, 128>}, {pipeline_mode = #tpu.pipeline_mode<synchronous>, transform_indices = @transform_2, window_bounds = array<i64: 1, 32>}, {pipeline_mode = #tpu.pipeline_mode<synchronous>, transform_indices = @transform_3, window_bounds = array<i64: 1, 32>}, {transform_indices = @transform_4, window_bounds = array<i64: 128, 32>}]} {
    %c0 = arith.constant 0 : index
    %c0_0 = arith.constant 0 : index
    %0 = vector.load %arg1[%c0, %c0_0] : memref<128x256xbf16, #tpu.memory_space<vmem>>, vector<128x256xbf16>
    %c0_1 = arith.constant 0 : index
    %c0_2 = arith.constant 0 : index
    %1 = vector.load %arg2[%c0_1, %c0_2] : memref<256x128xbf16, #tpu.memory_space<vmem>>, vector<256x128xbf16>
    %cst = arith.constant dense<0.000000e+00> : vector<128x128xf32>
    %2 = tpu.matmul %0, %1, %cst {dimension_numbers = #tpu.dot_dimension_numbers<[1], [0], [0], [1], [0, 0, 1, 1], [], []>} : vector<128x256xbf16>, vector<256x128xbf16>, vector<128x128xf32> -> vector<128x128xf32>
    %3 = vector.extract_strided_slice %2 {offsets = [0, 0], sizes = [128, 32], strides = [1, 1]} : vector<128x128xf32> to vector<128x32xf32>
    %cst_3 = arith.constant dense<0.000000e+00> : vector<32xf32>
    %4 = vector.multi_reduction <add>, %3, %cst_3 [0] : vector<128x32xf32> to vector<32xf32>
    %5 = vector.shape_cast %4 : vector<32xf32> to vector<1x32xf32>
    %cst_4 = arith.constant 7.812500e-03 : f32
    %6 = vector.broadcast %cst_4 : f32 to vector<1x32xf32>
    %7 = arith.mulf %5, %6 : vector<1x32xf32>
    %8 = arith.mulf %3, %3 : vector<128x32xf32>
    %cst_5 = arith.constant dense<0.000000e+00> : vector<32xf32>
    %9 = vector.multi_reduction <add>, %8, %cst_5 [0] : vector<128x32xf32> to vector<32xf32>
    %10 = vector.shape_cast %9 : vector<32xf32> to vector<1x32xf32>
    %cst_6 = arith.constant 7.812500e-03 : f32
    %11 = vector.broadcast %cst_6 : f32 to vector<1x32xf32>
    %12 = arith.mulf %10, %11 : vector<1x32xf32>
    %13 = arith.mulf %7, %7 : vector<1x32xf32>
    %14 = arith.subf %12, %13 : vector<1x32xf32>
    %cst_7 = arith.constant 0.000000e+00 : f32
    %15 = vector.broadcast %cst_7 : f32 to vector<1x32xf32>
    %16 = arith.maximumf %14, %15 : vector<1x32xf32>
    %c0_8 = arith.constant 0 : index
    %c0_9 = arith.constant 0 : index
    %17 = vector.load %arg3[%c0_8, %c0_9] : memref<1x32xf32, #tpu.memory_space<vmem>>, vector<1x32xf32>
    %cst_10 = arith.constant 9.99999974E-6 : f32
    %18 = vector.broadcast %cst_10 : f32 to vector<1x32xf32>
    %19 = arith.addf %16, %18 : vector<1x32xf32>
    %20 = math.rsqrt %19 : vector<1x32xf32>
    %21 = arith.mulf %17, %20 : vector<1x32xf32>
    %c0_11 = arith.constant 0 : index
    %c0_12 = arith.constant 0 : index
    %22 = vector.load %arg4[%c0_11, %c0_12] : memref<1x32xf32, #tpu.memory_space<vmem>>, vector<1x32xf32>
    %23 = arith.mulf %7, %21 : vector<1x32xf32>
    %24 = arith.subf %22, %23 : vector<1x32xf32>
    %25 = vector.broadcast %21 : vector<1x32xf32> to vector<128x32xf32>
    %26 = arith.mulf %3, %25 : vector<128x32xf32>
    %27 = vector.broadcast %24 : vector<1x32xf32> to vector<128x32xf32>
    %28 = arith.addf %26, %27 : vector<128x32xf32>
    %cst_13 = arith.constant 2.000000e-01 : f32
    %29 = vector.broadcast %cst_13 : f32 to vector<128x32xf32>
    %30 = arith.mulf %29, %28 : vector<128x32xf32>
    %31 = arith.maximumf %28, %30 : vector<128x32xf32>
    %32 = arith.truncf %31 : vector<128x32xf32> to vector<128x32xbf16>
    %c0_14 = arith.constant 0 : index
    %c0_15 = arith.constant 0 : index
    %33 = vector.load %arg5[%c0_14, %c0_15] : memref<128x32xbf16, #tpu.memory_space<vmem>>, vector<128x32xbf16>
    tpu.vector_store %arg5[%c0_14, %c0_15], %32 {strides = array<i32>} : memref<128x32xbf16, #tpu.memory_space<vmem>>, vector<128x32xbf16>,
    return
  }
  func.func @transform_0(%arg0: i32) -> (i32, i32) {
    %c0_i32 = arith.constant 0 : i32
    %c0_i32_0 = arith.constant 0 : i32
    return %arg0, %c0_i32 : i32, i32
  }
  func.func @transform_1(%arg0: i32) -> (i32, i32) {
    %c0_i32 = arith.constant 0 : i32
    %c0_i32_0 = arith.constant 0 : i32
    %c0_i32_1 = arith.constant 0 : i32
    return %c0_i32, %c0_i32_0 : i32, i32
  }
  func.func @transform_2(%arg0: i32) -> (i32, i32) {
    %c0_i32 = arith.constant 0 : i32
    %c0_i32_0 = arith.constant 0 : i32
    %c0_i32_1 = arith.constant 0 : i32
    return %c0_i32, %c0_i32_0 : i32, i32
  }
  func.func @transform_3(%arg0: i32) -> (i32, i32) {
    %c0_i32 = arith.constant 0 : i32
    %c0_i32_0 = arith.constant 0 : i32
    %c0_i32_1 = arith.constant 0 : i32
    return %c0_i32, %c0_i32_0 : i32, i32
  }
  func.func @transform_4(%arg0: i32) -> (i32, i32) {
    %c0_i32 = arith.constant 0 : i32
    %c0_i32_0 = arith.constant 0 : i32
    return %arg0, %c0_i32 : i32, i32
  }
}

module attributes {stable_mosaic.version = 11 : i64} {
  func.func @_conv_bn_lrelu_kernel(%arg0: i32, %arg1: memref<32x512xbf16, #tpu.memory_space<vmem>>, %arg2: memref<512x128xbf16, #tpu.memory_space<vmem>>, %arg3: memref<1x64xf32, #tpu.memory_space<vmem>>, %arg4: memref<1x64xf32, #tpu.memory_space<vmem>>, %arg5: memref<32x64xbf16, #tpu.memory_space<vmem>>) attributes {dimension_semantics = [#tpu.dimension_semantics<parallel>], iteration_bounds = array<i64: 1>, scalar_prefetch = 0 : i64, scratch_operands = 0 : i64, tpu.core_type = #tpu.core_type<tc>, window_params = [{transform_indices = @transform_0, window_bounds = array<i64: 32, 512>}, {pipeline_mode = #tpu.pipeline_mode<synchronous>, transform_indices = @transform_1, window_bounds = array<i64: 512, 128>}, {pipeline_mode = #tpu.pipeline_mode<synchronous>, transform_indices = @transform_2, window_bounds = array<i64: 1, 64>}, {pipeline_mode = #tpu.pipeline_mode<synchronous>, transform_indices = @transform_3, window_bounds = array<i64: 1, 64>}, {transform_indices = @transform_4, window_bounds = array<i64: 32, 64>}]} {
    %c0 = arith.constant 0 : index
    %c0_0 = arith.constant 0 : index
    %0 = vector.load %arg1[%c0, %c0_0] : memref<32x512xbf16, #tpu.memory_space<vmem>>, vector<32x512xbf16>
    %c0_1 = arith.constant 0 : index
    %c0_2 = arith.constant 0 : index
    %1 = vector.load %arg2[%c0_1, %c0_2] : memref<512x128xbf16, #tpu.memory_space<vmem>>, vector<512x128xbf16>
    %cst = arith.constant dense<0.000000e+00> : vector<32x128xf32>
    %2 = tpu.matmul %0, %1, %cst {dimension_numbers = #tpu.dot_dimension_numbers<[1], [0], [0], [1], [0, 0, 1, 1], [], []>} : vector<32x512xbf16>, vector<512x128xbf16>, vector<32x128xf32> -> vector<32x128xf32>
    %3 = vector.extract_strided_slice %2 {offsets = [0, 0], sizes = [32, 64], strides = [1, 1]} : vector<32x128xf32> to vector<32x64xf32>
    %cst_3 = arith.constant dense<0.000000e+00> : vector<64xf32>
    %4 = vector.multi_reduction <add>, %3, %cst_3 [0] : vector<32x64xf32> to vector<64xf32>
    %5 = vector.shape_cast %4 : vector<64xf32> to vector<1x64xf32>
    %cst_4 = arith.constant 3.125000e-02 : f32
    %6 = vector.broadcast %cst_4 : f32 to vector<1x64xf32>
    %7 = arith.mulf %5, %6 : vector<1x64xf32>
    %8 = arith.mulf %3, %3 : vector<32x64xf32>
    %cst_5 = arith.constant dense<0.000000e+00> : vector<64xf32>
    %9 = vector.multi_reduction <add>, %8, %cst_5 [0] : vector<32x64xf32> to vector<64xf32>
    %10 = vector.shape_cast %9 : vector<64xf32> to vector<1x64xf32>
    %cst_6 = arith.constant 3.125000e-02 : f32
    %11 = vector.broadcast %cst_6 : f32 to vector<1x64xf32>
    %12 = arith.mulf %10, %11 : vector<1x64xf32>
    %13 = arith.mulf %7, %7 : vector<1x64xf32>
    %14 = arith.subf %12, %13 : vector<1x64xf32>
    %cst_7 = arith.constant 0.000000e+00 : f32
    %15 = vector.broadcast %cst_7 : f32 to vector<1x64xf32>
    %16 = arith.maximumf %14, %15 : vector<1x64xf32>
    %c0_8 = arith.constant 0 : index
    %c0_9 = arith.constant 0 : index
    %17 = vector.load %arg3[%c0_8, %c0_9] : memref<1x64xf32, #tpu.memory_space<vmem>>, vector<1x64xf32>
    %cst_10 = arith.constant 9.99999974E-6 : f32
    %18 = vector.broadcast %cst_10 : f32 to vector<1x64xf32>
    %19 = arith.addf %16, %18 : vector<1x64xf32>
    %20 = math.rsqrt %19 : vector<1x64xf32>
    %21 = arith.mulf %17, %20 : vector<1x64xf32>
    %c0_11 = arith.constant 0 : index
    %c0_12 = arith.constant 0 : index
    %22 = vector.load %arg4[%c0_11, %c0_12] : memref<1x64xf32, #tpu.memory_space<vmem>>, vector<1x64xf32>
    %23 = arith.mulf %7, %21 : vector<1x64xf32>
    %24 = arith.subf %22, %23 : vector<1x64xf32>
    %25 = vector.broadcast %21 : vector<1x64xf32> to vector<32x64xf32>
    %26 = arith.mulf %3, %25 : vector<32x64xf32>
    %27 = vector.broadcast %24 : vector<1x64xf32> to vector<32x64xf32>
    %28 = arith.addf %26, %27 : vector<32x64xf32>
    %cst_13 = arith.constant 2.000000e-01 : f32
    %29 = vector.broadcast %cst_13 : f32 to vector<32x64xf32>
    %30 = arith.mulf %29, %28 : vector<32x64xf32>
    %31 = arith.maximumf %28, %30 : vector<32x64xf32>
    %32 = arith.truncf %31 : vector<32x64xf32> to vector<32x64xbf16>
    %c0_14 = arith.constant 0 : index
    %c0_15 = arith.constant 0 : index
    %33 = vector.load %arg5[%c0_14, %c0_15] : memref<32x64xbf16, #tpu.memory_space<vmem>>, vector<32x64xbf16>
    tpu.vector_store %arg5[%c0_14, %c0_15], %32 {strides = array<i32>} : memref<32x64xbf16, #tpu.memory_space<vmem>>, vector<32x64xbf16>,
    return
  }
  func.func @transform_0(%arg0: i32) -> (i32, i32) {
    %c0_i32 = arith.constant 0 : i32
    %c0_i32_0 = arith.constant 0 : i32
    return %arg0, %c0_i32 : i32, i32
  }
  func.func @transform_1(%arg0: i32) -> (i32, i32) {
    %c0_i32 = arith.constant 0 : i32
    %c0_i32_0 = arith.constant 0 : i32
    %c0_i32_1 = arith.constant 0 : i32
    return %c0_i32, %c0_i32_0 : i32, i32
  }
  func.func @transform_2(%arg0: i32) -> (i32, i32) {
    %c0_i32 = arith.constant 0 : i32
    %c0_i32_0 = arith.constant 0 : i32
    %c0_i32_1 = arith.constant 0 : i32
    return %c0_i32, %c0_i32_0 : i32, i32
  }
  func.func @transform_3(%arg0: i32) -> (i32, i32) {
    %c0_i32 = arith.constant 0 : i32
    %c0_i32_0 = arith.constant 0 : i32
    %c0_i32_1 = arith.constant 0 : i32
    return %c0_i32, %c0_i32_0 : i32, i32
  }
  func.func @transform_4(%arg0: i32) -> (i32, i32) {
    %c0_i32 = arith.constant 0 : i32
    %c0_i32_0 = arith.constant 0 : i32
    return %arg0, %c0_i32 : i32, i32
  }
}

module attributes {stable_mosaic.version = 11 : i64} {
  func.func @_tail_kernel(%arg0: i32, %arg1: memref<2x1024xbf16, #tpu.memory_space<vmem>>, %arg2: memref<1024x128xbf16, #tpu.memory_space<vmem>>, %arg3: memref<128x128xbf16, #tpu.memory_space<vmem>>, %arg4: memref<1x128xf32, #tpu.memory_space<vmem>>, %arg5: memref<2x128xf32, #tpu.memory_space<vmem>>) attributes {dimension_semantics = [#tpu.dimension_semantics<arbitrary>], iteration_bounds = array<i64: 1>, scalar_prefetch = 0 : i64, scratch_operands = 0 : i64, tpu.core_type = #tpu.core_type<tc>, window_params = [{pipeline_mode = #tpu.pipeline_mode<synchronous>, transform_indices = @transform_0, window_bounds = array<i64: 2, 1024>}, {pipeline_mode = #tpu.pipeline_mode<synchronous>, transform_indices = @transform_1, window_bounds = array<i64: 1024, 128>}, {pipeline_mode = #tpu.pipeline_mode<synchronous>, transform_indices = @transform_2, window_bounds = array<i64: 128, 128>}, {pipeline_mode = #tpu.pipeline_mode<synchronous>, transform_indices = @transform_3, window_bounds = array<i64: 1, 128>}, {pipeline_mode = #tpu.pipeline_mode<synchronous>, transform_indices = @transform_4, window_bounds = array<i64: 2, 128>}]} {
    %c0 = arith.constant 0 : index
    %c0_0 = arith.constant 0 : index
    %0 = vector.load %arg1[%c0, %c0_0] : memref<2x1024xbf16, #tpu.memory_space<vmem>>, vector<2x1024xbf16>
    %c0_1 = arith.constant 0 : index
    %c0_2 = arith.constant 0 : index
    %1 = vector.load %arg2[%c0_1, %c0_2] : memref<1024x128xbf16, #tpu.memory_space<vmem>>, vector<1024x128xbf16>
    %cst = arith.constant dense<0.000000e+00> : vector<2x128xf32>
    %2 = tpu.matmul %0, %1, %cst {dimension_numbers = #tpu.dot_dimension_numbers<[1], [0], [0], [1], [0, 0, 1, 1], [], []>} : vector<2x1024xbf16>, vector<1024x128xbf16>, vector<2x128xf32> -> vector<2x128xf32>
    %3 = arith.truncf %2 : vector<2x128xf32> to vector<2x128xbf16>
    %c0_3 = arith.constant 0 : index
    %c0_4 = arith.constant 0 : index
    %4 = vector.load %arg3[%c0_3, %c0_4] : memref<128x128xbf16, #tpu.memory_space<vmem>>, vector<128x128xbf16>
    %cst_5 = arith.constant dense<0.000000e+00> : vector<2x128xf32>
    %5 = tpu.matmul %3, %4, %cst_5 {dimension_numbers = #tpu.dot_dimension_numbers<[1], [0], [0], [1], [0, 0, 1, 1], [], []>} : vector<2x128xbf16>, vector<128x128xbf16>, vector<2x128xf32> -> vector<2x128xf32>
    %c0_6 = arith.constant 0 : index
    %c0_7 = arith.constant 0 : index
    %6 = vector.load %arg4[%c0_6, %c0_7] : memref<1x128xf32, #tpu.memory_space<vmem>>, vector<1x128xf32>
    %7 = vector.broadcast %6 : vector<1x128xf32> to vector<2x128xf32>
    %8 = arith.addf %5, %7 : vector<2x128xf32>
    %9 = tpu.iota {dimensions = array<i32: 1>} : vector<2x128xi32>
    %c10_i32 = arith.constant 10 : i32
    %10 = vector.broadcast %c10_i32 : i32 to vector<2x128xi32>
    %11 = arith.cmpi slt, %9, %10 : vector<2x128xi32>
    %cst_8 = arith.constant -1.000000e+30 : f32
    %12 = vector.broadcast %cst_8 : f32 to vector<2x128xf32>
    %13 = arith.select %11, %8, %12 : vector<2x128xi1>, vector<2x128xf32>
    %cst_9 = arith.constant dense<0xFF800000> : vector<2xf32>
    %14 = vector.multi_reduction <maximumf>, %13, %cst_9 [1] : vector<2x128xf32> to vector<2xf32>
    %15 = vector.shape_cast %14 : vector<2xf32> to vector<2x1xf32>
    %16 = vector.broadcast %15 : vector<2x1xf32> to vector<2x128xf32>
    %17 = arith.subf %13, %16 : vector<2x128xf32>
    %18 = math.exp %17 : vector<2x128xf32>
    %cst_10 = arith.constant dense<0.000000e+00> : vector<2xf32>
    %19 = vector.multi_reduction <add>, %18, %cst_10 [1] : vector<2x128xf32> to vector<2xf32>
    %20 = vector.shape_cast %19 : vector<2xf32> to vector<2x1xf32>
    %21 = math.log %20 : vector<2x1xf32>
    %22 = vector.broadcast %21 : vector<2x1xf32> to vector<2x128xf32>
    %23 = arith.subf %17, %22 : vector<2x128xf32>
    %c0_11 = arith.constant 0 : index
    %c0_12 = arith.constant 0 : index
    %24 = vector.load %arg5[%c0_11, %c0_12] : memref<2x128xf32, #tpu.memory_space<vmem>>, vector<2x128xf32>
    tpu.vector_store %arg5[%c0_11, %c0_12], %23 {strides = array<i32>} : memref<2x128xf32, #tpu.memory_space<vmem>>, vector<2x128xf32>,
    return
  }
  func.func @transform_0(%arg0: i32) -> (i32, i32) {
    %c0_i32 = arith.constant 0 : i32
    %c0_i32_0 = arith.constant 0 : i32
    %c0_i32_1 = arith.constant 0 : i32
    return %c0_i32, %c0_i32_0 : i32, i32
  }
  func.func @transform_1(%arg0: i32) -> (i32, i32) {
    %c0_i32 = arith.constant 0 : i32
    %c0_i32_0 = arith.constant 0 : i32
    %c0_i32_1 = arith.constant 0 : i32
    return %c0_i32, %c0_i32_0 : i32, i32
  }
  func.func @transform_2(%arg0: i32) -> (i32, i32) {
    %c0_i32 = arith.constant 0 : i32
    %c0_i32_0 = arith.constant 0 : i32
    %c0_i32_1 = arith.constant 0 : i32
    return %c0_i32, %c0_i32_0 : i32, i32
  }
  func.func @transform_3(%arg0: i32) -> (i32, i32) {
    %c0_i32 = arith.constant 0 : i32
    %c0_i32_0 = arith.constant 0 : i32
    %c0_i32_1 = arith.constant 0 : i32
    return %c0_i32, %c0_i32_0 : i32, i32
  }
  func.func @transform_4(%arg0: i32) -> (i32, i32) {
    %c0_i32 = arith.constant 0 : i32
    %c0_i32_0 = arith.constant 0 : i32
    %c0_i32_1 = arith.constant 0 : i32
    return %c0_i32, %c0_i32_0 : i32, i32
  }
}

</mosaic_0001>

<llo_original>
// kernel: netd_forward.5
$region0: #{netd_forward.5}
  #allocation0 [shape = 'u32[]', space=smem, size = 0x4, offset = 0x4, fixed_abs, tag = 'smem constant byte address 0x4 - core index']
  #allocation1 [shape = 'u32[144,128]{1,0:T(1,128)}', space=vmem, size = 0x12000, scoped, tag = 'internal scratch']
  %s0 = inlined_call_operand.vmem [shape: bf16[2048,128], index: 0, kind: input, shape index: {}]
  %s1 = inlined_call_operand.vmem [shape: bf16[128,128], index: 1, kind: input, shape index: {}]
  %s2 = inlined_call_operand.vmem [shape: bf16[2048,8], index: 2, kind: output, shape index: {}]
  %s3 = sld [smem:[#allocation0]]
  $region41: #{netd_forward.5} parent=0
    _
  %s5 = ssub.s32 1, %s3
  %s6 = scalar_select 0, %s5, %s3
  loop: start=0, step=1, limit=6
  $region2: #{netd_forward.5} parent=0 // loop_pre_header
    _
  $region3: #{netd_forward.5} parent=0 // loop_header
    %s8 = sphi 0, %s12
    %p9 = scmp.ge.s32.totalorder %s8, 6
    %s18 = sphi 0, %s20
    %s21 = sphi 0, %s18
    %s22 = sphi 0, %s21
    %s38 = sphi 0, %s22
    %s42 = sphi 0, %s42
    %s44 = sphi 0, %s42
    %s45 = sphi 0, %s44
    %s59 = sphi 0, %s45
    %s65 = sphi 0, %s67
    %s68 = sphi 0, %s65
    %s69 = sphi 0, %s68
    %s85 = sphi 0, %s69
  $region4: #{netd_forward.5} parent=0 // loop_header_branch
    %11 = sbr.rel (%p9) target = $region8
  $region5: #{netd_forward.5} parent=0 // loop_body
    %s13 = ssub.s32 %s8, 1
    %s14 = ssub.s32 %s8, 2
    %s15 = sadd.s32 %s8, 1
    %s16 = ssub.s32 %s8, %s15
    %p17 = scmp.eq.s32.totalorder %s16, 0
    %s19 = sadd.s32 %s18, 1
    %s20 = scalar_select %p17, %s18, %s19
    %p23 = pneg %p17
    %p24 = scmp.eq.s32.totalorder %s8, 3
    %p25 = por %p23, %p24
    %p26 = scmp.ne.s32.totalorder %s18, %s21
    %p27 = scmp.eq.s32.totalorder %s8, 0
    %p28 = por %p26, %p27
    %p29 = scmp.ne.s32.totalorder %s18, %s21
    %p30 = scmp.eq.s32.totalorder %s13, 3
    %p31 = por %p29, %p30
    %p32 = scmp.ne.s32.totalorder %s21, %s22
    %p33 = scmp.eq.s32.totalorder %s13, 0
    %p34 = por %p32, %p33
    %p35 = scmp.ne.s32.totalorder %s21, %s22
    %p36 = scmp.eq.s32.totalorder %s14, 3
    %p37 = por %p35, %p36
    %p39 = scmp.ne.s32.totalorder %s22, %s38
    %p40 = scmp.eq.s32.totalorder %s14, 0
    %p41 = por %p39, %p40
    %s43 = sadd.s32 %s42, 1
    %p46 = scmp.eq.s32.totalorder %s8, 3
    %p47 = scmp.ne.s32.totalorder %s42, %s44
    %p48 = scmp.eq.s32.totalorder %s8, 0
    %p49 = por %p47, %p48
    %p50 = scmp.ne.s32.totalorder %s42, %s44
    %p51 = scmp.eq.s32.totalorder %s13, 3
    %p52 = por %p50, %p51
    %p53 = scmp.ne.s32.totalorder %s44, %s45
    %p54 = scmp.eq.s32.totalorder %s13, 0
    %p55 = por %p53, %p54
    %p56 = scmp.ne.s32.totalorder %s44, %s45
    %p57 = scmp.eq.s32.totalorder %s14, 3
    %p58 = por %p56, %p57
    %p60 = scmp.ne.s32.totalorder %s45, %s59
    %p61 = scmp.eq.s32.totalorder %s14, 0
    %p62 = por %p60, %p61
    %s63 = ssub.s32 %s8, %s15
    %p64 = scmp.eq.s32.totalorder %s63, 0
    %s66 = sadd.s32 %s65, 1
    %s67 = scalar_select %p64, %s65, %s66
    %p70 = pneg %p64
    %p71 = scmp.eq.s32.totalorder %s8, 3
    %p72 = por %p70, %p71
    %p73 = scmp.ne.s32.totalorder %s65, %s68
    %p74 = scmp.eq.s32.totalorder %s8, 0
    %p75 = por %p73, %p74
    %p76 = scmp.ne.s32.totalorder %s65, %s68
    %p77 = scmp.eq.s32.totalorder %s13, 3
    %p78 = por %p76, %p77
    %p79 = scmp.ne.s32.totalorder %s68, %s69
    %p80 = scmp.eq.s32.totalorder %s13, 0
    %p81 = por %p79, %p80
    %p82 = scmp.ne.s32.totalorder %s68, %s69
    %p83 = scmp.eq.s32.totalorder %s14, 3
    %p84 = por %p82, %p83
    %p86 = scmp.ne.s32.totalorder %s69, %s85
    %p87 = scmp.eq.s32.totalorder %s14, 0
    %p88 = por %p86, %p87
    %p89 = scmp.le.s32.totalorder 1, %s8
    %p90 = scmp.lt.s32.totalorder %s8, 5
    %p91 = pnand %p89, %p90
    %p92 = pneg %p91
    // Predicated region
    $region9: #{netd_forward.5} parent=5 // pred_check
      _
    $region10: #{netd_forward.5} parent=5 // pred_check_branch
      %94 = sbr.rel (%p91) target = $region12
    $region11: #{netd_forward.5} parent=5 // pred_region
      %s95 = ssub.s32 %s8, 1
      // Predicated region
      $region13: #{netd_forward.5} parent=11 // pred_check
        %p96 = pneg %p55
      $region14: #{netd_forward.5} parent=11 // pred_check_branch
        %98 = sbr.rel (%p96) target = $region16
      $region15: #{netd_forward.5} parent=11 // pred_region
        _
      $region16: #{netd_forward.5} parent=11 // pred_fallthru
        _
    $region12: #{netd_forward.5} parent=5 // pred_fallthru
      _
    %p99 = scmp.lt.s32.totalorder %s8, 4
    // Predicated region
    $region17: #{netd_forward.5} parent=5 // pred_check
      %p100 = pneg %p99
    $region18: #{netd_forward.5} parent=5 // pred_check_branch
      %102 = sbr.rel (%p100) target = $region20
    $region19: #{netd_forward.5} parent=5 // pred_region
      // Predicated region
      $region21: #{netd_forward.5} parent=19 // pred_check
        %p103 = pneg %p28
      $region22: #{netd_forward.5} parent=19 // pred_check_branch
        %105 = sbr.rel (%p103) target = $region24
      $region23: #{netd_forward.5} parent=19 // pred_region
        %s106 = smul.u32 64, %s8
        %p107 = scmp.lt.s32.totalorder %s106, 255
        %s108 = scalar_select %p107, %s106, 255
        %s109 = smul.addr %s108, 4
        %s110 = scalar_lea.vmem %s0, %s109
        %s111 = smul.u32 64, %s8
      $region24: #{netd_forward.5} parent=19 // pred_fallthru
        _
    $region20: #{netd_forward.5} parent=5 // pred_fallthru
      _
    %p112 = scmp.le.s32.totalorder 1, %s8
    %p113 = scmp.lt.s32.totalorder %s8, 5
    %p114 = pnand %p112, %p113
    %p115 = pneg %p114
    // Predicated region
    $region25: #{netd_forward.5} parent=5 // pred_check
      _
    $region26: #{netd_forward.5} parent=5 // pred_check_branch
      %117 = sbr.rel (%p114) target = $region28
    $region27: #{netd_forward.5} parent=5 // pred_region
      %s118 = ssub.s32 %s8, 1
      %s119 = smul.u32 64, %s13
      %p120 = scmp.lt.s32.totalorder %s119, 255
      %s121 = scalar_select %p120, %s119, 255
      %s122 = smul.addr %s121, 4
      %s123 = scalar_lea.vmem %s0, %s122
      %p124 = pneg %p34
      %p125 = pneg %p31
      %p126 = pneg %p55
      %p127 = pneg %p52
      %p128 = pneg %p81
      %p129 = pneg %p78
      %s130 = smul.u32 64, %s13
      %p131 = scmp.lt.s32.totalorder %s130, 255
      %s132 = scalar_select %p131, %s130, 255
      %s133 = smul.addr %s132, 4
      %s134 = scalar_lea.vmem %s2, %s133
      %s135 = smul.u32 64, %s13
      %p136 = scmp.lt.s32.totalorder %s135, 255
      %s137 = scalar_select %p136, %s135, 255
      %s138 = smul.addr %s137, 4
      %s139 = scalar_lea.vmem %s0, %s138
      %s140 = smul.u32 64, %s13
      %s141 = smul.u32 64, %s13
      %p142 = scmp.lt.s32.totalorder %s141, 255
      %s143 = scalar_select %p142, %s141, 255
      %s144 = smul.addr %s143, 4
      %s145 = scalar_lea.vmem %s2, %s144
      %s146 = smul.u32 64, %s13
      %v148 = vld [vmem:[%s139] sm:$0xf]
      %v149 = vld [vmem:[%s139 + $0x4] sm:$0xf]
      %v150 = vld [vmem:[%s139 + $0x8] sm:$0xf]
      %v151 = vld [vmem:[%s139 + $0xc] sm:$0xf]
      %v152 = vld [vmem:[%s139 + $0x10] sm:$0xf]
      %v153 = vld [vmem:[%s139 + $0x14] sm:$0xf]
      %v154 = vld [vmem:[%s139 + $0x18] sm:$0xf]
      %v155 = vld [vmem:[%s139 + $0x1c] sm:$0xf]
      %v156 = vld [vmem:[%s139 + $0x20] sm:$0xf]
      %v157 = vld [vmem:[%s139 + $0x24] sm:$0xf]
      %v158 = vld [vmem:[%s139 + $0x28] sm:$0xf]
      %v159 = vld [vmem:[%s139 + $0x2c] sm:$0xf]
      %v160 = vld [vmem:[%s139 + $0x30] sm:$0xf]
      %v161 = vld [vmem:[%s139 + $0x34] sm:$0xf]
      %v162 = vld [vmem:[%s139 + $0x38] sm:$0xf]
      %v163 = vld [vmem:[%s139 + $0x3c] sm:$0xf]
      %v164 = vld [vmem:[%s139 + $0x40] sm:$0xf]
      %v165 = vld [vmem:[%s139 + $0x44] sm:$0xf]
      %v166 = vld [vmem:[%s139 + $0x48] sm:$0xf]
      %v167 = vld [vmem:[%s139 + $0x4c] sm:$0xf]
      %v168 = vld [vmem:[%s139 + $0x50] sm:$0xf]
      %v169 = vld [vmem:[%s139 + $0x54] sm:$0xf]
      %v170 = vld [vmem:[%s139 + $0x58] sm:$0xf]
      %v171 = vld [vmem:[%s139 + $0x5c] sm:$0xf]
      %v172 = vld [vmem:[%s139 + $0x60] sm:$0xf]
      %v173 = vld [vmem:[%s139 + $0x64] sm:$0xf]
      %v174 = vld [vmem:[%s139 + $0x68] sm:$0xf]
      %v175 = vld [vmem:[%s139 + $0x6c] sm:$0xf]
      %v176 = vld [vmem:[%s139 + $0x70] sm:$0xf]
      %v177 = vld [vmem:[%s139 + $0x74] sm:$0xf]
      %v178 = vld [vmem:[%s139 + $0x78] sm:$0xf]
      %v179 = vld [vmem:[%s139 + $0x7c] sm:$0xf]
      %v180 = vld [vmem:[%s139 + $0x80] sm:$0xf]
      %v181 = vld [vmem:[%s139 + $0x84] sm:$0xf]
      %v182 = vld [vmem:[%s139 + $0x88] sm:$0xf]
      %v183 = vld [vmem:[%s139 + $0x8c] sm:$0xf]
      %v184 = vld [vmem:[%s139 + $0x90] sm:$0xf]
      %v185 = vld [vmem:[%s139 + $0x94] sm:$0xf]
      %v186 = vld [vmem:[%s139 + $0x98] sm:$0xf]
      %v187 = vld [vmem:[%s139 + $0x9c] sm:$0xf]
      %v188 = vld [vmem:[%s139 + $0xa0] sm:$0xf]
      %v189 = vld [vmem:[%s139 + $0xa4] sm:$0xf]
      %v190 = vld [vmem:[%s139 + $0xa8] sm:$0xf]
      %v191 = vld [vmem:[%s139 + $0xac] sm:$0xf]
      %v192 = vld [vmem:[%s139 + $0xb0] sm:$0xf]
      %v193 = vld [vmem:[%s139 + $0xb4] sm:$0xf]
      %v194 = vld [vmem:[%s139 + $0xb8] sm:$0xf]
      %v195 = vld [vmem:[%s139 + $0xbc] sm:$0xf]
      %v196 = vld [vmem:[%s139 + $0xc0] sm:$0xf]
      %v197 = vld [vmem:[%s139 + $0xc4] sm:$0xf]
      %v198 = vld [vmem:[%s139 + $0xc8] sm:$0xf]
      %v199 = vld [vmem:[%s139 + $0xcc] sm:$0xf]
      %v200 = vld [vmem:[%s139 + $0xd0] sm:$0xf]
      %v201 = vld [vmem:[%s139 + $0xd4] sm:$0xf]
      %v202 = vld [vmem:[%s139 + $0xd8] sm:$0xf]
      %v203 = vld [vmem:[%s139 + $0xdc] sm:$0xf]
      %v204 = vld [vmem:[%s139 + $0xe0] sm:$0xf]
      %v205 = vld [vmem:[%s139 + $0xe4] sm:$0xf]
      %v206 = vld [vmem:[%s139 + $0xe8] sm:$0xf]
      %v207 = vld [vmem:[%s139 + $0xec] sm:$0xf]
      %v208 = vld [vmem:[%s139 + $0xf0] sm:$0xf]
      %v209 = vld [vmem:[%s139 + $0xf4] sm:$0xf]
      %v210 = vld [vmem:[%s139 + $0xf8] sm:$0xf]
      %v211 = vld [vmem:[%s139 + $0xfc] sm:$0xf]
      %v212 = vld [vmem:[%s1] sm:$0xf]
      %v213 = vld [vmem:[%s1 + $0x4] sm:$0xf]
      %v214 = vld [vmem:[%s1 + $0x8] sm:$0xf]
      %v215 = vld [vmem:[%s1 + $0xc] sm:$0xf]
      %v216 = vld [vmem:[%s1 + $0x10] sm:$0xf]
      %v217 = vld [vmem:[%s1 + $0x14] sm:$0xf]
      %v218 = vld [vmem:[%s1 + $0x18] sm:$0xf]
      %v219 = vld [vmem:[%s1 + $0x1c] sm:$0xf]
      %v220 = vld [vmem:[%s1 + $0x20] sm:$0xf]
      %v221 = vld [vmem:[%s1 + $0x24] sm:$0xf]
      %v222 = vld [vmem:[%s1 + $0x28] sm:$0xf]
      %v223 = vld [vmem:[%s1 + $0x2c] sm:$0xf]
      %v224 = vld [vmem:[%s1 + $0x30] sm:$0xf]
      %v225 = vld [vmem:[%s1 + $0x34] sm:$0xf]
      %v226 = vld [vmem:[%s1 + $0x38] sm:$0xf]
      %v227 = vld [vmem:[%s1 + $0x3c] sm:$0xf]
      %v292 = vunpack.c.l.b16 %v148
      %v293 = vunpack.c.l.b16 %v149
      %v294 = vunpack.c.l.b16 %v150
      %v295 = vunpack.c.l.b16 %v151
      %v296 = vunpack.c.l.b16 %v152
      %v297 = vunpack.c.l.b16 %v153
      %v298 = vunpack.c.l.b16 %v154
      %v299 = vunpack.c.l.b16 %v155
      %v300 = vunpack.c.l.b16 %v156
      %v301 = vunpack.c.l.b16 %v157
      %v302 = vunpack.c.l.b16 %v158
      %v303 = vunpack.c.l.b16 %v159
      %v304 = vunpack.c.l.b16 %v160
      %v305 = vunpack.c.l.b16 %v161
      %v306 = vunpack.c.l.b16 %v162
      %v307 = vunpack.c.l.b16 %v163
      %v308 = vunpack.c.l.b16 %v164
      %v309 = vunpack.c.l.b16 %v165
      %v310 = vunpack.c.l.b16 %v166
      %v311 = vunpack.c.l.b16 %v167
      %v312 = vunpack.c.l.b16 %v168
      %v313 = vunpack.c.l.b16 %v169
      %v314 = vunpack.c.l.b16 %v170
      %v315 = vunpack.c.l.b16 %v171
      %v316 = vunpack.c.l.b16 %v172
      %v317 = vunpack.c.l.b16 %v173
      %v318 = vunpack.c.l.b16 %v174
      %v319 = vunpack.c.l.b16 %v175
      %v320 = vunpack.c.l.b16 %v176
      %v321 = vunpack.c.l.b16 %v177
      %v322 = vunpack.c.l.b16 %v178
      %v323 = vunpack.c.l.b16 %v179
      %v324 = vunpack.c.l.b16 %v180
      %v325 = vunpack.c.l.b16 %v181
      %v326 = vunpack.c.l.b16 %v182
      %v327 = vunpack.c.l.b16 %v183
      %v328 = vunpack.c.l.b16 %v184
      %v329 = vunpack.c.l.b16 %v185
      %v330 = vunpack.c.l.b16 %v186
      %v331 = vunpack.c.l.b16 %v187
      %v332 = vunpack.c.l.b16 %v188
      %v333 = vunpack.c.l.b16 %v189
      %v334 = vunpack.c.l.b16 %v190
      %v335 = vunpack.c.l.b16 %v191
      %v336 = vunpack.c.l.b16 %v192
      %v337 = vunpack.c.l.b16 %v193
      %v338 = vunpack.c.l.b16 %v194
      %v339 = vunpack.c.l.b16 %v195
      %v340 = vunpack.c.l.b16 %v196
      %v341 = vunpack.c.l.b16 %v197
      %v342 = vunpack.c.l.b16 %v198
      %v343 = vunpack.c.l.b16 %v199
      %v344 = vunpack.c.l.b16 %v200
      %v345 = vunpack.c.l.b16 %v201
      %v346 = vunpack.c.l.b16 %v202
      %v347 = vunpack.c.l.b16 %v203
      %v348 = vunpack.c.l.b16 %v204
      %v349 = vunpack.c.l.b16 %v205
      %v350 = vunpack.c.l.b16 %v206
      %v351 = vunpack.c.l.b16 %v207
      %v352 = vunpack.c.l.b16 %v208
      %v353 = vunpack.c.l.b16 %v209
      %v354 = vunpack.c.l.b16 %v210
      %v355 = vunpack.c.l.b16 %v211
      %v356 = vpack.c.b16 %v293, %v292
      %v357 = vpack.c.b16 %v295, %v294
      %v358 = vpack.c.b16 %v297, %v296
      %v359 = vpack.c.b16 %v299, %v298
      %v360 = vpack.c.b16 %v301, %v300
      %v361 = vpack.c.b16 %v303, %v302
      %v362 = vpack.c.b16 %v305, %v304
      %v363 = vpack.c.b16 %v307, %v306
      %v364 = vpack.c.b16 %v309, %v308
      %v365 = vpack.c.b16 %v311, %v310
      %v366 = vpack.c.b16 %v313, %v312
      %v367 = vpack.c.b16 %v315, %v314
      %v368 = vpack.c.b16 %v317, %v316
      %v369 = vpack.c.b16 %v319, %v318
      %v370 = vpack.c.b16 %v321, %v320
      %v371 = vpack.c.b16 %v323, %v322
      %v372 = vpack.c.b16 %v325, %v324
      %v373 = vpack.c.b16 %v327, %v326
      %v374 = vpack.c.b16 %v329, %v328
      %v375 = vpack.c.b16 %v331, %v330
      %v376 = vpack.c.b16 %v333, %v332
      %v377 = vpack.c.b16 %v335, %v334
      %v378 = vpack.c.b16 %v337, %v336
      %v379 = vpack.c.b16 %v339, %v338
      %v380 = vpack.c.b16 %v341, %v340
      %v381 = vpack.c.b16 %v343, %v342
      %v382 = vpack.c.b16 %v345, %v344
      %v383 = vpack.c.b16 %v347, %v346
      %v384 = vpack.c.b16 %v349, %v348
      %v385 = vpack.c.b16 %v351, %v350
      %v386 = vpack.c.b16 %v353, %v352
      %v387 = vpack.c.b16 %v355, %v354
      %v436 = vunpack.c.l.b16 %v212
      %v437 = vunpack.c.l.b16 %v213
      %v438 = vunpack.c.l.b16 %v214
      %v439 = vunpack.c.l.b16 %v215
      %v440 = vunpack.c.l.b16 %v216
      %v441 = vunpack.c.l.b16 %v217
      %v442 = vunpack.c.l.b16 %v218
      %v443 = vunpack.c.l.b16 %v219
      %v444 = vunpack.c.l.b16 %v220
      %v445 = vunpack.c.l.b16 %v221
      %v446 = vunpack.c.l.b16 %v222
      %v447 = vunpack.c.l.b16 %v223
      %v448 = vunpack.c.l.b16 %v224
      %v449 = vunpack.c.l.b16 %v225
      %v450 = vunpack.c.l.b16 %v226
      %v451 = vunpack.c.l.b16 %v227
      %v452 = vpack.c.b16 %v437, %v436
      %v453 = vpack.c.b16 %v439, %v438
      %v454 = vpack.c.b16 %v441, %v440
      %v455 = vpack.c.b16 %v443, %v442
      %v456 = vpack.c.b16 %v445, %v444
      %v457 = vpack.c.b16 %v447, %v446
      %v458 = vpack.c.b16 %v449, %v448
      %v459 = vpack.c.b16 %v451, %v450
      %468 = vmatprep.subr.bf16.mxu0 0
      %469 = vmatpush1.bf16.msra.mxu0 %v452
      %470 = vmatprep.subr.bf16.mxu0 0
      %471 = vmatpush1.bf16.msra.mxu0 %v453
      %472 = vmatprep.subr.bf16.mxu0 0
      %473 = vmatpush1.bf16.msra.mxu0 %v454
      %474 = vmatprep.subr.bf16.mxu0 0
      %475 = vmatpush1.bf16.msra.mxu0 %v455
      %476 = vmatprep.subr.bf16.mxu0 0
      %477 = vmatpush1.bf16.msra.mxu0 %v456
      %478 = vmatprep.subr.bf16.mxu0 0
      %479 = vmatpush1.bf16.msra.mxu0 %v457
      %480 = vmatprep.subr.bf16.mxu0 0
      %481 = vmatpush1.bf16.msra.mxu0 %v458
      %482 = vmatprep.subr.bf16.mxu0 0
      %483 = vmatpush1.bf16.msra.mxu0 %v459
      %484 = vmatprep.subr.bf16.mxu0 0
      %485 = vmatpush1.bf16.msra.mxu0 0
      %486 = vmatprep.subr.bf16.mxu0 0
      %487 = vmatpush1.bf16.msra.mxu0 0
      %488 = vmatprep.subr.bf16.mxu0 0
      %489 = vmatpush1.bf16.msra.mxu0 0
      %490 = vmatprep.subr.bf16.mxu0 0
      %491 = vmatpush1.bf16.msra.mxu0 0
      %492 = vmatprep.subr.bf16.mxu0 0
      %493 = vmatpush1.bf16.msra.mxu0 0
      %494 = vmatprep.subr.bf16.mxu0 0
      %495 = vmatpush1.bf16.msra.mxu0 0
      %496 = vmatprep.subr.bf16.mxu0 0
      %497 = vmatpush1.bf16.msra.mxu0 0
      %498 = vmatprep.subr.bf16.mxu0 0
      %499 = vmatpush1.bf16.msra.mxu0 0
      %500 = vmatprep.mubr.bf16.mxu0 0
      %501 = vmatmul.mubr.bf16.gmra.mrb[0].mxu0 %v356
      %v502 = vpop.f32.mrb[0].mxu0
      %v503 = vadd.f32 0.0, %v502
      %v504 = vpop.f32.mrb[0].mxu0
      %v505 = vpop.f32.mrb[0].mxu0
      %v506 = vadd.f32 0.0, %v505
      %v507 = vpop.f32.mrb[0].mxu0
      %508 = vmatprep.mubr.bf16.mxu0 0
      %509 = vmatmul.mubr.bf16.gmra.mrb[0].mxu0 %v357
      %v510 = vpop.f32.mrb[0].mxu0
      %v511 = vadd.f32 0.0, %v510
      %v512 = vpop.f32.mrb[0].mxu0
      %v513 = vpop.f32.mrb[0].mxu0
      %v514 = vadd.f32 0.0, %v513
      %v515 = vpop.f32.mrb[0].mxu0
      %516 = vmatprep.mubr.bf16.mxu0 0
      %517 = vmatmul.mubr.bf16.gmra.mrb[0].mxu0 %v358
      %v518 = vpop.f32.mrb[0].mxu0
      %v519 = vadd.f32 0.0, %v518
      %v520 = vpop.f32.mrb[0].mxu0
      %v521 = vpop.f32.mrb[0].mxu0
      %v522 = vadd.f32 0.0, %v521
      %v523 = vpop.f32.mrb[0].mxu0
      %524 = vmatprep.mubr.bf16.mxu0 0
      %525 = vmatmul.mubr.bf16.gmra.mrb[0].mxu0 %v359
      %v526 = vpop.f32.mrb[0].mxu0
      %v527 = vadd.f32 0.0, %v526
      %v528 = vpop.f32.mrb[0].mxu0
      %v529 = vpop.f32.mrb[0].mxu0
      %v530 = vadd.f32 0.0, %v529
      %v531 = vpop.f32.mrb[0].mxu0
      %532 = vmatprep.mubr.bf16.mxu0 0
      %533 = vmatmul.mubr.bf16.gmra.mrb[0].mxu0 %v360
      %v534 = vpop.f32.mrb[0].mxu0
      %v535 = vadd.f32 0.0, %v534
      %v536 = vpop.f32.mrb[0].mxu0
      %v537 = vpop.f32.mrb[0].mxu0
      %v538 = vadd.f32 0.0, %v537
      %v539 = vpop.f32.mrb[0].mxu0
      %540 = vmatprep.mubr.bf16.mxu0 0
      %541 = vmatmul.mubr.bf16.gmra.mrb[0].mxu0 %v361
      %v542 = vpop.f32.mrb[0].mxu0
      %v543 = vadd.f32 0.0, %v542
      %v544 = vpop.f32.mrb[0].mxu0
      %v545 = vpop.f32.mrb[0].mxu0
      %v546 = vadd.f32 0.0, %v545
      %v547 = vpop.f32.mrb[0].mxu0
      %548 = vmatprep.mubr.bf16.mxu0 0
      %549 = vmatmul.mubr.bf16.gmra.mrb[0].mxu0 %v362
      %v550 = vpop.f32.mrb[0].mxu0
      %v551 = vadd.f32 0.0, %v550
      %v552 = vpop.f32.mrb[0].mxu0
      %v553 = vpop.f32.mrb[0].mxu0
      %v554 = vadd.f32 0.0, %v553
      %v555 = vpop.f32.mrb[0].mxu0
      %556 = vmatprep.mubr.bf16.mxu0 0
      %557 = vmatmul.mubr.bf16.gmra.mrb[0].mxu0 %v363
      %v558 = vpop.f32.mrb[0].mxu0
      %v559 = vadd.f32 0.0, %v558
      %v560 = vpop.f32.mrb[0].mxu0
      %v561 = vpop.f32.mrb[0].mxu0
      %v562 = vadd.f32 0.0, %v561
      %v563 = vpop.f32.mrb[0].mxu0
      %564 = vmatprep.mubr.bf16.mxu0 0
      %565 = vmatmul.mubr.bf16.gmra.mrb[0].mxu0 %v364
      %v566 = vpop.f32.mrb[0].mxu0
      %v567 = vadd.f32 0.0, %v566
      %v568 = vpop.f32.mrb[0].mxu0
      %v569 = vpop.f32.mrb[0].mxu0
      %v570 = vadd.f32 0.0, %v569
      %v571 = vpop.f32.mrb[0].mxu0
      %572 = vmatprep.mubr.bf16.mxu0 0
      %573 = vmatmul.mubr.bf16.gmra.mrb[0].mxu0 %v365
      %v574 = vpop.f32.mrb[0].mxu0
      %v575 = vadd.f32 0.0, %v574
      %v576 = vpop.f32.mrb[0].mxu0
      %v577 = vpop.f32.mrb[0].mxu0
      %v578 = vadd.f32 0.0, %v577
      %v579 = vpop.f32.mrb[0].mxu0
      %580 = vmatprep.mubr.bf16.mxu0 0
      %581 = vmatmul.mubr.bf16.gmra.mrb[0].mxu0 %v366
      %v582 = vpop.f32.mrb[0].mxu0
      %v583 = vadd.f32 0.0, %v582
      %v584 = vpop.f32.mrb[0].mxu0
      %v585 = vpop.f32.mrb[0].mxu0
      %v586 = vadd.f32 0.0, %v585
      %v587 = vpop.f32.mrb[0].mxu0
      %588 = vmatprep.mubr.bf16.mxu0 0
      %589 = vmatmul.mubr.bf16.gmra.mrb[0].mxu0 %v367
      %v590 = vpop.f32.mrb[0].mxu0
      %v591 = vadd.f32 0.0, %v590
      %v592 = vpop.f32.mrb[0].mxu0
      %v593 = vpop.f32.mrb[0].mxu0
      %v594 = vadd.f32 0.0, %v593
      %v595 = vpop.f32.mrb[0].mxu0
      %596 = vmatprep.mubr.bf16.mxu0 0
      %597 = vmatmul.mubr.bf16.gmra.mrb[0].mxu0 %v368
      %v598 = vpop.f32.mrb[0].mxu0
      %v599 = vadd.f32 0.0, %v598
      %v600 = vpop.f32.mrb[0].mxu0
      %v601 = vpop.f32.mrb[0].mxu0
      %v602 = vadd.f32 0.0, %v601
      %v603 = vpop.f32.mrb[0].mxu0
      %604 = vmatprep.mubr.bf16.mxu0 0
      %605 = vmatmul.mubr.bf16.gmra.mrb[0].mxu0 %v369
      %v606 = vpop.f32.mrb[0].mxu0
      %v607 = vadd.f32 0.0, %v606
      %v608 = vpop.f32.mrb[0].mxu0
      %v609 = vpop.f32.mrb[0].mxu0
      %v610 = vadd.f32 0.0, %v609
      %v611 = vpop.f32.mrb[0].mxu0
      %612 = vmatprep.mubr.bf16.mxu0 0
      %613 = vmatmul.mubr.bf16.gmra.mrb[0].mxu0 %v370
      %v614 = vpop.f32.mrb[0].mxu0
      %v615 = vadd.f32 0.0, %v614
      %v616 = vpop.f32.mrb[0].mxu0
      %v617 = vpop.f32.mrb[0].mxu0
      %v618 = vadd.f32 0.0, %v617
      %v619 = vpop.f32.mrb[0].mxu0
      %620 = vmatprep.mubr.bf16.mxu0 0
      %621 = vmatmul.mubr.bf16.gmra.mrb[0].mxu0 %v371
      %v622 = vpop.f32.mrb[0].mxu0
      %v623 = vadd.f32 0.0, %v622
      %v624 = vpop.f32.mrb[0].mxu0
      %v625 = vpop.f32.mrb[0].mxu0
      %v626 = vadd.f32 0.0, %v625
      %v627 = vpop.f32.mrb[0].mxu0
      %628 = vmatprep.mubr.bf16.mxu0 0
      %629 = vmatmul.mubr.bf16.gmra.mrb[0].mxu0 %v372
      %v630 = vpop.f32.mrb[0].mxu0
      %v631 = vadd.f32 0.0, %v630
      %v632 = vpop.f32.mrb[0].mxu0
      %v633 = vpop.f32.mrb[0].mxu0
      %v634 = vadd.f32 0.0, %v633
      %v635 = vpop.f32.mrb[0].mxu0
      %636 = vmatprep.mubr.bf16.mxu0 0
      %637 = vmatmul.mubr.bf16.gmra.mrb[0].mxu0 %v373
      %v638 = vpop.f32.mrb[0].mxu0
      %v639 = vadd.f32 0.0, %v638
      %v640 = vpop.f32.mrb[0].mxu0
      %v641 = vpop.f32.mrb[0].mxu0
      %v642 = vadd.f32 0.0, %v641
      %v643 = vpop.f32.mrb[0].mxu0
      %644 = vmatprep.mubr.bf16.mxu0 0
      %645 = vmatmul.mubr.bf16.gmra.mrb[0].mxu0 %v374
      %v646 = vpop.f32.mrb[0].mxu0
      %v647 = vadd.f32 0.0, %v646
      %v648 = vpop.f32.mrb[0].mxu0
      %v649 = vpop.f32.mrb[0].mxu0
      %v650 = vadd.f32 0.0, %v649
      %v651 = vpop.f32.mrb[0].mxu0
      %652 = vmatprep.mubr.bf16.mxu0 0
      %653 = vmatmul.mubr.bf16.gmra.mrb[0].mxu0 %v375
      %v654 = vpop.f32.mrb[0].mxu0
      %v655 = vadd.f32 0.0, %v654
      %v656 = vpop.f32.mrb[0].mxu0
      %v657 = vpop.f32.mrb[0].mxu0
      %v658 = vadd.f32 0.0, %v657
      %v659 = vpop.f32.mrb[0].mxu0
      %660 = vmatprep.mubr.bf16.mxu0 0
      %661 = vmatmul.mubr.bf16.gmra.mrb[0].mxu0 %v376
      %v662 = vpop.f32.mrb[0].mxu0
      %v663 = vadd.f32 0.0, %v662
      %v664 = vpop.f32.mrb[0].mxu0
      %v665 = vpop.f32.mrb[0].mxu0
      %v666 = vadd.f32 0.0, %v665
      %v667 = vpop.f32.mrb[0].mxu0
      %668 = vmatprep.mubr.bf16.mxu0 0
      %669 = vmatmul.mubr.bf16.gmra.mrb[0].mxu0 %v377
      %v670 = vpop.f32.mrb[0].mxu0
      %v671 = vadd.f32 0.0, %v670
      %v672 = vpop.f32.mrb[0].mxu0
      %v673 = vpop.f32.mrb[0].mxu0
      %v674 = vadd.f32 0.0, %v673
      %v675 = vpop.f32.mrb[0].mxu0
      %676 = vmatprep.mubr.bf16.mxu0 0
      %677 = vmatmul.mubr.bf16.gmra.mrb[0].mxu0 %v378
      %v678 = vpop.f32.mrb[0].mxu0
      %v679 = vadd.f32 0.0, %v678
      %v680 = vpop.f32.mrb[0].mxu0
      %v681 = vpop.f32.mrb[0].mxu0
      %v682 = vadd.f32 0.0, %v681
      %v683 = vpop.f32.mrb[0].mxu0
      %684 = vmatprep.mubr.bf16.mxu0 0
      %685 = vmatmul.mubr.bf16.gmra.mrb[0].mxu0 %v379
      %v686 = vpop.f32.mrb[0].mxu0
      %v687 = vadd.f32 0.0, %v686
      %v688 = vpop.f32.mrb[0].mxu0
      %v689 = vpop.f32.mrb[0].mxu0
      %v690 = vadd.f32 0.0, %v689
      %v691 = vpop.f32.mrb[0].mxu0
      %692 = vmatprep.mubr.bf16.mxu0 0
      %693 = vmatmul.mubr.bf16.gmra.mrb[0].mxu0 %v380
      %v694 = vpop.f32.mrb[0].mxu0
      %v695 = vadd.f32 0.0, %v694
      %v696 = vpop.f32.mrb[0].mxu0
      %v697 = vpop.f32.mrb[0].mxu0
      %v698 = vadd.f32 0.0, %v697
      %v699 = vpop.f32.mrb[0].mxu0
      %700 = vmatprep.mubr.bf16.mxu0 0
      %701 = vmatmul.mubr.bf16.gmra.mrb[0].mxu0 %v381
      %v702 = vpop.f32.mrb[0].mxu0
      %v703 = vadd.f32 0.0, %v702
      %v704 = vpop.f32.mrb[0].mxu0
      %v705 = vpop.f32.mrb[0].mxu0
      %v706 = vadd.f32 0.0, %v705
      %v707 = vpop.f32.mrb[0].mxu0
      %708 = vmatprep.mubr.bf16.mxu0 0
      %709 = vmatmul.mubr.bf16.gmra.mrb[0].mxu0 %v382
      %v710 = vpop.f32.mrb[0].mxu0
      %v711 = vadd.f32 0.0, %v710
      %v712 = vpop.f32.mrb[0].mxu0
      %v713 = vpop.f32.mrb[0].mxu0
      %v714 = vadd.f32 0.0, %v713
      %v715 = vpop.f32.mrb[0].mxu0
      %716 = vmatprep.mubr.bf16.mxu0 0
      %717 = vmatmul.mubr.bf16.gmra.mrb[0].mxu0 %v383
      %v718 = vpop.f32.mrb[0].mxu0
      %v719 = vadd.f32 0.0, %v718
      %v720 = vpop.f32.mrb[0].mxu0
      %v721 = vpop.f32.mrb[0].mxu0
      %v722 = vadd.f32 0.0, %v721
      %v723 = vpop.f32.mrb[0].mxu0
      %724 = vmatprep.mubr.bf16.mxu0 0
      %725 = vmatmul.mubr.bf16.gmra.mrb[0].mxu0 %v384
      %v726 = vpop.f32.mrb[0].mxu0
      %v727 = vadd.f32 0.0, %v726
      %v728 = vpop.f32.mrb[0].mxu0
      %v729 = vpop.f32.mrb[0].mxu0
      %v730 = vadd.f32 0.0, %v729
      %v731 = vpop.f32.mrb[0].mxu0
      %732 = vmatprep.mubr.bf16.mxu0 0
      %733 = vmatmul.mubr.bf16.gmra.mrb[0].mxu0 %v385
      %v734 = vpop.f32.mrb[0].mxu0
      %v735 = vadd.f32 0.0, %v734
      %v736 = vpop.f32.mrb[0].mxu0
      %v737 = vpop.f32.mrb[0].mxu0
      %v738 = vadd.f32 0.0, %v737
      %v739 = vpop.f32.mrb[0].mxu0
      %740 = vmatprep.mubr.bf16.mxu0 0
      %741 = vmatmul.mubr.bf16.gmra.mrb[0].mxu0 %v386
      %v742 = vpop.f32.mrb[0].mxu0
      %v743 = vadd.f32 0.0, %v742
      %v744 = vpop.f32.mrb[0].mxu0
      %v745 = vpop.f32.mrb[0].mxu0
      %v746 = vadd.f32 0.0, %v745
      %v747 = vpop.f32.mrb[0].mxu0
      %748 = vmatprep.mubr.bf16.mxu0 0
      %749 = vmatmul.mubr.bf16.gmra.mrb[0].mxu0 %v387
      %v750 = vpop.f32.mrb[0].mxu0
      %v751 = vadd.f32 0.0, %v750
      %v752 = vpop.f32.mrb[0].mxu0
      %v753 = vpop.f32.mrb[0].mxu0
      %v754 = vadd.f32 0.0, %v753
      %v755 = vpop.f32.mrb[0].mxu0
      %756 = vdwg.mxu0
      %v757 = vmul.f32 %v503, 0.2
      %v758 = vmul.f32 %v506, 0.2
      %v759 = vmul.f32 %v511, 0.2
      %v760 = vmul.f32 %v514, 0.2
      %v761 = vmul.f32 %v519, 0.2
      %v762 = vmul.f32 %v522, 0.2
      %v763 = vmul.f32 %v527, 0.2
      %v764 = vmul.f32 %v530, 0.2
      %v765 = vmul.f32 %v535, 0.2
      %v766 = vmul.f32 %v538, 0.2
      %v767 = vmul.f32 %v543, 0.2
      %v768 = vmul.f32 %v546, 0.2
      %v769 = vmul.f32 %v551, 0.2
      %v770 = vmul.f32 %v554, 0.2
      %v771 = vmul.f32 %v559, 0.2
      %v772 = vmul.f32 %v562, 0.2
      %v773 = vmul.f32 %v567, 0.2
      %v774 = vmul.f32 %v570, 0.2
      %v775 = vmul.f32 %v575, 0.2
      %v776 = vmul.f32 %v578, 0.2
      %v777 = vmul.f32 %v583, 0.2
      %v778 = vmul.f32 %v586, 0.2
      %v779 = vmul.f32 %v591, 0.2
      %v780 = vmul.f32 %v594, 0.2
      %v781 = vmul.f32 %v599, 0.2
      %v782 = vmul.f32 %v602, 0.2
      %v783 = vmul.f32 %v607, 0.2
      %v784 = vmul.f32 %v610, 0.2
      %v785 = vmul.f32 %v615, 0.2
      %v786 = vmul.f32 %v618, 0.2
      %v787 = vmul.f32 %v623, 0.2
      %v788 = vmul.f32 %v626, 0.2
      %v789 = vmul.f32 %v631, 0.2
      %v790 = vmul.f32 %v634, 0.2
      %v791 = vmul.f32 %v639, 0.2
      %v792 = vmul.f32 %v642, 0.2
      %v793 = vmul.f32 %v647, 0.2
      %v794 = vmul.f32 %v650, 0.2
      %v795 = vmul.f32 %v655, 0.2
      %v796 = vmul.f32 %v658, 0.2
      %v797 = vmul.f32 %v663, 0.2
      %v798 = vmul.f32 %v666, 0.2
      %v799 = vmul.f32 %v671, 0.2
      %v800 = vmul.f32 %v674, 0.2
      %v801 = vmul.f32 %v679, 0.2
      %v802 = vmul.f32 %v682, 0.2
      %v803 = vmul.f32 %v687, 0.2
      %v804 = vmul.f32 %v690, 0.2
      %v805 = vmul.f32 %v695, 0.2
      %v806 = vmul.f32 %v698, 0.2
      %v807 = vmul.f32 %v703, 0.2
      %v808 = vmul.f32 %v706, 0.2
      %v809 = vmul.f32 %v711, 0.2
      %v810 = vmul.f32 %v714, 0.2
      %v811 = vmul.f32 %v719, 0.2
      %v812 = vmul.f32 %v722, 0.2
      %v813 = vmul.f32 %v727, 0.2
      %v814 = vmul.f32 %v730, 0.2
      %v815 = vmul.f32 %v735, 0.2
      %v816 = vmul.f32 %v738, 0.2
      %v817 = vmul.f32 %v743, 0.2
      %v818 = vmul.f32 %v746, 0.2
      %v819 = vmul.f32 %v751, 0.2
      %v820 = vmul.f32 %v754, 0.2
      %v821 = vmax.f32 %v503, %v757
      %v822 = vmax.f32 %v506, %v758
      %v823 = vmax.f32 %v511, %v759
      %v824 = vmax.f32 %v514, %v760
      %v825 = vmax.f32 %v519, %v761
      %v826 = vmax.f32 %v522, %v762
      %v827 = vmax.f32 %v527, %v763
      %v828 = vmax.f32 %v530, %v764
      %v829 = vmax.f32 %v535, %v765
      %v830 = vmax.f32 %v538, %v766
      %v831 = vmax.f32 %v543, %v767
      %v832 = vmax.f32 %v546, %v768
      %v833 = vmax.f32 %v551, %v769
      %v834 = vmax.f32 %v554, %v770
      %v835 = vmax.f32 %v559, %v771
      %v836 = vmax.f32 %v562, %v772
      %v837 = vmax.f32 %v567, %v773
      %v838 = vmax.f32 %v570, %v774
      %v839 = vmax.f32 %v575, %v775
      %v840 = vmax.f32 %v578, %v776
      %v841 = vmax.f32 %v583, %v777
      %v842 = vmax.f32 %v586, %v778
      %v843 = vmax.f32 %v591, %v779
      %v844 = vmax.f32 %v594, %v780
      %v845 = vmax.f32 %v599, %v781
      %v846 = vmax.f32 %v602, %v782
      %v847 = vmax.f32 %v607, %v783
      %v848 = vmax.f32 %v610, %v784
      %v849 = vmax.f32 %v615, %v785
      %v850 = vmax.f32 %v618, %v786
      %v851 = vmax.f32 %v623, %v787
      %v852 = vmax.f32 %v626, %v788
      %v853 = vmax.f32 %v631, %v789
      %v854 = vmax.f32 %v634, %v790
      %v855 = vmax.f32 %v639, %v791
      %v856 = vmax.f32 %v642, %v792
      %v857 = vmax.f32 %v647, %v793
      %v858 = vmax.f32 %v650, %v794
      %v859 = vmax.f32 %v655, %v795
      %v860 = vmax.f32 %v658, %v796
      %v861 = vmax.f32 %v663, %v797
      %v862 = vmax.f32 %v666, %v798
      %v863 = vmax.f32 %v671, %v799
      %v864 = vmax.f32 %v674, %v800
      %v865 = vmax.f32 %v679, %v801
      %v866 = vmax.f32 %v682, %v802
      %v867 = vmax.f32 %v687, %v803
      %v868 = vmax.f32 %v690, %v804
      %v869 = vmax.f32 %v695, %v805
      %v870 = vmax.f32 %v698, %v806
      %v871 = vmax.f32 %v703, %v807
      %v872 = vmax.f32 %v706, %v808
      %v873 = vmax.f32 %v711, %v809
      %v874 = vmax.f32 %v714, %v810
      %v875 = vmax.f32 %v719, %v811
      %v876 = vmax.f32 %v722, %v812
      %v877 = vmax.f32 %v727, %v813
      %v878 = vmax.f32 %v730, %v814
      %v879 = vmax.f32 %v735, %v815
      %v880 = vmax.f32 %v738, %v816
      %v881 = vmax.f32 %v743, %v817
      %v882 = vmax.f32 %v746, %v818
      %v883 = vmax.f32 %v751, %v819
      %v884 = vmax.f32 %v754, %v820
      %v885 = vpack.c.bf16 %v822, %v821
      %v886 = vpack.c.bf16 %v824, %v823
      %v887 = vpack.c.bf16 %v826, %v825
      %v888 = vpack.c.bf16 %v828, %v827
      %v889 = vpack.c.bf16 %v830, %v829
      %v890 = vpack.c.bf16 %v832, %v831
      %v891 = vpack.c.bf16 %v834, %v833
      %v892 = vpack.c.bf16 %v836, %v835
      %v893 = vpack.c.bf16 %v838, %v837
      %v894 = vpack.c.bf16 %v840, %v839
      %v895 = vpack.c.bf16 %v842, %v841
      %v896 = vpack.c.bf16 %v844, %v843
      %v897 = vpack.c.bf16 %v846, %v845
      %v898 = vpack.c.bf16 %v848, %v847
      %v899 = vpack.c.bf16 %v850, %v849
      %v900 = vpack.c.bf16 %v852, %v851
      %v901 = vpack.c.bf16 %v854, %v853
      %v902 = vpack.c.bf16 %v856, %v855
      %v903 = vpack.c.bf16 %v858, %v857
      %v904 = vpack.c.bf16 %v860, %v859
      %v905 = vpack.c.bf16 %v862, %v861
      %v906 = vpack.c.bf16 %v864, %v863
      %v907 = vpack.c.bf16 %v866, %v865
      %v908 = vpack.c.bf16 %v868, %v867
      %v909 = vpack.c.bf16 %v870, %v869
      %v910 = vpack.c.bf16 %v872, %v871
      %v911 = vpack.c.bf16 %v874, %v873
      %v912 = vpack.c.bf16 %v876, %v875
      %v913 = vpack.c.bf16 %v878, %v877
      %v914 = vpack.c.bf16 %v880, %v879
      %v915 = vpack.c.bf16 %v882, %v881
      %v916 = vpack.c.bf16 %v884, %v883
      %v949 = vunpack.c.l.b16 %v885
      %v950 = vunpack.c.h.b16 %v885
      %v951 = vunpack.c.l.b16 %v886
      %v952 = vunpack.c.h.b16 %v886
      %v953 = vunpack.c.l.b16 %v887
      %v954 = vunpack.c.h.b16 %v887
      %v955 = vunpack.c.l.b16 %v888
      %v956 = vunpack.c.h.b16 %v888
      %v957 = vunpack.c.l.b16 %v889
      %v958 = vunpack.c.h.b16 %v889
      %v959 = vunpack.c.l.b16 %v890
      %v960 = vunpack.c.h.b16 %v890
      %v961 = vunpack.c.l.b16 %v891
      %v962 = vunpack.c.h.b16 %v891
      %v963 = vunpack.c.l.b16 %v892
      %v964 = vunpack.c.h.b16 %v892
      %v965 = vunpack.c.l.b16 %v893
      %v966 = vunpack.c.h.b16 %v893
      %v967 = vunpack.c.l.b16 %v894
      %v968 = vunpack.c.h.b16 %v894
      %v969 = vunpack.c.l.b16 %v895
      %v970 = vunpack.c.h.b16 %v895
      %v971 = vunpack.c.l.b16 %v896
      %v972 = vunpack.c.h.b16 %v896
      %v973 = vunpack.c.l.b16 %v897
      %v974 = vunpack.c.h.b16 %v897
      %v975 = vunpack.c.l.b16 %v898
      %v976 = vunpack.c.h.b16 %v898
      %v977 = vunpack.c.l.b16 %v899
      %v978 = vunpack.c.h.b16 %v899
      %v979 = vunpack.c.l.b16 %v900
      %v980 = vunpack.c.h.b16 %v900
      %v981 = vunpack.c.l.b16 %v901
      %v982 = vunpack.c.h.b16 %v901
      %v983 = vunpack.c.l.b16 %v902
      %v984 = vunpack.c.h.b16 %v902
      %v985 = vunpack.c.l.b16 %v903
      %v986 = vunpack.c.h.b16 %v903
      %v987 = vunpack.c.l.b16 %v904
      %v988 = vunpack.c.h.b16 %v904
      %v989 = vunpack.c.l.b16 %v905
      %v990 = vunpack.c.h.b16 %v905
      %v991 = vunpack.c.l.b16 %v906
      %v992 = vunpack.c.h.b16 %v906
      %v993 = vunpack.c.l.b16 %v907
      %v994 = vunpack.c.h.b16 %v907
      %v995 = vunpack.c.l.b16 %v908
      %v996 = vunpack.c.h.b16 %v908
      %v997 = vunpack.c.l.b16 %v909
      %v998 = vunpack.c.h.b16 %v909
      %v999 = vunpack.c.l.b16 %v910
      %v1000 = vunpack.c.h.b16 %v910
      %v1001 = vunpack.c.l.b16 %v911
      %v1002 = vunpack.c.h.b16 %v911
      %v1003 = vunpack.c.l.b16 %v912
      %v1004 = vunpack.c.h.b16 %v912
      %v1005 = vunpack.c.l.b16 %v913
      %v1006 = vunpack.c.h.b16 %v913
      %v1007 = vunpack.c.l.b16 %v914
      %v1008 = vunpack.c.h.b16 %v914
      %v1009 = vunpack.c.l.b16 %v915
      %v1010 = vunpack.c.h.b16 %v915
      %v1011 = vunpack.c.l.b16 %v916
      %v1012 = vunpack.c.h.b16 %v916
      %v1013 = vpack.c.b16 %v949, %v949
      %v1014 = vpack.c.b16 %v950, %v950
      %v1015 = vpack.c.b16 %v951, %v951
      %v1016 = vpack.c.b16 %v952, %v952
      %v1017 = vpack.c.b16 %v953, %v953
      %v1018 = vpack.c.b16 %v954, %v954
      %v1019 = vpack.c.b16 %v955, %v955
      %v1020 = vpack.c.b16 %v956, %v956
      %v1021 = vpack.c.b16 %v957, %v957
      %v1022 = vpack.c.b16 %v958, %v958
      %v1023 = vpack.c.b16 %v959, %v959
      %v1024 = vpack.c.b16 %v960, %v960
      %v1025 = vpack.c.b16 %v961, %v961
      %v1026 = vpack.c.b16 %v962, %v962
      %v1027 = vpack.c.b16 %v963, %v963
      %v1028 = vpack.c.b16 %v964, %v964
      %v1029 = vpack.c.b16 %v965, %v965
      %v1030 = vpack.c.b16 %v966, %v966
      %v1031 = vpack.c.b16 %v967, %v967
      %v1032 = vpack.c.b16 %v968, %v968
      %v1033 = vpack.c.b16 %v969, %v969
      %v1034 = vpack.c.b16 %v970, %v970
      %v1035 = vpack.c.b16 %v971, %v971
      %v1036 = vpack.c.b16 %v972, %v972
      %v1037 = vpack.c.b16 %v973, %v973
      %v1038 = vpack.c.b16 %v974, %v974
      %v1039 = vpack.c.b16 %v975, %v975
      %v1040 = vpack.c.b16 %v976, %v976
      %v1041 = vpack.c.b16 %v977, %v977
      %v1042 = vpack.c.b16 %v978, %v978
      %v1043 = vpack.c.b16 %v979, %v979
      %v1044 = vpack.c.b16 %v980, %v980
      %v1045 = vpack.c.b16 %v981, %v981
      %v1046 = vpack.c.b16 %v982, %v982
      %v1047 = vpack.c.b16 %v983, %v983
      %v1048 = vpack.c.b16 %v984, %v984
      %v1049 = vpack.c.b16 %v985, %v985
      %v1050 = vpack.c.b16 %v986, %v986
      %v1051 = vpack.c.b16 %v987, %v987
      %v1052 = vpack.c.b16 %v988, %v988
      %v1053 = vpack.c.b16 %v989, %v989
      %v1054 = vpack.c.b16 %v990, %v990
      %v1055 = vpack.c.b16 %v991, %v991
      %v1056 = vpack.c.b16 %v992, %v992
      %v1057 = vpack.c.b16 %v993, %v993
      %v1058 = vpack.c.b16 %v994, %v994
      %v1059 = vpack.c.b16 %v995, %v995
      %v1060 = vpack.c.b16 %v996, %v996
      %v1061 = vpack.c.b16 %v997, %v997
      %v1062 = vpack.c.b16 %v998, %v998
      %v1063 = vpack.c.b16 %v999, %v999
      %v1064 = vpack.c.b16 %v1000, %v1000
      %v1065 = vpack.c.b16 %v1001, %v1001
      %v1066 = vpack.c.b16 %v1002, %v1002
      %v1067 = vpack.c.b16 %v1003, %v1003
      %v1068 = vpack.c.b16 %v1004, %v1004
      %v1069 = vpack.c.b16 %v1005, %v1005
      %v1070 = vpack.c.b16 %v1006, %v1006
      %v1071 = vpack.c.b16 %v1007, %v1007
      %v1072 = vpack.c.b16 %v1008, %v1008
      %v1073 = vpack.c.b16 %v1009, %v1009
      %v1074 = vpack.c.b16 %v1010, %v1010
      %v1075 = vpack.c.b16 %v1011, %v1011
      %v1076 = vpack.c.b16 %v1012, %v1012
      %vm1141 = vcmask 60416
      %1142 = vst.msk [vmem:[%s145] sm:$0xf] %vm1141, %v1013
      %1143 = vst.msk [vmem:[%s145 + $0x4] sm:$0xf] %vm1141, %v1014
      %1144 = vst.msk [vmem:[%s145 + $0x8] sm:$0xf] %vm1141, %v1015
      %1145 = vst.msk [vmem:[%s145 + $0xc] sm:$0xf] %vm1141, %v1016
      %1146 = vst.msk [vmem:[%s145 + $0x10] sm:$0xf] %vm1141, %v1017
      %1147 = vst.msk [vmem:[%s145 + $0x14] sm:$0xf] %vm1141, %v1018
      %1148 = vst.msk [vmem:[%s145 + $0x18] sm:$0xf] %vm1141, %v1019
      %1149 = vst.msk [vmem:[%s145 + $0x1c] sm:$0xf] %vm1141, %v1020
      %1150 = vst.msk [vmem:[%s145 + $0x20] sm:$0xf] %vm1141, %v1021
      %1151 = vst.msk [vmem:[%s145 + $0x24] sm:$0xf] %vm1141, %v1022
      %1152 = vst.msk [vmem:[%s145 + $0x28] sm:$0xf] %vm1141, %v1023
      %1153 = vst.msk [vmem:[%s145 + $0x2c] sm:$0xf] %vm1141, %v1024
      %1154 = vst.msk [vmem:[%s145 + $0x30] sm:$0xf] %vm1141, %v1025
      %1155 = vst.msk [vmem:[%s145 + $0x34] sm:$0xf] %vm1141, %v1026
      %1156 = vst.msk [vmem:[%s145 + $0x38] sm:$0xf] %vm1141, %v1027
      %1157 = vst.msk [vmem:[%s145 + $0x3c] sm:$0xf] %vm1141, %v1028
      %1158 = vst.msk [vmem:[%s145 + $0x40] sm:$0xf] %vm1141, %v1029
      %1159 = vst.msk [vmem:[%s145 + $0x44] sm:$0xf] %vm1141, %v1030
      %1160 = vst.msk [vmem:[%s145 + $0x48] sm:$0xf] %vm1141, %v1031
      %1161 = vst.msk [vmem:[%s145 + $0x4c] sm:$0xf] %vm1141, %v1032
      %1162 = vst.msk [vmem:[%s145 + $0x50] sm:$0xf] %vm1141, %v1033
      %1163 = vst.msk [vmem:[%s145 + $0x54] sm:$0xf] %vm1141, %v1034
      %1164 = vst.msk [vmem:[%s145 + $0x58] sm:$0xf] %vm1141, %v1035
      %1165 = vst.msk [vmem:[%s145 + $0x5c] sm:$0xf] %vm1141, %v1036
      %1166 = vst.msk [vmem:[%s145 + $0x60] sm:$0xf] %vm1141, %v1037
      %1167 = vst.msk [vmem:[%s145 + $0x64] sm:$0xf] %vm1141, %v1038
      %1168 = vst.msk [vmem:[%s145 + $0x68] sm:$0xf] %vm1141, %v1039
      %1169 = vst.msk [vmem:[%s145 + $0x6c] sm:$0xf] %vm1141, %v1040
      %1170 = vst.msk [vmem:[%s145 + $0x70] sm:$0xf] %vm1141, %v1041
      %1171 = vst.msk [vmem:[%s145 + $0x74] sm:$0xf] %vm1141, %v1042
      %1172 = vst.msk [vmem:[%s145 + $0x78] sm:$0xf] %vm1141, %v1043
      %1173 = vst.msk [vmem:[%s145 + $0x7c] sm:$0xf] %vm1141, %v1044
      %1174 = vst.msk [vmem:[%s145 + $0x80] sm:$0xf] %vm1141, %v1045
      %1175 = vst.msk [vmem:[%s145 + $0x84] sm:$0xf] %vm1141, %v1046
      %1176 = vst.msk [vmem:[%s145 + $0x88] sm:$0xf] %vm1141, %v1047
      %1177 = vst.msk [vmem:[%s145 + $0x8c] sm:$0xf] %vm1141, %v1048
      %1178 = vst.msk [vmem:[%s145 + $0x90] sm:$0xf] %vm1141, %v1049
      %1179 = vst.msk [vmem:[%s145 + $0x94] sm:$0xf] %vm1141, %v1050
      %1180 = vst.msk [vmem:[%s145 + $0x98] sm:$0xf] %vm1141, %v1051
      %1181 = vst.msk [vmem:[%s145 + $0x9c] sm:$0xf] %vm1141, %v1052
      %1182 = vst.msk [vmem:[%s145 + $0xa0] sm:$0xf] %vm1141, %v1053
      %1183 = vst.msk [vmem:[%s145 + $0xa4] sm:$0xf] %vm1141, %v1054
      %1184 = vst.msk [vmem:[%s145 + $0xa8] sm:$0xf] %vm1141, %v1055
      %1185 = vst.msk [vmem:[%s145 + $0xac] sm:$0xf] %vm1141, %v1056
      %1186 = vst.msk [vmem:[%s145 + $0xb0] sm:$0xf] %vm1141, %v1057
      %1187 = vst.msk [vmem:[%s145 + $0xb4] sm:$0xf] %vm1141, %v1058
      %1188 = vst.msk [vmem:[%s145 + $0xb8] sm:$0xf] %vm1141, %v1059
      %1189 = vst.msk [vmem:[%s145 + $0xbc] sm:$0xf] %vm1141, %v1060
      %1190 = vst.msk [vmem:[%s145 + $0xc0] sm:$0xf] %vm1141, %v1061
      %1191 = vst.msk [vmem:[%s145 + $0xc4] sm:$0xf] %vm1141, %v1062
      %1192 = vst.msk [vmem:[%s145 + $0xc8] sm:$0xf] %vm1141, %v1063
      %1193 = vst.msk [vmem:[%s145 + $0xcc] sm:$0xf] %vm1141, %v1064
      %1194 = vst.msk [vmem:[%s145 + $0xd0] sm:$0xf] %vm1141, %v1065
      %1195 = vst.msk [vmem:[%s145 + $0xd4] sm:$0xf] %vm1141, %v1066
      %1196 = vst.msk [vmem:[%s145 + $0xd8] sm:$0xf] %vm1141, %v1067
      %1197 = vst.msk [vmem:[%s145 + $0xdc] sm:$0xf] %vm1141, %v1068
      %1198 = vst.msk [vmem:[%s145 + $0xe0] sm:$0xf] %vm1141, %v1069
      %1199 = vst.msk [vmem:[%s145 + $0xe4] sm:$0xf] %vm1141, %v1070
      %1200 = vst.msk [vmem:[%s145 + $0xe8] sm:$0xf] %vm1141, %v1071
      %1201 = vst.msk [vmem:[%s145 + $0xec] sm:$0xf] %vm1141, %v1072
      %1202 = vst.msk [vmem:[%s145 + $0xf0] sm:$0xf] %vm1141, %v1073
      %1203 = vst.msk [vmem:[%s145 + $0xf4] sm:$0xf] %vm1141, %v1074
      %1204 = vst.msk [vmem:[%s145 + $0xf8] sm:$0xf] %vm1141, %v1075
      %1205 = vst.msk [vmem:[%s145 + $0xfc] sm:$0xf] %vm1141, %v1076
      %s1206 = smul.u32 64, %s13
      %p1207 = scmp.lt.s32.totalorder %s1206, 255
      %s1208 = scalar_select %p1207, %s1206, 255
      %s1209 = smul.addr %s1208, 4
      %s1210 = scalar_lea.vmem %s2, %s1209
      // Predicated region
      $region29: #{netd_forward.5} parent=27 // pred_check
        %p1211 = pneg %p78
      $region30: #{netd_forward.5} parent=27 // pred_check_branch
        %1213 = sbr.rel (%p1211) target = $region32
      $region31: #{netd_forward.5} parent=27 // pred_region
        %s1214 = smul.u32 64, %s13
      $region32: #{netd_forward.5} parent=27 // pred_fallthru
        _
    $region28: #{netd_forward.5} parent=5 // pred_fallthru
      _
    %p1215 = scmp.le.s32.totalorder 2, %s8
    // Predicated region
    $region33: #{netd_forward.5} parent=5 // pred_check
      %p1216 = pneg %p1215
    $region34: #{netd_forward.5} parent=5 // pred_check_branch
      %1218 = sbr.rel (%p1216) target = $region36
    $region35: #{netd_forward.5} parent=5 // pred_region
      %s1219 = ssub.s32 %s8, 2
      // Predicated region
      $region37: #{netd_forward.5} parent=35 // pred_check
        %p1220 = pneg %p84
      $region38: #{netd_forward.5} parent=35 // pred_check_branch
        %1222 = sbr.rel (%p1220) target = $region40
      $region39: #{netd_forward.5} parent=35 // pred_region
        %s1223 = smul.u32 64, %s14
        %p1224 = scmp.lt.s32.totalorder %s1223, 255
        %s1225 = scalar_select %p1224, %s1223, 255
        %s1226 = smul.addr %s1225, 4
        %s1227 = scalar_lea.vmem %s2, %s1226
      $region40: #{netd_forward.5} parent=35 // pred_fallthru
        _
    $region36: #{netd_forward.5} parent=5 // pred_fallthru
      _
  $region6: #{netd_forward.5} parent=0 // loop_footer
    %s12 = sadd.s32 1, %s8
  $region7: #{netd_forward.5} parent=0 // loop_footer_branch
    %7 = sbr.rel target = $region3
  $region8: #{netd_forward.5} parent=0 // loop_exit
    _

// kernel: netd_forward.6
$region0: #{netd_forward.6}
  #allocation0 [shape = 'u32[]', space=smem, size = 0x4, offset = 0x4, fixed_abs, tag = 'smem constant byte address 0x4 - core index']
  #allocation1 [shape = 'u32[144,128]{1,0:T(1,128)}', space=vmem, size = 0x12000, scoped, tag = 'internal scratch']
  %s0 = inlined_call_operand.vmem [shape: bf16[512,128], index: 0, kind: input, shape index: {}]
  %s1 = inlined_call_operand.vmem [shape: bf16[128,128], index: 1, kind: input, shape index: {}]
  %s2 = inlined_call_operand.vmem [shape: f32[1,16], index: 2, kind: input, shape index: {}]
  %s3 = inlined_call_operand.vmem [shape: f32[1,16], index: 3, kind: input, shape index: {}]
  %s4 = inlined_call_operand.vmem [shape: bf16[512,16], index: 4, kind: output, shape index: {}]
  %s5 = sld [smem:[#allocation0]]
  $region26: #{netd_forward.6} parent=0
    _
  %s7 = ssub.s32 1, %s5
  %s8 = scalar_select 0, %s7, %s5
  // Predicated region
  $region2: #{netd_forward.6} parent=0 // pred_check
    _
  $region3: #{netd_forward.6} parent=0 // pred_check_branch
    %10 = sbr.rel (0) target = $region5
  $region4: #{netd_forward.6} parent=0 // pred_region
    _
  $region5: #{netd_forward.6} parent=0 // pred_fallthru
    _
  // Predicated region
  $region6: #{netd_forward.6} parent=0 // pred_check
    _
  $region7: #{netd_forward.6} parent=0 // pred_check_branch
    %12 = sbr.rel (0) target = $region9
  $region8: #{netd_forward.6} parent=0 // pred_region
    _
  $region9: #{netd_forward.6} parent=0 // pred_fallthru
    _
  // Predicated region
  $region10: #{netd_forward.6} parent=0 // pred_check
    _
  $region11: #{netd_forward.6} parent=0 // pred_check_branch
    %14 = sbr.rel (0) target = $region13
  $region12: #{netd_forward.6} parent=0 // pred_region
    _
  $region13: #{netd_forward.6} parent=0 // pred_fallthru
    _
  // Predicated region
  $region14: #{netd_forward.6} parent=0 // pred_check
    _
  $region15: #{netd_forward.6} parent=0 // pred_check_branch
    %16 = sbr.rel (0) target = $region17
  $region16: #{netd_forward.6} parent=0 // pred_region
    _
  $region17: #{netd_forward.6} parent=0 // pred_fallthru
    _
  %v18 = vld [vmem:[%s0] sm:$0xf]
  %v19 = vld [vmem:[%s0 + $0x4] sm:$0xf]
  %v20 = vld [vmem:[%s0 + $0x8] sm:$0xf]
  %v21 = vld [vmem:[%s0 + $0xc] sm:$0xf]
  %v22 = vld [vmem:[%s0 + $0x10] sm:$0xf]
  %v23 = vld [vmem:[%s0 + $0x14] sm:$0xf]
  %v24 = vld [vmem:[%s0 + $0x18] sm:$0xf]
  %v25 = vld [vmem:[%s0 + $0x1c] sm:$0xf]
  %v26 = vld [vmem:[%s0 + $0x20] sm:$0xf]
  %v27 = vld [vmem:[%s0 + $0x24] sm:$0xf]
  %v28 = vld [vmem:[%s0 + $0x28] sm:$0xf]
  %v29 = vld [vmem:[%s0 + $0x2c] sm:$0xf]
  %v30 = vld [vmem:[%s0 + $0x30] sm:$0xf]
  %v31 = vld [vmem:[%s0 + $0x34] sm:$0xf]
  %v32 = vld [vmem:[%s0 + $0x38] sm:$0xf]
  %v33 = vld [vmem:[%s0 + $0x3c] sm:$0xf]
  %v34 = vld [vmem:[%s0 + $0x40] sm:$0xf]
  %v35 = vld [vmem:[%s0 + $0x44] sm:$0xf]
  %v36 = vld [vmem:[%s0 + $0x48] sm:$0xf]
  %v37 = vld [vmem:[%s0 + $0x4c] sm:$0xf]
  %v38 = vld [vmem:[%s0 + $0x50] sm:$0xf]
  %v39 = vld [vmem:[%s0 + $0x54] sm:$0xf]
  %v40 = vld [vmem:[%s0 + $0x58] sm:$0xf]
  %v41 = vld [vmem:[%s0 + $0x5c] sm:$0xf]
  %v42 = vld [vmem:[%s0 + $0x60] sm:$0xf]
  %v43 = vld [vmem:[%s0 + $0x64] sm:$0xf]
  %v44 = vld [vmem:[%s0 + $0x68] sm:$0xf]
  %v45 = vld [vmem:[%s0 + $0x6c] sm:$0xf]
  %v46 = vld [vmem:[%s0 + $0x70] sm:$0xf]
  %v47 = vld [vmem:[%s0 + $0x74] sm:$0xf]
  %v48 = vld [vmem:[%s0 + $0x78] sm:$0xf]
  %v49 = vld [vmem:[%s0 + $0x7c] sm:$0xf]
  %v50 = vld [vmem:[%s0 + $0x80] sm:$0xf]
  %v51 = vld [vmem:[%s0 + $0x84] sm:$0xf]
  %v52 = vld [vmem:[%s0 + $0x88] sm:$0xf]
  %v53 = vld [vmem:[%s0 + $0x8c] sm:$0xf]
  %v54 = vld [vmem:[%s0 + $0x90] sm:$0xf]
  %v55 = vld [vmem:[%s0 + $0x94] sm:$0xf]
  %v56 = vld [vmem:[%s0 + $0x98] sm:$0xf]
  %v57 = vld [vmem:[%s0 + $0x9c] sm:$0xf]
  %v58 = vld [vmem:[%s0 + $0xa0] sm:$0xf]
  %v59 = vld [vmem:[%s0 + $0xa4] sm:$0xf]
  %v60 = vld [vmem:[%s0 + $0xa8] sm:$0xf]
  %v61 = vld [vmem:[%s0 + $0xac] sm:$0xf]
  %v62 = vld [vmem:[%s0 + $0xb0] sm:$0xf]
  %v63 = vld [vmem:[%s0 + $0xb4] sm:$0xf]
  %v64 = vld [vmem:[%s0 + $0xb8] sm:$0xf]
  %v65 = vld [vmem:[%s0 + $0xbc] sm:$0xf]
  %v66 = vld [vmem:[%s0 + $0xc0] sm:$0xf]
  %v67 = vld [vmem:[%s0 + $0xc4] sm:$0xf]
  %v68 = vld [vmem:[%s0 + $0xc8] sm:$0xf]
  %v69 = vld [vmem:[%s0 + $0xcc] sm:$0xf]
  %v70 = vld [vmem:[%s0 + $0xd0] sm:$0xf]
  %v71 = vld [vmem:[%s0 + $0xd4] sm:$0xf]
  %v72 = vld [vmem:[%s0 + $0xd8] sm:$0xf]
  %v73 = vld [vmem:[%s0 + $0xdc] sm:$0xf]
  %v74 = vld [vmem:[%s0 + $0xe0] sm:$0xf]
  %v75 = vld [vmem:[%s0 + $0xe4] sm:$0xf]
  %v76 = vld [vmem:[%s0 + $0xe8] sm:$0xf]
  %v77 = vld [vmem:[%s0 + $0xec] sm:$0xf]
  %v78 = vld [vmem:[%s0 + $0xf0] sm:$0xf]
  %v79 = vld [vmem:[%s0 + $0xf4] sm:$0xf]
  %v80 = vld [vmem:[%s0 + $0xf8] sm:$0xf]
  %v81 = vld [vmem:[%s0 + $0xfc] sm:$0xf]
  %v82 = vld [vmem:[%s1] sm:$0xf]
  %v83 = vld [vmem:[%s1 + $0x4] sm:$0xf]
  %v84 = vld [vmem:[%s1 + $0x8] sm:$0xf]
  %v85 = vld [vmem:[%s1 + $0xc] sm:$0xf]
  %v86 = vld [vmem:[%s1 + $0x10] sm:$0xf]
  %v87 = vld [vmem:[%s1 + $0x14] sm:$0xf]
  %v88 = vld [vmem:[%s1 + $0x18] sm:$0xf]
  %v89 = vld [vmem:[%s1 + $0x1c] sm:$0xf]
  %v90 = vld [vmem:[%s1 + $0x20] sm:$0xf]
  %v91 = vld [vmem:[%s1 + $0x24] sm:$0xf]
  %v92 = vld [vmem:[%s1 + $0x28] sm:$0xf]
  %v93 = vld [vmem:[%s1 + $0x2c] sm:$0xf]
  %v94 = vld [vmem:[%s1 + $0x30] sm:$0xf]
  %v95 = vld [vmem:[%s1 + $0x34] sm:$0xf]
  %v96 = vld [vmem:[%s1 + $0x38] sm:$0xf]
  %v97 = vld [vmem:[%s1 + $0x3c] sm:$0xf]
  %v162 = vunpack.c.l.b16 %v18
  %v163 = vunpack.c.l.b16 %v19
  %v164 = vunpack.c.l.b16 %v20
  %v165 = vunpack.c.l.b16 %v21
  %v166 = vunpack.c.l.b16 %v22
  %v167 = vunpack.c.l.b16 %v23
  %v168 = vunpack.c.l.b16 %v24
  %v169 = vunpack.c.l.b16 %v25
  %v170 = vunpack.c.l.b16 %v26
  %v171 = vunpack.c.l.b16 %v27
  %v172 = vunpack.c.l.b16 %v28
  %v173 = vunpack.c.l.b16 %v29
  %v174 = vunpack.c.l.b16 %v30
  %v175 = vunpack.c.l.b16 %v31
  %v176 = vunpack.c.l.b16 %v32
  %v177 = vunpack.c.l.b16 %v33
  %v178 = vunpack.c.l.b16 %v34
  %v179 = vunpack.c.l.b16 %v35
  %v180 = vunpack.c.l.b16 %v36
  %v181 = vunpack.c.l.b16 %v37
  %v182 = vunpack.c.l.b16 %v38
  %v183 = vunpack.c.l.b16 %v39
  %v184 = vunpack.c.l.b16 %v40
  %v185 = vunpack.c.l.b16 %v41
  %v186 = vunpack.c.l.b16 %v42
  %v187 = vunpack.c.l.b16 %v43
  %v188 = vunpack.c.l.b16 %v44
  %v189 = vunpack.c.l.b16 %v45
  %v190 = vunpack.c.l.b16 %v46
  %v191 = vunpack.c.l.b16 %v47
  %v192 = vunpack.c.l.b16 %v48
  %v193 = vunpack.c.l.b16 %v49
  %v194 = vunpack.c.l.b16 %v50
  %v195 = vunpack.c.l.b16 %v51
  %v196 = vunpack.c.l.b16 %v52
  %v197 = vunpack.c.l.b16 %v53
  %v198 = vunpack.c.l.b16 %v54
  %v199 = vunpack.c.l.b16 %v55
  %v200 = vunpack.c.l.b16 %v56
  %v201 = vunpack.c.l.b16 %v57
  %v202 = vunpack.c.l.b16 %v58
  %v203 = vunpack.c.l.b16 %v59
  %v204 = vunpack.c.l.b16 %v60
  %v205 = vunpack.c.l.b16 %v61
  %v206 = vunpack.c.l.b16 %v62
  %v207 = vunpack.c.l.b16 %v63
  %v208 = vunpack.c.l.b16 %v64
  %v209 = vunpack.c.l.b16 %v65
  %v210 = vunpack.c.l.b16 %v66
  %v211 = vunpack.c.l.b16 %v67
  %v212 = vunpack.c.l.b16 %v68
  %v213 = vunpack.c.l.b16 %v69
  %v214 = vunpack.c.l.b16 %v70
  %v215 = vunpack.c.l.b16 %v71
  %v216 = vunpack.c.l.b16 %v72
  %v217 = vunpack.c.l.b16 %v73
  %v218 = vunpack.c.l.b16 %v74
  %v219 = vunpack.c.l.b16 %v75
  %v220 = vunpack.c.l.b16 %v76
  %v221 = vunpack.c.l.b16 %v77
  %v222 = vunpack.c.l.b16 %v78
  %v223 = vunpack.c.l.b16 %v79
  %v224 = vunpack.c.l.b16 %v80
  %v225 = vunpack.c.l.b16 %v81
  %v226 = vpack.c.b16 %v163, %v162
  %v227 = vpack.c.b16 %v165, %v164
  %v228 = vpack.c.b16 %v167, %v166
  %v229 = vpack.c.b16 %v169, %v168
  %v230 = vpack.c.b16 %v171, %v170
  %v231 = vpack.c.b16 %v173, %v172
  %v232 = vpack.c.b16 %v175, %v174
  %v233 = vpack.c.b16 %v177, %v176
  %v234 = vpack.c.b16 %v179, %v178
  %v235 = vpack.c.b16 %v181, %v180
  %v236 = vpack.c.b16 %v183, %v182
  %v237 = vpack.c.b16 %v185, %v184
  %v238 = vpack.c.b16 %v187, %v186
  %v239 = vpack.c.b16 %v189, %v188
  %v240 = vpack.c.b16 %v191, %v190
  %v241 = vpack.c.b16 %v193, %v192
  %v242 = vpack.c.b16 %v195, %v194
  %v243 = vpack.c.b16 %v197, %v196
  %v244 = vpack.c.b16 %v199, %v198
  %v245 = vpack.c.b16 %v201, %v200
  %v246 = vpack.c.b16 %v203, %v202
  %v247 = vpack.c.b16 %v205, %v204
  %v248 = vpack.c.b16 %v207, %v206
  %v249 = vpack.c.b16 %v209, %v208
  %v250 = vpack.c.b16 %v211, %v210
  %v251 = vpack.c.b16 %v213, %v212
  %v252 = vpack.c.b16 %v215, %v214
  %v253 = vpack.c.b16 %v217, %v216
  %v254 = vpack.c.b16 %v219, %v218
  %v255 = vpack.c.b16 %v221, %v220
  %v256 = vpack.c.b16 %v223, %v222
  %v257 = vpack.c.b16 %v225, %v224
  %v306 = vunpack.c.l.b16 %v82
  %v307 = vunpack.c.l.b16 %v83
  %v308 = vunpack.c.l.b16 %v84
  %v309 = vunpack.c.l.b16 %v85
  %v310 = vunpack.c.l.b16 %v86
  %v311 = vunpack.c.l.b16 %v87
  %v312 = vunpack.c.l.b16 %v88
  %v313 = vunpack.c.l.b16 %v89
  %v314 = vunpack.c.l.b16 %v90
  %v315 = vunpack.c.l.b16 %v91
  %v316 = vunpack.c.l.b16 %v92
  %v317 = vunpack.c.l.b16 %v93
  %v318 = vunpack.c.l.b16 %v94
  %v319 = vunpack.c.l.b16 %v95
  %v320 = vunpack.c.l.b16 %v96
  %v321 = vunpack.c.l.b16 %v97
  %v322 = vpack.c.b16 %v307, %v306
  %v323 = vpack.c.b16 %v309, %v308
  %v324 = vpack.c.b16 %v311, %v310
  %v325 = vpack.c.b16 %v313, %v312
  %v326 = vpack.c.b16 %v315, %v314
  %v327 = vpack.c.b16 %v317, %v316
  %v328 = vpack.c.b16 %v319, %v318
  %v329 = vpack.c.b16 %v321, %v320
  %338 = vmatprep.subr.bf16.mxu0 0
  %339 = vmatpush1.bf16.msra.mxu0 %v322
  %340 = vmatprep.subr.bf16.mxu0 0
  %341 = vmatpush1.bf16.msra.mxu0 %v323
  %342 = vmatprep.subr.bf16.mxu0 0
  %343 = vmatpush1.bf16.msra.mxu0 %v324
  %344 = vmatprep.subr.bf16.mxu0 0
  %345 = vmatpush1.bf16.msra.mxu0 %v325
  %346 = vmatprep.subr.bf16.mxu0 0
  %347 = vmatpush1.bf16.msra.mxu0 %v326
  %348 = vmatprep.subr.bf16.mxu0 0
  %349 = vmatpush1.bf16.msra.mxu0 %v327
  %350 = vmatprep.subr.bf16.mxu0 0
  %351 = vmatpush1.bf16.msra.mxu0 %v328
  %352 = vmatprep.subr.bf16.mxu0 0
  %353 = vmatpush1.bf16.msra.mxu0 %v329
  %354 = vmatprep.subr.bf16.mxu0 0
  %355 = vmatpush1.bf16.msra.mxu0 0
  %356 = vmatprep.subr.bf16.mxu0 0
  %357 = vmatpush1.bf16.msra.mxu0 0
  %358 = vmatprep.subr.bf16.mxu0 0
  %359 = vmatpush1.bf16.msra.mxu0 0
  %360 = vmatprep.subr.bf16.mxu0 0
  %361 = vmatpush1.bf16.msra.mxu0 0
  %362 = vmatprep.subr.bf16.mxu0 0
  %363 = vmatpush1.bf16.msra.mxu0 0
  %364 = vmatprep.subr.bf16.mxu0 0
  %365 = vmatpush1.bf16.msra.mxu0 0
  %366 = vmatprep.subr.bf16.mxu0 0
  %367 = vmatpush1.bf16.msra.mxu0 0
  %368 = vmatprep.subr.bf16.mxu0 0
  %369 = vmatpush1.bf16.msra.mxu0 0
  %370 = vmatprep.mubr.bf16.mxu0 0
  %371 = vmatmul.mubr.bf16.gmra.mrb[0].mxu0 %v226
  %v372 = vpop.f32.mrb[0].mxu0
  %v373 = vadd.f32 0.0, %v372
  %v374 = vpop.f32.mrb[0].mxu0
  %v375 = vpop.f32.mrb[0].mxu0
  %v376 = vadd.f32 0.0, %v375
  %v377 = vpop.f32.mrb[0].mxu0
  %378 = vmatprep.mubr.bf16.mxu0 0
  %379 = vmatmul.mubr.bf16.gmra.mrb[0].mxu0 %v227
  %v380 = vpop.f32.mrb[0].mxu0
  %v381 = vadd.f32 0.0, %v380
  %v382 = vpop.f32.mrb[0].mxu0
  %v383 = vpop.f32.mrb[0].mxu0
  %v384 = vadd.f32 0.0, %v383
  %v385 = vpop.f32.mrb[0].mxu0
  %386 = vmatprep.mubr.bf16.mxu0 0
  %387 = vmatmul.mubr.bf16.gmra.mrb[0].mxu0 %v228
  %v388 = vpop.f32.mrb[0].mxu0
  %v389 = vadd.f32 0.0, %v388
  %v390 = vpop.f32.mrb[0].mxu0
  %v391 = vpop.f32.mrb[0].mxu0
  %v392 = vadd.f32 0.0, %v391
  %v393 = vpop.f32.mrb[0].mxu0
  %394 = vmatprep.mubr.bf16.mxu0 0
  %395 = vmatmul.mubr.bf16.gmra.mrb[0].mxu0 %v229
  %v396 = vpop.f32.mrb[0].mxu0
  %v397 = vadd.f32 0.0, %v396
  %v398 = vpop.f32.mrb[0].mxu0
  %v399 = vpop.f32.mrb[0].mxu0
  %v400 = vadd.f32 0.0, %v399
  %v401 = vpop.f32.mrb[0].mxu0
  %402 = vmatprep.mubr.bf16.mxu0 0
  %403 = vmatmul.mubr.bf16.gmra.mrb[0].mxu0 %v230
  %v404 = vpop.f32.mrb[0].mxu0
  %v405 = vadd.f32 0.0, %v404
  %v406 = vpop.f32.mrb[0].mxu0
  %v407 = vpop.f32.mrb[0].mxu0
  %v408 = vadd.f32 0.0, %v407
  %v409 = vpop.f32.mrb[0].mxu0
  %410 = vmatprep.mubr.bf16.mxu0 0
  %411 = vmatmul.mubr.bf16.gmra.mrb[0].mxu0 %v231
  %v412 = vpop.f32.mrb[0].mxu0
  %v413 = vadd.f32 0.0, %v412
  %v414 = vpop.f32.mrb[0].mxu0
  %v415 = vpop.f32.mrb[0].mxu0
  %v416 = vadd.f32 0.0, %v415
  %v417 = vpop.f32.mrb[0].mxu0
  %418 = vmatprep.mubr.bf16.mxu0 0
  %419 = vmatmul.mubr.bf16.gmra.mrb[0].mxu0 %v232
  %v420 = vpop.f32.mrb[0].mxu0
  %v421 = vadd.f32 0.0, %v420
  %v422 = vpop.f32.mrb[0].mxu0
  %v423 = vpop.f32.mrb[0].mxu0
  %v424 = vadd.f32 0.0, %v423
  %v425 = vpop.f32.mrb[0].mxu0
  %426 = vmatprep.mubr.bf16.mxu0 0
  %427 = vmatmul.mubr.bf16.gmra.mrb[0].mxu0 %v233
  %v428 = vpop.f32.mrb[0].mxu0
  %v429 = vadd.f32 0.0, %v428
  %v430 = vpop.f32.mrb[0].mxu0
  %v431 = vpop.f32.mrb[0].mxu0
  %v432 = vadd.f32 0.0, %v431
  %v433 = vpop.f32.mrb[0].mxu0
  %434 = vmatprep.mubr.bf16.mxu0 0
  %435 = vmatmul.mubr.bf16.gmra.mrb[0].mxu0 %v234
  %v436 = vpop.f32.mrb[0].mxu0
  %v437 = vadd.f32 0.0, %v436
  %v438 = vpop.f32.mrb[0].mxu0
  %v439 = vpop.f32.mrb[0].mxu0
  %v440 = vadd.f32 0.0, %v439
  %v441 = vpop.f32.mrb[0].mxu0
  %442 = vmatprep.mubr.bf16.mxu0 0
  %443 = vmatmul.mubr.bf16.gmra.mrb[0].mxu0 %v235
  %v444 = vpop.f32.mrb[0].mxu0
  %v445 = vadd.f32 0.0, %v444
  %v446 = vpop.f32.mrb[0].mxu0
  %v447 = vpop.f32.mrb[0].mxu0
  %v448 = vadd.f32 0.0, %v447
  %v449 = vpop.f32.mrb[0].mxu0
  %450 = vmatprep.mubr.bf16.mxu0 0
  %451 = vmatmul.mubr.bf16.gmra.mrb[0].mxu0 %v236
  %v452 = vpop.f32.mrb[0].mxu0
  %v453 = vadd.f32 0.0, %v452
  %v454 = vpop.f32.mrb[0].mxu0
  %v455 = vpop.f32.mrb[0].mxu0
  %v456 = vadd.f32 0.0, %v455
  %v457 = vpop.f32.mrb[0].mxu0
  %458 = vmatprep.mubr.bf16.mxu0 0
  %459 = vmatmul.mubr.bf16.gmra.mrb[0].mxu0 %v237
  %v460 = vpop.f32.mrb[0].mxu0
  %v461 = vadd.f32 0.0, %v460
  %v462 = vpop.f32.mrb[0].mxu0
  %v463 = vpop.f32.mrb[0].mxu0
  %v464 = vadd.f32 0.0, %v463
  %v465 = vpop.f32.mrb[0].mxu0
  %466 = vmatprep.mubr.bf16.mxu0 0
  %467 = vmatmul.mubr.bf16.gmra.mrb[0].mxu0 %v238
  %v468 = vpop.f32.mrb[0].mxu0
  %v469 = vadd.f32 0.0, %v468
  %v470 = vpop.f32.mrb[0].mxu0
  %v471 = vpop.f32.mrb[0].mxu0
  %v472 = vadd.f32 0.0, %v471
  %v473 = vpop.f32.mrb[0].mxu0
  %474 = vmatprep.mubr.bf16.mxu0 0
  %475 = vmatmul.mubr.bf16.gmra.mrb[0].mxu0 %v239
  %v476 = vpop.f32.mrb[0].mxu0
  %v477 = vadd.f32 0.0, %v476
  %v478 = vpop.f32.mrb[0].mxu0
  %v479 = vpop.f32.mrb[0].mxu0
  %v480 = vadd.f32 0.0, %v479
  %v481 = vpop.f32.mrb[0].mxu0
  %482 = vmatprep.mubr.bf16.mxu0 0
  %483 = vmatmul.mubr.bf16.gmra.mrb[0].mxu0 %v240
  %v484 = vpop.f32.mrb[0].mxu0
  %v485 = vadd.f32 0.0, %v484
  %v486 = vpop.f32.mrb[0].mxu0
  %v487 = vpop.f32.mrb[0].mxu0
  %v488 = vadd.f32 0.0, %v487
  %v489 = vpop.f32.mrb[0].mxu0
  %490 = vmatprep.mubr.bf16.mxu0 0
  %491 = vmatmul.mubr.bf16.gmra.mrb[0].mxu0 %v241
  %v492 = vpop.f32.mrb[0].mxu0
  %v493 = vadd.f32 0.0, %v492
  %v494 = vpop.f32.mrb[0].mxu0
  %v495 = vpop.f32.mrb[0].mxu0
  %v496 = vadd.f32 0.0, %v495
  %v497 = vpop.f32.mrb[0].mxu0
  %498 = vmatprep.mubr.bf16.mxu0 0
  %499 = vmatmul.mubr.bf16.gmra.mrb[0].mxu0 %v242
  %v500 = vpop.f32.mrb[0].mxu0
  %v501 = vadd.f32 0.0, %v500
  %v502 = vpop.f32.mrb[0].mxu0
  %v503 = vpop.f32.mrb[0].mxu0
  %v504 = vadd.f32 0.0, %v503
  %v505 = vpop.f32.mrb[0].mxu0
  %506 = vmatprep.mubr.bf16.mxu0 0
  %507 = vmatmul.mubr.bf16.gmra.mrb[0].mxu0 %v243
  %v508 = vpop.f32.mrb[0].mxu0
  %v509 = vadd.f32 0.0, %v508
  %v510 = vpop.f32.mrb[0].mxu0
  %v511 = vpop.f32.mrb[0].mxu0
  %v512 = vadd.f32 0.0, %v511
  %v513 = vpop.f32.mrb[0].mxu0
  %514 = vmatprep.mubr.bf16.mxu0 0
  %515 = vmatmul.mubr.bf16.gmra.mrb[0].mxu0 %v244
  %v516 = vpop.f32.mrb[0].mxu0
  %v517 = vadd.f32 0.0, %v516
  %v518 = vpop.f32.mrb[0].mxu0
  %v519 = vpop.f32.mrb[0].mxu0
  %v520 = vadd.f32 0.0, %v519
  %v521 = vpop.f32.mrb[0].mxu0
  %522 = vmatprep.mubr.bf16.mxu0 0
  %523 = vmatmul.mubr.bf16.gmra.mrb[0].mxu0 %v245
  %v524 = vpop.f32.mrb[0].mxu0
  %v525 = vadd.f32 0.0, %v524
  %v526 = vpop.f32.mrb[0].mxu0
  %v527 = vpop.f32.mrb[0].mxu0
  %v528 = vadd.f32 0.0, %v527
  %v529 = vpop.f32.mrb[0].mxu0
  %530 = vmatprep.mubr.bf16.mxu0 0
  %531 = vmatmul.mubr.bf16.gmra.mrb[0].mxu0 %v246
  %v532 = vpop.f32.mrb[0].mxu0
  %v533 = vadd.f32 0.0, %v532
  %v534 = vpop.f32.mrb[0].mxu0
  %v535 = vpop.f32.mrb[0].mxu0
  %v536 = vadd.f32 0.0, %v535
  %v537 = vpop.f32.mrb[0].mxu0
  %538 = vmatprep.mubr.bf16.mxu0 0
  %539 = vmatmul.mubr.bf16.gmra.mrb[0].mxu0 %v247
  %v540 = vpop.f32.mrb[0].mxu0
  %v541 = vadd.f32 0.0, %v540
  %v542 = vpop.f32.mrb[0].mxu0
  %v543 = vpop.f32.mrb[0].mxu0
  %v544 = vadd.f32 0.0, %v543
  %v545 = vpop.f32.mrb[0].mxu0
  %546 = vmatprep.mubr.bf16.mxu0 0
  %547 = vmatmul.mubr.bf16.gmra.mrb[0].mxu0 %v248
  %v548 = vpop.f32.mrb[0].mxu0
  %v549 = vadd.f32 0.0, %v548
  %v550 = vpop.f32.mrb[0].mxu0
  %v551 = vpop.f32.mrb[0].mxu0
  %v552 = vadd.f32 0.0, %v551
  %v553 = vpop.f32.mrb[0].mxu0
  %554 = vmatprep.mubr.bf16.mxu0 0
  %555 = vmatmul.mubr.bf16.gmra.mrb[0].mxu0 %v249
  %v556 = vpop.f32.mrb[0].mxu0
  %v557 = vadd.f32 0.0, %v556
  %v558 = vpop.f32.mrb[0].mxu0
  %v559 = vpop.f32.mrb[0].mxu0
  %v560 = vadd.f32 0.0, %v559
  %v561 = vpop.f32.mrb[0].mxu0
  %562 = vmatprep.mubr.bf16.mxu0 0
  %563 = vmatmul.mubr.bf16.gmra.mrb[0].mxu0 %v250
  %v564 = vpop.f32.mrb[0].mxu0
  %v565 = vadd.f32 0.0, %v564
  %v566 = vpop.f32.mrb[0].mxu0
  %v567 = vpop.f32.mrb[0].mxu0
  %v568 = vadd.f32 0.0, %v567
  %v569 = vpop.f32.mrb[0].mxu0
  %570 = vmatprep.mubr.bf16.mxu0 0
  %571 = vmatmul.mubr.bf16.gmra.mrb[0].mxu0 %v251
  %v572 = vpop.f32.mrb[0].mxu0
  %v573 = vadd.f32 0.0, %v572
  %v574 = vpop.f32.mrb[0].mxu0
  %v575 = vpop.f32.mrb[0].mxu0
  %v576 = vadd.f32 0.0, %v575
  %v577 = vpop.f32.mrb[0].mxu0
  %578 = vmatprep.mubr.bf16.mxu0 0
  %579 = vmatmul.mubr.bf16.gmra.mrb[0].mxu0 %v252
  %v580 = vpop.f32.mrb[0].mxu0
  %v581 = vadd.f32 0.0, %v580
  %v582 = vpop.f32.mrb[0].mxu0
  %v583 = vpop.f32.mrb[0].mxu0
  %v584 = vadd.f32 0.0, %v583
  %v585 = vpop.f32.mrb[0].mxu0
  %586 = vmatprep.mubr.bf16.mxu0 0
  %587 = vmatmul.mubr.bf16.gmra.mrb[0].mxu0 %v253
  %v588 = vpop.f32.mrb[0].mxu0
  %v589 = vadd.f32 0.0, %v588
  %v590 = vpop.f32.mrb[0].mxu0
  %v591 = vpop.f32.mrb[0].mxu0
  %v592 = vadd.f32 0.0, %v591
  %v593 = vpop.f32.mrb[0].mxu0
  %594 = vmatprep.mubr.bf16.mxu0 0
  %595 = vmatmul.mubr.bf16.gmra.mrb[0].mxu0 %v254
  %v596 = vpop.f32.mrb[0].mxu0
  %v597 = vadd.f32 0.0, %v596
  %v598 = vpop.f32.mrb[0].mxu0
  %v599 = vpop.f32.mrb[0].mxu0
  %v600 = vadd.f32 0.0, %v599
  %v601 = vpop.f32.mrb[0].mxu0
  %602 = vmatprep.mubr.bf16.mxu0 0
  %603 = vmatmul.mubr.bf16.gmra.mrb[0].mxu0 %v255
  %v604 = vpop.f32.mrb[0].mxu0
  %v605 = vadd.f32 0.0, %v604
  %v606 = vpop.f32.mrb[0].mxu0
  %v607 = vpop.f32.mrb[0].mxu0
  %v608 = vadd.f32 0.0, %v607
  %v609 = vpop.f32.mrb[0].mxu0
  %610 = vmatprep.mubr.bf16.mxu0 0
  %611 = vmatmul.mubr.bf16.gmra.mrb[0].mxu0 %v256
  %v612 = vpop.f32.mrb[0].mxu0
  %v613 = vadd.f32 0.0, %v612
  %v614 = vpop.f32.mrb[0].mxu0
  %v615 = vpop.f32.mrb[0].mxu0
  %v616 = vadd.f32 0.0, %v615
  %v617 = vpop.f32.mrb[0].mxu0
  %618 = vmatprep.mubr.bf16.mxu0 0
  %619 = vmatmul.mubr.bf16.gmra.mrb[0].mxu0 %v257
  %v620 = vpop.f32.mrb[0].mxu0
  %v621 = vadd.f32 0.0, %v620
  %v622 = vpop.f32.mrb[0].mxu0
  %v623 = vpop.f32.mrb[0].mxu0
  %v624 = vadd.f32 0.0, %v623
  %v625 = vpop.f32.mrb[0].mxu0
  %626 = vdwg.mxu0
  %vm627 = vcmask 130048
  %v628 = vsel %vm627, %v373, 0.0
  %v629 = vsel %vm627, %v376, 0.0
  %v630 = vadd.f32 %v628, %v629
  %v631 = vsel %vm627, %v381, 0.0
  %v632 = vadd.f32 %v630, %v631
  %v633 = vsel %vm627, %v384, 0.0
  %v634 = vadd.f32 %v632, %v633
  %v635 = vsel %vm627, %v389, 0.0
  %v636 = vadd.f32 %v634, %v635
  %v637 = vsel %vm627, %v392, 0.0
  %v638 = vadd.f32 %v636, %v637
  %v639 = vsel %vm627, %v397, 0.0
  %v640 = vadd.f32 %v638, %v639
  %v641 = vsel %vm627, %v400, 0.0
  %v642 = vadd.f32 %v640, %v641
  %v643 = vsel %vm627, %v405, 0.0
  %v644 = vadd.f32 %v642, %v643
  %v645 = vsel %vm627, %v408, 0.0
  %v646 = vadd.f32 %v644, %v645
  %v647 = vsel %vm627, %v413, 0.0
  %v648 = vadd.f32 %v646, %v647
  %v649 = vsel %vm627, %v416, 0.0
  %v650 = vadd.f32 %v648, %v649
  %v651 = vsel %vm627, %v421, 0.0
  %v652 = vadd.f32 %v650, %v651
  %v653 = vsel %vm627, %v424, 0.0
  %v654 = vadd.f32 %v652, %v653
  %v655 = vsel %vm627, %v429, 0.0
  %v656 = vadd.f32 %v654, %v655
  %v657 = vsel %vm627, %v432, 0.0
  %v658 = vadd.f32 %v656, %v657
  %v659 = vsel %vm627, %v437, 0.0
  %v660 = vadd.f32 %v658, %v659
  %v661 = vsel %vm627, %v440, 0.0
  %v662 = vadd.f32 %v660, %v661
  %v663 = vsel %vm627, %v445, 0.0
  %v664 = vadd.f32 %v662, %v663
  %v665 = vsel %vm627, %v448, 0.0
  %v666 = vadd.f32 %v664, %v665
  %v667 = vsel %vm627, %v453, 0.0
  %v668 = vadd.f32 %v666, %v667
  %v669 = vsel %vm627, %v456, 0.0
  %v670 = vadd.f32 %v668, %v669
  %v671 = vsel %vm627, %v461, 0.0
  %v672 = vadd.f32 %v670, %v671
  %v673 = vsel %vm627, %v464, 0.0
  %v674 = vadd.f32 %v672, %v673
  %v675 = vsel %vm627, %v469, 0.0
  %v676 = vadd.f32 %v674, %v675
  %v677 = vsel %vm627, %v472, 0.0
  %v678 = vadd.f32 %v676, %v677
  %v679 = vsel %vm627, %v477, 0.0
  %v680 = vadd.f32 %v678, %v679
  %v681 = vsel %vm627, %v480, 0.0
  %v682 = vadd.f32 %v680, %v681
  %v683 = vsel %vm627, %v485, 0.0
  %v684 = vadd.f32 %v682, %v683
  %v685 = vsel %vm627, %v488, 0.0
  %v686 = vadd.f32 %v684, %v685
  %v687 = vsel %vm627, %v493, 0.0
  %v688 = vadd.f32 %v686, %v687
  %v689 = vsel %vm627, %v496, 0.0
  %v690 = vadd.f32 %v688, %v689
  %v691 = vsel %vm627, %v501, 0.0
  %v692 = vadd.f32 %v690, %v691
  %v693 = vsel %vm627, %v504, 0.0
  %v694 = vadd.f32 %v692, %v693
  %v695 = vsel %vm627, %v509, 0.0
  %v696 = vadd.f32 %v694, %v695
  %v697 = vsel %vm627, %v512, 0.0
  %v698 = vadd.f32 %v696, %v697
  %v699 = vsel %vm627, %v517, 0.0
  %v700 = vadd.f32 %v698, %v699
  %v701 = vsel %vm627, %v520, 0.0
  %v702 = vadd.f32 %v700, %v701
  %v703 = vsel %vm627, %v525, 0.0
  %v704 = vadd.f32 %v702, %v703
  %v705 = vsel %vm627, %v528, 0.0
  %v706 = vadd.f32 %v704, %v705
  %v707 = vsel %vm627, %v533, 0.0
  %v708 = vadd.f32 %v706, %v707
  %v709 = vsel %vm627, %v536, 0.0
  %v710 = vadd.f32 %v708, %v709
  %v711 = vsel %vm627, %v541, 0.0
  %v712 = vadd.f32 %v710, %v711
  %v713 = vsel %vm627, %v544, 0.0
  %v714 = vadd.f32 %v712, %v713
  %v715 = vsel %vm627, %v549, 0.0
  %v716 = vadd.f32 %v714, %v715
  %v717 = vsel %vm627, %v552, 0.0
  %v718 = vadd.f32 %v716, %v717
  %v719 = vsel %vm627, %v557, 0.0
  %v720 = vadd.f32 %v718, %v719
  %v721 = vsel %vm627, %v560, 0.0
  %v722 = vadd.f32 %v720, %v721
  %v723 = vsel %vm627, %v565, 0.0
  %v724 = vadd.f32 %v722, %v723
  %v725 = vsel %vm627, %v568, 0.0
  %v726 = vadd.f32 %v724, %v725
  %v727 = vsel %vm627, %v573, 0.0
  %v728 = vadd.f32 %v726, %v727
  %v729 = vsel %vm627, %v576, 0.0
  %v730 = vadd.f32 %v728, %v729
  %v731 = vsel %vm627, %v581, 0.0
  %v732 = vadd.f32 %v730, %v731
  %v733 = vsel %vm627, %v584, 0.0
  %v734 = vadd.f32 %v732, %v733
  %v735 = vsel %vm627, %v589, 0.0
  %v736 = vadd.f32 %v734, %v735
  %v737 = vsel %vm627, %v592, 0.0
  %v738 = vadd.f32 %v736, %v737
  %v739 = vsel %vm627, %v597, 0.0
  %v740 = vadd.f32 %v738, %v739
  %v741 = vsel %vm627, %v600, 0.0
  %v742 = vadd.f32 %v740, %v741
  %v743 = vsel %vm627, %v605, 0.0
  %v744 = vadd.f32 %v742, %v743
  %v745 = vsel %vm627, %v608, 0.0
  %v746 = vadd.f32 %v744, %v745
  %v747 = vsel %vm627, %v613, 0.0
  %v748 = vadd.f32 %v746, %v747
  %v749 = vsel %vm627, %v616, 0.0
  %v750 = vadd.f32 %v748, %v749
  %v751 = vsel %vm627, %v621, 0.0
  %v752 = vadd.f32 %v750, %v751
  %v753 = vsel %vm627, %v624, 0.0
  %v754 = vadd.f32 %v752, %v753
  %v755 = vrot.slane %v754, 4
  %v756 = vadd.f32 %v754, %v755
  %v757 = vrot.slane %v756, 2
  %v758 = vadd.f32 %v756, %v757
  %v759 = vrot.slane %v758, 1
  %v760 = vadd.f32 %v758, %v759
  %v761 = vmul.f32 %v760, 0.001953125
  %v762 = vmul.f32 %v373, %v373
  %v763 = vmul.f32 %v376, %v376
  %v764 = vmul.f32 %v381, %v381
  %v765 = vmul.f32 %v384, %v384
  %v766 = vmul.f32 %v389, %v389
  %v767 = vmul.f32 %v392, %v392
  %v768 = vmul.f32 %v397, %v397
  %v769 = vmul.f32 %v400, %v400
  %v770 = vmul.f32 %v405, %v405
  %v771 = vmul.f32 %v408, %v408
  %v772 = vmul.f32 %v413, %v413
  %v773 = vmul.f32 %v416, %v416
  %v774 = vmul.f32 %v421, %v421
  %v775 = vmul.f32 %v424, %v424
  %v776 = vmul.f32 %v429, %v429
  %v777 = vmul.f32 %v432, %v432
  %v778 = vmul.f32 %v437, %v437
  %v779 = vmul.f32 %v440, %v440
  %v780 = vmul.f32 %v445, %v445
  %v781 = vmul.f32 %v448, %v448
  %v782 = vmul.f32 %v453, %v453
  %v783 = vmul.f32 %v456, %v456
  %v784 = vmul.f32 %v461, %v461
  %v785 = vmul.f32 %v464, %v464
  %v786 = vmul.f32 %v469, %v469
  %v787 = vmul.f32 %v472, %v472
  %v788 = vmul.f32 %v477, %v477
  %v789 = vmul.f32 %v480, %v480
  %v790 = vmul.f32 %v485, %v485
  %v791 = vmul.f32 %v488, %v488
  %v792 = vmul.f32 %v493, %v493
  %v793 = vmul.f32 %v496, %v496
  %v794 = vmul.f32 %v501, %v501
  %v795 = vmul.f32 %v504, %v504
  %v796 = vmul.f32 %v509, %v509
  %v797 = vmul.f32 %v512, %v512
  %v798 = vmul.f32 %v517, %v517
  %v799 = vmul.f32 %v520, %v520
  %v800 = vmul.f32 %v525, %v525
  %v801 = vmul.f32 %v528, %v528
  %v802 = vmul.f32 %v533, %v533
  %v803 = vmul.f32 %v536, %v536
  %v804 = vmul.f32 %v541, %v541
  %v805 = vmul.f32 %v544, %v544
  %v806 = vmul.f32 %v549, %v549
  %v807 = vmul.f32 %v552, %v552
  %v808 = vmul.f32 %v557, %v557
  %v809 = vmul.f32 %v560, %v560
  %v810 = vmul.f32 %v565, %v565
  %v811 = vmul.f32 %v568, %v568
  %v812 = vmul.f32 %v573, %v573
  %v813 = vmul.f32 %v576, %v576
  %v814 = vmul.f32 %v581, %v581
  %v815 = vmul.f32 %v584, %v584
  %v816 = vmul.f32 %v589, %v589
  %v817 = vmul.f32 %v592, %v592
  %v818 = vmul.f32 %v597, %v597
  %v819 = vmul.f32 %v600, %v600
  %v820 = vmul.f32 %v605, %v605
  %v821 = vmul.f32 %v608, %v608
  %v822 = vmul.f32 %v613, %v613
  %v823 = vmul.f32 %v616, %v616
  %v824 = vmul.f32 %v621, %v621
  %v825 = vmul.f32 %v624, %v624
  %v826 = vsel %vm627, %v762, 0.0
  %v827 = vsel %vm627, %v763, 0.0
  %v828 = vadd.f32 %v826, %v827
  %v829 = vsel %vm627, %v764, 0.0
  %v830 = vadd.f32 %v828, %v829
  %v831 = vsel %vm627, %v765, 0.0
  %v832 = vadd.f32 %v830, %v831
  %v833 = vsel %vm627, %v766, 0.0
  %v834 = vadd.f32 %v832, %v833
  %v835 = vsel %vm627, %v767, 0.0
  %v836 = vadd.f32 %v834, %v835
  %v837 = vsel %vm627, %v768, 0.0
  %v838 = vadd.f32 %v836, %v837
  %v839 = vsel %vm627, %v769, 0.0
  %v840 = vadd.f32 %v838, %v839
  %v841 = vsel %vm627, %v770, 0.0
  %v842 = vadd.f32 %v840, %v841
  %v843 = vsel %vm627, %v771, 0.0
  %v844 = vadd.f32 %v842, %v843
  %v845 = vsel %vm627, %v772, 0.0
  %v846 = vadd.f32 %v844, %v845
  %v847 = vsel %vm627, %v773, 0.0
  %v848 = vadd.f32 %v846, %v847
  %v849 = vsel %vm627, %v774, 0.0
  %v850 = vadd.f32 %v848, %v849
  %v851 = vsel %vm627, %v775, 0.0
  %v852 = vadd.f32 %v850, %v851
  %v853 = vsel %vm627, %v776, 0.0
  %v854 = vadd.f32 %v852, %v853
  %v855 = vsel %vm627, %v777, 0.0
  %v856 = vadd.f32 %v854, %v855
  %v857 = vsel %vm627, %v778, 0.0
  %v858 = vadd.f32 %v856, %v857
  %v859 = vsel %vm627, %v779, 0.0
  %v860 = vadd.f32 %v858, %v859
  %v861 = vsel %vm627, %v780, 0.0
  %v862 = vadd.f32 %v860, %v861
  %v863 = vsel %vm627, %v781, 0.0
  %v864 = vadd.f32 %v862, %v863
  %v865 = vsel %vm627, %v782, 0.0
  %v866 = vadd.f32 %v864, %v865
  %v867 = vsel %vm627, %v783, 0.0
  %v868 = vadd.f32 %v866, %v867
  %v869 = vsel %vm627, %v784, 0.0
  %v870 = vadd.f32 %v868, %v869
  %v871 = vsel %vm627, %v785, 0.0
  %v872 = vadd.f32 %v870, %v871
  %v873 = vsel %vm627, %v786, 0.0
  %v874 = vadd.f32 %v872, %v873
  %v875 = vsel %vm627, %v787, 0.0
  %v876 = vadd.f32 %v874, %v875
  %v877 = vsel %vm627, %v788, 0.0
  %v878 = vadd.f32 %v876, %v877
  %v879 = vsel %vm627, %v789, 0.0
  %v880 = vadd.f32 %v878, %v879
  %v881 = vsel %vm627, %v790, 0.0
  %v882 = vadd.f32 %v880, %v881
  %v883 = vsel %vm627, %v791, 0.0
  %v884 = vadd.f32 %v882, %v883
  %v885 = vsel %vm627, %v792, 0.0
  %v886 = vadd.f32 %v884, %v885
  %v887 = vsel %vm627, %v793, 0.0
  %v888 = vadd.f32 %v886, %v887
  %v889 = vsel %vm627, %v794, 0.0
  %v890 = vadd.f32 %v888, %v889
  %v891 = vsel %vm627, %v795, 0.0
  %v892 = vadd.f32 %v890, %v891
  %v893 = vsel %vm627, %v796, 0.0
  %v894 = vadd.f32 %v892, %v893
  %v895 = vsel %vm627, %v797, 0.0
  %v896 = vadd.f32 %v894, %v895
  %v897 = vsel %vm627, %v798, 0.0
  %v898 = vadd.f32 %v896, %v897
  %v899 = vsel %vm627, %v799, 0.0
  %v900 = vadd.f32 %v898, %v899
  %v901 = vsel %vm627, %v800, 0.0
  %v902 = vadd.f32 %v900, %v901
  %v903 = vsel %vm627, %v801, 0.0
  %v904 = vadd.f32 %v902, %v903
  %v905 = vsel %vm627, %v802, 0.0
  %v906 = vadd.f32 %v904, %v905
  %v907 = vsel %vm627, %v803, 0.0
  %v908 = vadd.f32 %v906, %v907
  %v909 = vsel %vm627, %v804, 0.0
  %v910 = vadd.f32 %v908, %v909
  %v911 = vsel %vm627, %v805, 0.0
  %v912 = vadd.f32 %v910, %v911
  %v913 = vsel %vm627, %v806, 0.0
  %v914 = vadd.f32 %v912, %v913
  %v915 = vsel %vm627, %v807, 0.0
  %v916 = vadd.f32 %v914, %v915
  %v917 = vsel %vm627, %v808, 0.0
  %v918 = vadd.f32 %v916, %v917
  %v919 = vsel %vm627, %v809, 0.0
  %v920 = vadd.f32 %v918, %v919
  %v921 = vsel %vm627, %v810, 0.0
  %v922 = vadd.f32 %v920, %v921
  %v923 = vsel %vm627, %v811, 0.0
  %v924 = vadd.f32 %v922, %v923
  %v925 = vsel %vm627, %v812, 0.0
  %v926 = vadd.f32 %v924, %v925
  %v927 = vsel %vm627, %v813, 0.0
  %v928 = vadd.f32 %v926, %v927
  %v929 = vsel %vm627, %v814, 0.0
  %v930 = vadd.f32 %v928, %v929
  %v931 = vsel %vm627, %v815, 0.0
  %v932 = vadd.f32 %v930, %v931
  %v933 = vsel %vm627, %v816, 0.0
  %v934 = vadd.f32 %v932, %v933
  %v935 = vsel %vm627, %v817, 0.0
  %v936 = vadd.f32 %v934, %v935
  %v937 = vsel %vm627, %v818, 0.0
  %v938 = vadd.f32 %v936, %v937
  %v939 = vsel %vm627, %v819, 0.0
  %v940 = vadd.f32 %v938, %v939
  %v941 = vsel %vm627, %v820, 0.0
  %v942 = vadd.f32 %v940, %v941
  %v943 = vsel %vm627, %v821, 0.0
  %v944 = vadd.f32 %v942, %v943
  %v945 = vsel %vm627, %v822, 0.0
  %v946 = vadd.f32 %v944, %v945
  %v947 = vsel %vm627, %v823, 0.0
  %v948 = vadd.f32 %v946, %v947
  %v949 = vsel %vm627, %v824, 0.0
  %v950 = vadd.f32 %v948, %v949
  %v951 = vsel %vm627, %v825, 0.0
  %v952 = vadd.f32 %v950, %v951
  %v953 = vrot.slane %v952, 4
  %v954 = vadd.f32 %v952, %v953
  %v955 = vrot.slane %v954, 2
  %v956 = vadd.f32 %v954, %v955
  %v957 = vrot.slane %v956, 1
  %v958 = vadd.f32 %v956, %v957
  %v959 = vmul.f32 %v958, 0.001953125
  %v960 = vmul.f32 %v761, %v761
  %v961 = vsub.f32 %v959, %v960
  %v962 = vmax.f32 %v961, 0.0
  %v963 = vld [vmem:[%s2] sm:$0x1]
  %v964 = vadd.f32 %v962, 1e-05
  %v965 = vrsqrt.pop %v964
  %v966 = vmul.f32 %v963, %v965
  %v967 = vld [vmem:[%s3] sm:$0x1]
  %v968 = vmul.f32 %v761, %v966
  %v969 = vsub.f32 %v967, %v968
  %v971 = vlaneseq
  %v972 = vshrl.u32 %v971, 7
  %v973 = vsub.s32 0, %v972
  %v974 = vrot.slane %v966, %v973
  %v976 = vmul.f32 %v373, %v974
  %v977 = vmul.f32 %v376, %v974
  %v978 = vmul.f32 %v381, %v974
  %v979 = vmul.f32 %v384, %v974
  %v980 = vmul.f32 %v389, %v974
  %v981 = vmul.f32 %v392, %v974
  %v982 = vmul.f32 %v397, %v974
  %v983 = vmul.f32 %v400, %v974
  %v984 = vmul.f32 %v405, %v974
  %v985 = vmul.f32 %v408, %v974
  %v986 = vmul.f32 %v413, %v974
  %v987 = vmul.f32 %v416, %v974
  %v988 = vmul.f32 %v421, %v974
  %v989 = vmul.f32 %v424, %v974
  %v990 = vmul.f32 %v429, %v974
  %v991 = vmul.f32 %v432, %v974
  %v992 = vmul.f32 %v437, %v974
  %v993 = vmul.f32 %v440, %v974
  %v994 = vmul.f32 %v445, %v974
  %v995 = vmul.f32 %v448, %v974
  %v996 = vmul.f32 %v453, %v974
  %v997 = vmul.f32 %v456, %v974
  %v998 = vmul.f32 %v461, %v974
  %v999 = vmul.f32 %v464, %v974
  %v1000 = vmul.f32 %v469, %v974
  %v1001 = vmul.f32 %v472, %v974
  %v1002 = vmul.f32 %v477, %v974
  %v1003 = vmul.f32 %v480, %v974
  %v1004 = vmul.f32 %v485, %v974
  %v1005 = vmul.f32 %v488, %v974
  %v1006 = vmul.f32 %v493, %v974
  %v1007 = vmul.f32 %v496, %v974
  %v1008 = vmul.f32 %v501, %v974
  %v1009 = vmul.f32 %v504, %v974
  %v1010 = vmul.f32 %v509, %v974
  %v1011 = vmul.f32 %v512, %v974
  %v1012 = vmul.f32 %v517, %v974
  %v1013 = vmul.f32 %v520, %v974
  %v1014 = vmul.f32 %v525, %v974
  %v1015 = vmul.f32 %v528, %v974
  %v1016 = vmul.f32 %v533, %v974
  %v1017 = vmul.f32 %v536, %v974
  %v1018 = vmul.f32 %v541, %v974
  %v1019 = vmul.f32 %v544, %v974
  %v1020 = vmul.f32 %v549, %v974
  %v1021 = vmul.f32 %v552, %v974
  %v1022 = vmul.f32 %v557, %v974
  %v1023 = vmul.f32 %v560, %v974
  %v1024 = vmul.f32 %v565, %v974
  %v1025 = vmul.f32 %v568, %v974
  %v1026 = vmul.f32 %v573, %v974
  %v1027 = vmul.f32 %v576, %v974
  %v1028 = vmul.f32 %v581, %v974
  %v1029 = vmul.f32 %v584, %v974
  %v1030 = vmul.f32 %v589, %v974
  %v1031 = vmul.f32 %v592, %v974
  %v1032 = vmul.f32 %v597, %v974
  %v1033 = vmul.f32 %v600, %v974
  %v1034 = vmul.f32 %v605, %v974
  %v1035 = vmul.f32 %v608, %v974
  %v1036 = vmul.f32 %v613, %v974
  %v1037 = vmul.f32 %v616, %v974
  %v1038 = vmul.f32 %v621, %v974
  %v1039 = vmul.f32 %v624, %v974
  %v1041 = vlaneseq
  %v1042 = vshrl.u32 %v1041, 7
  %v1043 = vsub.s32 0, %v1042
  %v1044 = vrot.slane %v969, %v1043
  %v1046 = vadd.f32 %v976, %v1044
  %v1047 = vadd.f32 %v977, %v1044
  %v1048 = vadd.f32 %v978, %v1044
  %v1049 = vadd.f32 %v979, %v1044
  %v1050 = vadd.f32 %v980, %v1044
  %v1051 = vadd.f32 %v981, %v1044
  %v1052 = vadd.f32 %v982, %v1044
  %v1053 = vadd.f32 %v983, %v1044
  %v1054 = vadd.f32 %v984, %v1044
  %v1055 = vadd.f32 %v985, %v1044
  %v1056 = vadd.f32 %v986, %v1044
  %v1057 = vadd.f32 %v987, %v1044
  %v1058 = vadd.f32 %v988, %v1044
  %v1059 = vadd.f32 %v989, %v1044
  %v1060 = vadd.f32 %v990, %v1044
  %v1061 = vadd.f32 %v991, %v1044
  %v1062 = vadd.f32 %v992, %v1044
  %v1063 = vadd.f32 %v993, %v1044
  %v1064 = vadd.f32 %v994, %v1044
  %v1065 = vadd.f32 %v995, %v1044
  %v1066 = vadd.f32 %v996, %v1044
  %v1067 = vadd.f32 %v997, %v1044
  %v1068 = vadd.f32 %v998, %v1044
  %v1069 = vadd.f32 %v999, %v1044
  %v1070 = vadd.f32 %v1000, %v1044
  %v1071 = vadd.f32 %v1001, %v1044
  %v1072 = vadd.f32 %v1002, %v1044
  %v1073 = vadd.f32 %v1003, %v1044
  %v1074 = vadd.f32 %v1004, %v1044
  %v1075 = vadd.f32 %v1005, %v1044
  %v1076 = vadd.f32 %v1006, %v1044
  %v1077 = vadd.f32 %v1007, %v1044
  %v1078 = vadd.f32 %v1008, %v1044
  %v1079 = vadd.f32 %v1009, %v1044
  %v1080 = vadd.f32 %v1010, %v1044
  %v1081 = vadd.f32 %v1011, %v1044
  %v1082 = vadd.f32 %v1012, %v1044
  %v1083 = vadd.f32 %v1013, %v1044
  %v1084 = vadd.f32 %v1014, %v1044
  %v1085 = vadd.f32 %v1015, %v1044
  %v1086 = vadd.f32 %v1016, %v1044
  %v1087 = vadd.f32 %v1017, %v1044
  %v1088 = vadd.f32 %v1018, %v1044
  %v1089 = vadd.f32 %v1019, %v1044
  %v1090 = vadd.f32 %v1020, %v1044
  %v1091 = vadd.f32 %v1021, %v1044
  %v1092 = vadd.f32 %v1022, %v1044
  %v1093 = vadd.f32 %v1023, %v1044
  %v1094 = vadd.f32 %v1024, %v1044
  %v1095 = vadd.f32 %v1025, %v1044
  %v1096 = vadd.f32 %v1026, %v1044
  %v1097 = vadd.f32 %v1027, %v1044
  %v1098 = vadd.f32 %v1028, %v1044
  %v1099 = vadd.f32 %v1029, %v1044
  %v1100 = vadd.f32 %v1030, %v1044
  %v1101 = vadd.f32 %v1031, %v1044
  %v1102 = vadd.f32 %v1032, %v1044
  %v1103 = vadd.f32 %v1033, %v1044
  %v1104 = vadd.f32 %v1034, %v1044
  %v1105 = vadd.f32 %v1035, %v1044
  %v1106 = vadd.f32 %v1036, %v1044
  %v1107 = vadd.f32 %v1037, %v1044
  %v1108 = vadd.f32 %v1038, %v1044
  %v1109 = vadd.f32 %v1039, %v1044
  %v1110 = vmul.f32 %v1046, 0.2
  %v1111 = vmul.f32 %v1047, 0.2
  %v1112 = vmul.f32 %v1048, 0.2
  %v1113 = vmul.f32 %v1049, 0.2
  %v1114 = vmul.f32 %v1050, 0.2
  %v1115 = vmul.f32 %v1051, 0.2
  %v1116 = vmul.f32 %v1052, 0.2
  %v1117 = vmul.f32 %v1053, 0.2
  %v1118 = vmul.f32 %v1054, 0.2
  %v1119 = vmul.f32 %v1055, 0.2
  %v1120 = vmul.f32 %v1056, 0.2
  %v1121 = vmul.f32 %v1057, 0.2
  %v1122 = vmul.f32 %v1058, 0.2
  %v1123 = vmul.f32 %v1059, 0.2
  %v1124 = vmul.f32 %v1060, 0.2
  %v1125 = vmul.f32 %v1061, 0.2
  %v1126 = vmul.f32 %v1062, 0.2
  %v1127 = vmul.f32 %v1063, 0.2
  %v1128 = vmul.f32 %v1064, 0.2
  %v1129 = vmul.f32 %v1065, 0.2
  %v1130 = vmul.f32 %v1066, 0.2
  %v1131 = vmul.f32 %v1067, 0.2
  %v1132 = vmul.f32 %v1068, 0.2
  %v1133 = vmul.f32 %v1069, 0.2
  %v1134 = vmul.f32 %v1070, 0.2
  %v1135 = vmul.f32 %v1071, 0.2
  %v1136 = vmul.f32 %v1072, 0.2
  %v1137 = vmul.f32 %v1073, 0.2
  %v1138 = vmul.f32 %v1074, 0.2
  %v1139 = vmul.f32 %v1075, 0.2
  %v1140 = vmul.f32 %v1076, 0.2
  %v1141 = vmul.f32 %v1077, 0.2
  %v1142 = vmul.f32 %v1078, 0.2
  %v1143 = vmul.f32 %v1079, 0.2
  %v1144 = vmul.f32 %v1080, 0.2
  %v1145 = vmul.f32 %v1081, 0.2
  %v1146 = vmul.f32 %v1082, 0.2
  %v1147 = vmul.f32 %v1083, 0.2
  %v1148 = vmul.f32 %v1084, 0.2
  %v1149 = vmul.f32 %v1085, 0.2
  %v1150 = vmul.f32 %v1086, 0.2
  %v1151 = vmul.f32 %v1087, 0.2
  %v1152 = vmul.f32 %v1088, 0.2
  %v1153 = vmul.f32 %v1089, 0.2
  %v1154 = vmul.f32 %v1090, 0.2
  %v1155 = vmul.f32 %v1091, 0.2
  %v1156 = vmul.f32 %v1092, 0.2
  %v1157 = vmul.f32 %v1093, 0.2
  %v1158 = vmul.f32 %v1094, 0.2
  %v1159 = vmul.f32 %v1095, 0.2
  %v1160 = vmul.f32 %v1096, 0.2
  %v1161 = vmul.f32 %v1097, 0.2
  %v1162 = vmul.f32 %v1098, 0.2
  %v1163 = vmul.f32 %v1099, 0.2
  %v1164 = vmul.f32 %v1100, 0.2
  %v1165 = vmul.f32 %v1101, 0.2
  %v1166 = vmul.f32 %v1102, 0.2
  %v1167 = vmul.f32 %v1103, 0.2
  %v1168 = vmul.f32 %v1104, 0.2
  %v1169 = vmul.f32 %v1105, 0.2
  %v1170 = vmul.f32 %v1106, 0.2
  %v1171 = vmul.f32 %v1107, 0.2
  %v1172 = vmul.f32 %v1108, 0.2
  %v1173 = vmul.f32 %v1109, 0.2
  %v1174 = vmax.f32 %v1046, %v1110
  %v1175 = vmax.f32 %v1047, %v1111
  %v1176 = vmax.f32 %v1048, %v1112
  %v1177 = vmax.f32 %v1049, %v1113
  %v1178 = vmax.f32 %v1050, %v1114
  %v1179 = vmax.f32 %v1051, %v1115
  %v1180 = vmax.f32 %v1052, %v1116
  %v1181 = vmax.f32 %v1053, %v1117
  %v1182 = vmax.f32 %v1054, %v1118
  %v1183 = vmax.f32 %v1055, %v1119
  %v1184 = vmax.f32 %v1056, %v1120
  %v1185 = vmax.f32 %v1057, %v1121
  %v1186 = vmax.f32 %v1058, %v1122
  %v1187 = vmax.f32 %v1059, %v1123
  %v1188 = vmax.f32 %v1060, %v1124
  %v1189 = vmax.f32 %v1061, %v1125
  %v1190 = vmax.f32 %v1062, %v1126
  %v1191 = vmax.f32 %v1063, %v1127
  %v1192 = vmax.f32 %v1064, %v1128
  %v1193 = vmax.f32 %v1065, %v1129
  %v1194 = vmax.f32 %v1066, %v1130
  %v1195 = vmax.f32 %v1067, %v1131
  %v1196 = vmax.f32 %v1068, %v1132
  %v1197 = vmax.f32 %v1069, %v1133
  %v1198 = vmax.f32 %v1070, %v1134
  %v1199 = vmax.f32 %v1071, %v1135
  %v1200 = vmax.f32 %v1072, %v1136
  %v1201 = vmax.f32 %v1073, %v1137
  %v1202 = vmax.f32 %v1074, %v1138
  %v1203 = vmax.f32 %v1075, %v1139
  %v1204 = vmax.f32 %v1076, %v1140
  %v1205 = vmax.f32 %v1077, %v1141
  %v1206 = vmax.f32 %v1078, %v1142
  %v1207 = vmax.f32 %v1079, %v1143
  %v1208 = vmax.f32 %v1080, %v1144
  %v1209 = vmax.f32 %v1081, %v1145
  %v1210 = vmax.f32 %v1082, %v1146
  %v1211 = vmax.f32 %v1083, %v1147
  %v1212 = vmax.f32 %v1084, %v1148
  %v1213 = vmax.f32 %v1085, %v1149
  %v1214 = vmax.f32 %v1086, %v1150
  %v1215 = vmax.f32 %v1087, %v1151
  %v1216 = vmax.f32 %v1088, %v1152
  %v1217 = vmax.f32 %v1089, %v1153
  %v1218 = vmax.f32 %v1090, %v1154
  %v1219 = vmax.f32 %v1091, %v1155
  %v1220 = vmax.f32 %v1092, %v1156
  %v1221 = vmax.f32 %v1093, %v1157
  %v1222 = vmax.f32 %v1094, %v1158
  %v1223 = vmax.f32 %v1095, %v1159
  %v1224 = vmax.f32 %v1096, %v1160
  %v1225 = vmax.f32 %v1097, %v1161
  %v1226 = vmax.f32 %v1098, %v1162
  %v1227 = vmax.f32 %v1099, %v1163
  %v1228 = vmax.f32 %v1100, %v1164
  %v1229 = vmax.f32 %v1101, %v1165
  %v1230 = vmax.f32 %v1102, %v1166
  %v1231 = vmax.f32 %v1103, %v1167
  %v1232 = vmax.f32 %v1104, %v1168
  %v1233 = vmax.f32 %v1105, %v1169
  %v1234 = vmax.f32 %v1106, %v1170
  %v1235 = vmax.f32 %v1107, %v1171
  %v1236 = vmax.f32 %v1108, %v1172
  %v1237 = vmax.f32 %v1109, %v1173
  %v1238 = vpack.c.bf16 %v1175, %v1174
  %v1239 = vpack.c.bf16 %v1177, %v1176
  %v1240 = vpack.c.bf16 %v1179, %v1178
  %v1241 = vpack.c.bf16 %v1181, %v1180
  %v1242 = vpack.c.bf16 %v1183, %v1182
  %v1243 = vpack.c.bf16 %v1185, %v1184
  %v1244 = vpack.c.bf16 %v1187, %v1186
  %v1245 = vpack.c.bf16 %v1189, %v1188
  %v1246 = vpack.c.bf16 %v1191, %v1190
  %v1247 = vpack.c.bf16 %v1193, %v1192
  %v1248 = vpack.c.bf16 %v1195, %v1194
  %v1249 = vpack.c.bf16 %v1197, %v1196
  %v1250 = vpack.c.bf16 %v1199, %v1198
  %v1251 = vpack.c.bf16 %v1201, %v1200
  %v1252 = vpack.c.bf16 %v1203, %v1202
  %v1253 = vpack.c.bf16 %v1205, %v1204
  %v1254 = vpack.c.bf16 %v1207, %v1206
  %v1255 = vpack.c.bf16 %v1209, %v1208
  %v1256 = vpack.c.bf16 %v1211, %v1210
  %v1257 = vpack.c.bf16 %v1213, %v1212
  %v1258 = vpack.c.bf16 %v1215, %v1214
  %v1259 = vpack.c.bf16 %v1217, %v1216
  %v1260 = vpack.c.bf16 %v1219, %v1218
  %v1261 = vpack.c.bf16 %v1221, %v1220
  %v1262 = vpack.c.bf16 %v1223, %v1222
  %v1263 = vpack.c.bf16 %v1225, %v1224
  %v1264 = vpack.c.bf16 %v1227, %v1226
  %v1265 = vpack.c.bf16 %v1229, %v1228
  %v1266 = vpack.c.bf16 %v1231, %v1230
  %v1267 = vpack.c.bf16 %v1233, %v1232
  %v1268 = vpack.c.bf16 %v1235, %v1234
  %v1269 = vpack.c.bf16 %v1237, %v1236
  %v1302 = vunpack.c.l.b16 %v1238
  %v1303 = vunpack.c.h.b16 %v1238
  %v1304 = vunpack.c.l.b16 %v1239
  %v1305 = vunpack.c.h.b16 %v1239
  %v1306 = vunpack.c.l.b16 %v1240
  %v1307 = vunpack.c.h.b16 %v1240
  %v1308 = vunpack.c.l.b16 %v1241
  %v1309 = vunpack.c.h.b16 %v1241
  %v1310 = vunpack.c.l.b16 %v1242
  %v1311 = vunpack.c.h.b16 %v1242
  %v1312 = vunpack.c.l.b16 %v1243
  %v1313 = vunpack.c.h.b16 %v1243
  %v1314 = vunpack.c.l.b16 %v1244
  %v1315 = vunpack.c.h.b16 %v1244
  %v1316 = vunpack.c.l.b16 %v1245
  %v1317 = vunpack.c.h.b16 %v1245
  %v1318 = vunpack.c.l.b16 %v1246
  %v1319 = vunpack.c.h.b16 %v1246
  %v1320 = vunpack.c.l.b16 %v1247
  %v1321 = vunpack.c.h.b16 %v1247
  %v1322 = vunpack.c.l.b16 %v1248
  %v1323 = vunpack.c.h.b16 %v1248
  %v1324 = vunpack.c.l.b16 %v1249
  %v1325 = vunpack.c.h.b16 %v1249
  %v1326 = vunpack.c.l.b16 %v1250
  %v1327 = vunpack.c.h.b16 %v1250
  %v1328 = vunpack.c.l.b16 %v1251
  %v1329 = vunpack.c.h.b16 %v1251
  %v1330 = vunpack.c.l.b16 %v1252
  %v1331 = vunpack.c.h.b16 %v1252
  %v1332 = vunpack.c.l.b16 %v1253
  %v1333 = vunpack.c.h.b16 %v1253
  %v1334 = vunpack.c.l.b16 %v1254
  %v1335 = vunpack.c.h.b16 %v1254
  %v1336 = vunpack.c.l.b16 %v1255
  %v1337 = vunpack.c.h.b16 %v1255
  %v1338 = vunpack.c.l.b16 %v1256
  %v1339 = vunpack.c.h.b16 %v1256
  %v1340 = vunpack.c.l.b16 %v1257
  %v1341 = vunpack.c.h.b16 %v1257
  %v1342 = vunpack.c.l.b16 %v1258
  %v1343 = vunpack.c.h.b16 %v1258
  %v1344 = vunpack.c.l.b16 %v1259
  %v1345 = vunpack.c.h.b16 %v1259
  %v1346 = vunpack.c.l.b16 %v1260
  %v1347 = vunpack.c.h.b16 %v1260
  %v1348 = vunpack.c.l.b16 %v1261
  %v1349 = vunpack.c.h.b16 %v1261
  %v1350 = vunpack.c.l.b16 %v1262
  %v1351 = vunpack.c.h.b16 %v1262
  %v1352 = vunpack.c.l.b16 %v1263
  %v1353 = vunpack.c.h.b16 %v1263
  %v1354 = vunpack.c.l.b16 %v1264
  %v1355 = vunpack.c.h.b16 %v1264
  %v1356 = vunpack.c.l.b16 %v1265
  %v1357 = vunpack.c.h.b16 %v1265
  %v1358 = vunpack.c.l.b16 %v1266
  %v1359 = vunpack.c.h.b16 %v1266
  %v1360 = vunpack.c.l.b16 %v1267
  %v1361 = vunpack.c.h.b16 %v1267
  %v1362 = vunpack.c.l.b16 %v1268
  %v1363 = vunpack.c.h.b16 %v1268
  %v1364 = vunpack.c.l.b16 %v1269
  %v1365 = vunpack.c.h.b16 %v1269
  %v1366 = vpack.c.b16 %v1302, %v1302
  %v1367 = vpack.c.b16 %v1303, %v1303
  %v1368 = vpack.c.b16 %v1304, %v1304
  %v1369 = vpack.c.b16 %v1305, %v1305
  %v1370 = vpack.c.b16 %v1306, %v1306
  %v1371 = vpack.c.b16 %v1307, %v1307
  %v1372 = vpack.c.b16 %v1308, %v1308
  %v1373 = vpack.c.b16 %v1309, %v1309
  %v1374 = vpack.c.b16 %v1310, %v1310
  %v1375 = vpack.c.b16 %v1311, %v1311
  %v1376 = vpack.c.b16 %v1312, %v1312
  %v1377 = vpack.c.b16 %v1313, %v1313
  %v1378 = vpack.c.b16 %v1314, %v1314
  %v1379 = vpack.c.b16 %v1315, %v1315
  %v1380 = vpack.c.b16 %v1316, %v1316
  %v1381 = vpack.c.b16 %v1317, %v1317
  %v1382 = vpack.c.b16 %v1318, %v1318
  %v1383 = vpack.c.b16 %v1319, %v1319
  %v1384 = vpack.c.b16 %v1320, %v1320
  %v1385 = vpack.c.b16 %v1321, %v1321
  %v1386 = vpack.c.b16 %v1322, %v1322
  %v1387 = vpack.c.b16 %v1323, %v1323
  %v1388 = vpack.c.b16 %v1324, %v1324
  %v1389 = vpack.c.b16 %v1325, %v1325
  %v1390 = vpack.c.b16 %v1326, %v1326
  %v1391 = vpack.c.b16 %v1327, %v1327
  %v1392 = vpack.c.b16 %v1328, %v1328
  %v1393 = vpack.c.b16 %v1329, %v1329
  %v1394 = vpack.c.b16 %v1330, %v1330
  %v1395 = vpack.c.b16 %v1331, %v1331
  %v1396 = vpack.c.b16 %v1332, %v1332
  %v1397 = vpack.c.b16 %v1333, %v1333
  %v1398 = vpack.c.b16 %v1334, %v1334
  %v1399 = vpack.c.b16 %v1335, %v1335
  %v1400 = vpack.c.b16 %v1336, %v1336
  %v1401 = vpack.c.b16 %v1337, %v1337
  %v1402 = vpack.c.b16 %v1338, %v1338
  %v1403 = vpack.c.b16 %v1339, %v1339
  %v1404 = vpack.c.b16 %v1340, %v1340
  %v1405 = vpack.c.b16 %v1341, %v1341
  %v1406 = vpack.c.b16 %v1342, %v1342
  %v1407 = vpack.c.b16 %v1343, %v1343
  %v1408 = vpack.c.b16 %v1344, %v1344
  %v1409 = vpack.c.b16 %v1345, %v1345
  %v1410 = vpack.c.b16 %v1346, %v1346
  %v1411 = vpack.c.b16 %v1347, %v1347
  %v1412 = vpack.c.b16 %v1348, %v1348
  %v1413 = vpack.c.b16 %v1349, %v1349
  %v1414 = vpack.c.b16 %v1350, %v1350
  %v1415 = vpack.c.b16 %v1351, %v1351
  %v1416 = vpack.c.b16 %v1352, %v1352
  %v1417 = vpack.c.b16 %v1353, %v1353
  %v1418 = vpack.c.b16 %v1354, %v1354
  %v1419 = vpack.c.b16 %v1355, %v1355
  %v1420 = vpack.c.b16 %v1356, %v1356
  %v1421 = vpack.c.b16 %v1357, %v1357
  %v1422 = vpack.c.b16 %v1358, %v1358
  %v1423 = vpack.c.b16 %v1359, %v1359
  %v1424 = vpack.c.b16 %v1360, %v1360
  %v1425 = vpack.c.b16 %v1361, %v1361
  %v1426 = vpack.c.b16 %v1362, %v1362
  %v1427 = vpack.c.b16 %v1363, %v1363
  %v1428 = vpack.c.b16 %v1364, %v1364
  %v1429 = vpack.c.b16 %v1365, %v1365
  %vm1494 = vcmask 125952
  %1495 = vst.msk [vmem:[%s4] sm:$0xf] %vm1494, %v1366
  %1496 = vst.msk [vmem:[%s4 + $0x4] sm:$0xf] %vm1494, %v1367
  %1497 = vst.msk [vmem:[%s4 + $0x8] sm:$0xf] %vm1494, %v1368
  %1498 = vst.msk [vmem:[%s4 + $0xc] sm:$0xf] %vm1494, %v1369
  %1499 = vst.msk [vmem:[%s4 + $0x10] sm:$0xf] %vm1494, %v1370
  %1500 = vst.msk [vmem:[%s4 + $0x14] sm:$0xf] %vm1494, %v1371
  %1501 = vst.msk [vmem:[%s4 + $0x18] sm:$0xf] %vm1494, %v1372
  %1502 = vst.msk [vmem:[%s4 + $0x1c] sm:$0xf] %vm1494, %v1373
  %1503 = vst.msk [vmem:[%s4 + $0x20] sm:$0xf] %vm1494, %v1374
  %1504 = vst.msk [vmem:[%s4 + $0x24] sm:$0xf] %vm1494, %v1375
  %1505 = vst.msk [vmem:[%s4 + $0x28] sm:$0xf] %vm1494, %v1376
  %1506 = vst.msk [vmem:[%s4 + $0x2c] sm:$0xf] %vm1494, %v1377
  %1507 = vst.msk [vmem:[%s4 + $0x30] sm:$0xf] %vm1494, %v1378
  %1508 = vst.msk [vmem:[%s4 + $0x34] sm:$0xf] %vm1494, %v1379
  %1509 = vst.msk [vmem:[%s4 + $0x38] sm:$0xf] %vm1494, %v1380
  %1510 = vst.msk [vmem:[%s4 + $0x3c] sm:$0xf] %vm1494, %v1381
  %1511 = vst.msk [vmem:[%s4 + $0x40] sm:$0xf] %vm1494, %v1382
  %1512 = vst.msk [vmem:[%s4 + $0x44] sm:$0xf] %vm1494, %v1383
  %1513 = vst.msk [vmem:[%s4 + $0x48] sm:$0xf] %vm1494, %v1384
  %1514 = vst.msk [vmem:[%s4 + $0x4c] sm:$0xf] %vm1494, %v1385
  %1515 = vst.msk [vmem:[%s4 + $0x50] sm:$0xf] %vm1494, %v1386
  %1516 = vst.msk [vmem:[%s4 + $0x54] sm:$0xf] %vm1494, %v1387
  %1517 = vst.msk [vmem:[%s4 + $0x58] sm:$0xf] %vm1494, %v1388
  %1518 = vst.msk [vmem:[%s4 + $0x5c] sm:$0xf] %vm1494, %v1389
  %1519 = vst.msk [vmem:[%s4 + $0x60] sm:$0xf] %vm1494, %v1390
  %1520 = vst.msk [vmem:[%s4 + $0x64] sm:$0xf] %vm1494, %v1391
  %1521 = vst.msk [vmem:[%s4 + $0x68] sm:$0xf] %vm1494, %v1392
  %1522 = vst.msk [vmem:[%s4 + $0x6c] sm:$0xf] %vm1494, %v1393
  %1523 = vst.msk [vmem:[%s4 + $0x70] sm:$0xf] %vm1494, %v1394
  %1524 = vst.msk [vmem:[%s4 + $0x74] sm:$0xf] %vm1494, %v1395
  %1525 = vst.msk [vmem:[%s4 + $0x78] sm:$0xf] %vm1494, %v1396
  %1526 = vst.msk [vmem:[%s4 + $0x7c] sm:$0xf] %vm1494, %v1397
  %1527 = vst.msk [vmem:[%s4 + $0x80] sm:$0xf] %vm1494, %v1398
  %1528 = vst.msk [vmem:[%s4 + $0x84] sm:$0xf] %vm1494, %v1399
  %1529 = vst.msk [vmem:[%s4 + $0x88] sm:$0xf] %vm1494, %v1400
  %1530 = vst.msk [vmem:[%s4 + $0x8c] sm:$0xf] %vm1494, %v1401
  %1531 = vst.msk [vmem:[%s4 + $0x90] sm:$0xf] %vm1494, %v1402
  %1532 = vst.msk [vmem:[%s4 + $0x94] sm:$0xf] %vm1494, %v1403
  %1533 = vst.msk [vmem:[%s4 + $0x98] sm:$0xf] %vm1494, %v1404
  %1534 = vst.msk [vmem:[%s4 + $0x9c] sm:$0xf] %vm1494, %v1405
  %1535 = vst.msk [vmem:[%s4 + $0xa0] sm:$0xf] %vm1494, %v1406
  %1536 = vst.msk [vmem:[%s4 + $0xa4] sm:$0xf] %vm1494, %v1407
  %1537 = vst.msk [vmem:[%s4 + $0xa8] sm:$0xf] %vm1494, %v1408
  %1538 = vst.msk [vmem:[%s4 + $0xac] sm:$0xf] %vm1494, %v1409
  %1539 = vst.msk [vmem:[%s4 + $0xb0] sm:$0xf] %vm1494, %v1410
  %1540 = vst.msk [vmem:[%s4 + $0xb4] sm:$0xf] %vm1494, %v1411
  %1541 = vst.msk [vmem:[%s4 + $0xb8] sm:$0xf] %vm1494, %v1412
  %1542 = vst.msk [vmem:[%s4 + $0xbc] sm:$0xf] %vm1494, %v1413
  %1543 = vst.msk [vmem:[%s4 + $0xc0] sm:$0xf] %vm1494, %v1414
  %1544 = vst.msk [vmem:[%s4 + $0xc4] sm:$0xf] %vm1494, %v1415
  %1545 = vst.msk [vmem:[%s4 + $0xc8] sm:$0xf] %vm1494, %v1416
  %1546 = vst.msk [vmem:[%s4 + $0xcc] sm:$0xf] %vm1494, %v1417
  %1547 = vst.msk [vmem:[%s4 + $0xd0] sm:$0xf] %vm1494, %v1418
  %1548 = vst.msk [vmem:[%s4 + $0xd4] sm:$0xf] %vm1494, %v1419
  %1549 = vst.msk [vmem:[%s4 + $0xd8] sm:$0xf] %vm1494, %v1420
  %1550 = vst.msk [vmem:[%s4 + $0xdc] sm:$0xf] %vm1494, %v1421
  %1551 = vst.msk [vmem:[%s4 + $0xe0] sm:$0xf] %vm1494, %v1422
  %1552 = vst.msk [vmem:[%s4 + $0xe4] sm:$0xf] %vm1494, %v1423
  %1553 = vst.msk [vmem:[%s4 + $0xe8] sm:$0xf] %vm1494, %v1424
  %1554 = vst.msk [vmem:[%s4 + $0xec] sm:$0xf] %vm1494, %v1425
  %1555 = vst.msk [vmem:[%s4 + $0xf0] sm:$0xf] %vm1494, %v1426
  %1556 = vst.msk [vmem:[%s4 + $0xf4] sm:$0xf] %vm1494, %v1427
  %1557 = vst.msk [vmem:[%s4 + $0xf8] sm:$0xf] %vm1494, %v1428
  %1558 = vst.msk [vmem:[%s4 + $0xfc] sm:$0xf] %vm1494, %v1429
  // Predicated region
  $region18: #{netd_forward.6} parent=0 // pred_check
    _
  $region19: #{netd_forward.6} parent=0 // pred_check_branch
    %1560 = sbr.rel (0) target = $region21
  $region20: #{netd_forward.6} parent=0 // pred_region
    _
  $region21: #{netd_forward.6} parent=0 // pred_fallthru
    _
  // Predicated region
  $region22: #{netd_forward.6} parent=0 // pred_check
    _
  $region23: #{netd_forward.6} parent=0 // pred_check_branch
    %1562 = sbr.rel (0) target = $region25
  $region24: #{netd_forward.6} parent=0 // pred_region
    _
  $region25: #{netd_forward.6} parent=0 // pred_fallthru
    _

// kernel: netd_forward.7
$region0: #{netd_forward.7}
  #allocation0 [shape = 'u32[]', space=smem, size = 0x4, offset = 0x4, fixed_abs, tag = 'smem constant byte address 0x4 - core index']
  #allocation1 [shape = 'u32[144,128]{1,0:T(1,128)}', space=vmem, size = 0x12000, scoped, tag = 'internal scratch']
  %s0 = inlined_call_operand.vmem [shape: bf16[128,256], index: 0, kind: input, shape index: {}]
  %s1 = inlined_call_operand.vmem [shape: bf16[256,128], index: 1, kind: input, shape index: {}]
  %s2 = inlined_call_operand.vmem [shape: f32[1,32], index: 2, kind: input, shape index: {}]
  %s3 = inlined_call_operand.vmem [shape: f32[1,32], index: 3, kind: input, shape index: {}]
  %s4 = inlined_call_operand.vmem [shape: bf16[128,32], index: 4, kind: output, shape index: {}]
  %s5 = sld [smem:[#allocation0]]
  $region26: #{netd_forward.7} parent=0
    _
  %s7 = ssub.s32 1, %s5
  %s8 = scalar_select 0, %s7, %s5
  // Predicated region
  $region2: #{netd_forward.7} parent=0 // pred_check
    _
  $region3: #{netd_forward.7} parent=0 // pred_check_branch
    %10 = sbr.rel (0) target = $region5
  $region4: #{netd_forward.7} parent=0 // pred_region
    _
  $region5: #{netd_forward.7} parent=0 // pred_fallthru
    _
  // Predicated region
  $region6: #{netd_forward.7} parent=0 // pred_check
    _
  $region7: #{netd_forward.7} parent=0 // pred_check_branch
    %12 = sbr.rel (0) target = $region9
  $region8: #{netd_forward.7} parent=0 // pred_region
    _
  $region9: #{netd_forward.7} parent=0 // pred_fallthru
    _
  // Predicated region
  $region10: #{netd_forward.7} parent=0 // pred_check
    _
  $region11: #{netd_forward.7} parent=0 // pred_check_branch
    %14 = sbr.rel (0) target = $region13
  $region12: #{netd_forward.7} parent=0 // pred_region
    _
  $region13: #{netd_forward.7} parent=0 // pred_fallthru
    _
  // Predicated region
  $region14: #{netd_forward.7} parent=0 // pred_check
    _
  $region15: #{netd_forward.7} parent=0 // pred_check_branch
    %16 = sbr.rel (0) target = $region17
  $region16: #{netd_forward.7} parent=0 // pred_region
    _
  $region17: #{netd_forward.7} parent=0 // pred_fallthru
    _
  %v18 = vld [vmem:[%s0] sm:$0xff]
  %v19 = vld [vmem:[%s0 + $0x8] sm:$0xff]
  %v20 = vld [vmem:[%s0 + $0x10] sm:$0xff]
  %v21 = vld [vmem:[%s0 + $0x18] sm:$0xff]
  %v22 = vld [vmem:[%s0 + $0x20] sm:$0xff]
  %v23 = vld [vmem:[%s0 + $0x28] sm:$0xff]
  %v24 = vld [vmem:[%s0 + $0x30] sm:$0xff]
  %v25 = vld [vmem:[%s0 + $0x38] sm:$0xff]
  %v26 = vld [vmem:[%s0 + $0x40] sm:$0xff]
  %v27 = vld [vmem:[%s0 + $0x48] sm:$0xff]
  %v28 = vld [vmem:[%s0 + $0x50] sm:$0xff]
  %v29 = vld [vmem:[%s0 + $0x58] sm:$0xff]
  %v30 = vld [vmem:[%s0 + $0x60] sm:$0xff]
  %v31 = vld [vmem:[%s0 + $0x68] sm:$0xff]
  %v32 = vld [vmem:[%s0 + $0x70] sm:$0xff]
  %v33 = vld [vmem:[%s0 + $0x78] sm:$0xff]
  %v34 = vld [vmem:[%s1] sm:$0xf]
  %v35 = vld [vmem:[%s1 + $0x4] sm:$0xf]
  %v36 = vld [vmem:[%s1 + $0x8] sm:$0xf]
  %v37 = vld [vmem:[%s1 + $0xc] sm:$0xf]
  %v38 = vld [vmem:[%s1 + $0x10] sm:$0xf]
  %v39 = vld [vmem:[%s1 + $0x14] sm:$0xf]
  %v40 = vld [vmem:[%s1 + $0x18] sm:$0xf]
  %v41 = vld [vmem:[%s1 + $0x1c] sm:$0xf]
  %v42 = vld [vmem:[%s1 + $0x20] sm:$0xf]
  %v43 = vld [vmem:[%s1 + $0x24] sm:$0xf]
  %v44 = vld [vmem:[%s1 + $0x28] sm:$0xf]
  %v45 = vld [vmem:[%s1 + $0x2c] sm:$0xf]
  %v46 = vld [vmem:[%s1 + $0x30] sm:$0xf]
  %v47 = vld [vmem:[%s1 + $0x34] sm:$0xf]
  %v48 = vld [vmem:[%s1 + $0x38] sm:$0xf]
  %v49 = vld [vmem:[%s1 + $0x3c] sm:$0xf]
  %v50 = vld [vmem:[%s1 + $0x40] sm:$0xf]
  %v51 = vld [vmem:[%s1 + $0x44] sm:$0xf]
  %v52 = vld [vmem:[%s1 + $0x48] sm:$0xf]
  %v53 = vld [vmem:[%s1 + $0x4c] sm:$0xf]
  %v54 = vld [vmem:[%s1 + $0x50] sm:$0xf]
  %v55 = vld [vmem:[%s1 + $0x54] sm:$0xf]
  %v56 = vld [vmem:[%s1 + $0x58] sm:$0xf]
  %v57 = vld [vmem:[%s1 + $0x5c] sm:$0xf]
  %v58 = vld [vmem:[%s1 + $0x60] sm:$0xf]
  %v59 = vld [vmem:[%s1 + $0x64] sm:$0xf]
  %v60 = vld [vmem:[%s1 + $0x68] sm:$0xf]
  %v61 = vld [vmem:[%s1 + $0x6c] sm:$0xf]
  %v62 = vld [vmem:[%s1 + $0x70] sm:$0xf]
  %v63 = vld [vmem:[%s1 + $0x74] sm:$0xf]
  %v64 = vld [vmem:[%s1 + $0x78] sm:$0xf]
  %v65 = vld [vmem:[%s1 + $0x7c] sm:$0xf]
  %v82 = vunpack.c.l.b16 %v18
  %v83 = vunpack.c.h.b16 %v18
  %v84 = vunpack.c.l.b16 %v19
  %v85 = vunpack.c.h.b16 %v19
  %v86 = vunpack.c.l.b16 %v20
  %v87 = vunpack.c.h.b16 %v20
  %v88 = vunpack.c.l.b16 %v21
  %v89 = vunpack.c.h.b16 %v21
  %v90 = vunpack.c.l.b16 %v22
  %v91 = vunpack.c.h.b16 %v22
  %v92 = vunpack.c.l.b16 %v23
  %v93 = vunpack.c.h.b16 %v23
  %v94 = vunpack.c.l.b16 %v24
  %v95 = vunpack.c.h.b16 %v24
  %v96 = vunpack.c.l.b16 %v25
  %v97 = vunpack.c.h.b16 %v25
  %v98 = vunpack.c.l.b16 %v26
  %v99 = vunpack.c.h.b16 %v26
  %v100 = vunpack.c.l.b16 %v27
  %v101 = vunpack.c.h.b16 %v27
  %v102 = vunpack.c.l.b16 %v28
  %v103 = vunpack.c.h.b16 %v28
  %v104 = vunpack.c.l.b16 %v29
  %v105 = vunpack.c.h.b16 %v29
  %v106 = vunpack.c.l.b16 %v30
  %v107 = vunpack.c.h.b16 %v30
  %v108 = vunpack.c.l.b16 %v31
  %v109 = vunpack.c.h.b16 %v31
  %v110 = vunpack.c.l.b16 %v32
  %v111 = vunpack.c.h.b16 %v32
  %v112 = vunpack.c.l.b16 %v33
  %v113 = vunpack.c.h.b16 %v33
  %v114 = vpack.c.b16 %v84, %v82
  %v115 = vpack.c.b16 %v85, %v83
  %v116 = vpack.c.b16 %v88, %v86
  %v117 = vpack.c.b16 %v89, %v87
  %v118 = vpack.c.b16 %v92, %v90
  %v119 = vpack.c.b16 %v93, %v91
  %v120 = vpack.c.b16 %v96, %v94
  %v121 = vpack.c.b16 %v97, %v95
  %v122 = vpack.c.b16 %v100, %v98
  %v123 = vpack.c.b16 %v101, %v99
  %v124 = vpack.c.b16 %v104, %v102
  %v125 = vpack.c.b16 %v105, %v103
  %v126 = vpack.c.b16 %v108, %v106
  %v127 = vpack.c.b16 %v109, %v107
  %v128 = vpack.c.b16 %v112, %v110
  %v129 = vpack.c.b16 %v113, %v111
  %v178 = vunpack.c.l.b16 %v34
  %v179 = vunpack.c.l.b16 %v35
  %v180 = vunpack.c.l.b16 %v36
  %v181 = vunpack.c.l.b16 %v37
  %v182 = vunpack.c.l.b16 %v38
  %v183 = vunpack.c.l.b16 %v39
  %v184 = vunpack.c.l.b16 %v40
  %v185 = vunpack.c.l.b16 %v41
  %v186 = vunpack.c.l.b16 %v42
  %v187 = vunpack.c.l.b16 %v43
  %v188 = vunpack.c.l.b16 %v44
  %v189 = vunpack.c.l.b16 %v45
  %v190 = vunpack.c.l.b16 %v46
  %v191 = vunpack.c.l.b16 %v47
  %v192 = vunpack.c.l.b16 %v48
  %v193 = vunpack.c.l.b16 %v49
  %v194 = vunpack.c.l.b16 %v50
  %v195 = vunpack.c.l.b16 %v51
  %v196 = vunpack.c.l.b16 %v52
  %v197 = vunpack.c.l.b16 %v53
  %v198 = vunpack.c.l.b16 %v54
  %v199 = vunpack.c.l.b16 %v55
  %v200 = vunpack.c.l.b16 %v56
  %v201 = vunpack.c.l.b16 %v57
  %v202 = vunpack.c.l.b16 %v58
  %v203 = vunpack.c.l.b16 %v59
  %v204 = vunpack.c.l.b16 %v60
  %v205 = vunpack.c.l.b16 %v61
  %v206 = vunpack.c.l.b16 %v62
  %v207 = vunpack.c.l.b16 %v63
  %v208 = vunpack.c.l.b16 %v64
  %v209 = vunpack.c.l.b16 %v65
  %v210 = vpack.c.b16 %v179, %v178
  %v211 = vpack.c.b16 %v181, %v180
  %v212 = vpack.c.b16 %v183, %v182
  %v213 = vpack.c.b16 %v185, %v184
  %v214 = vpack.c.b16 %v187, %v186
  %v215 = vpack.c.b16 %v189, %v188
  %v216 = vpack.c.b16 %v191, %v190
  %v217 = vpack.c.b16 %v193, %v192
  %v218 = vpack.c.b16 %v195, %v194
  %v219 = vpack.c.b16 %v197, %v196
  %v220 = vpack.c.b16 %v199, %v198
  %v221 = vpack.c.b16 %v201, %v200
  %v222 = vpack.c.b16 %v203, %v202
  %v223 = vpack.c.b16 %v205, %v204
  %v224 = vpack.c.b16 %v207, %v206
  %v225 = vpack.c.b16 %v209, %v208
  %242 = vmatprep.subr.bf16.mxu0 0
  %243 = vmatpush1.bf16.msra.mxu0 %v210
  %244 = vmatprep.subr.bf16.mxu0 0
  %245 = vmatpush1.bf16.msra.mxu0 %v211
  %246 = vmatprep.subr.bf16.mxu0 0
  %247 = vmatpush1.bf16.msra.mxu0 %v212
  %248 = vmatprep.subr.bf16.mxu0 0
  %249 = vmatpush1.bf16.msra.mxu0 %v213
  %250 = vmatprep.subr.bf16.mxu0 0
  %251 = vmatpush1.bf16.msra.mxu0 %v214
  %252 = vmatprep.subr.bf16.mxu0 0
  %253 = vmatpush1.bf16.msra.mxu0 %v215
  %254 = vmatprep.subr.bf16.mxu0 0
  %255 = vmatpush1.bf16.msra.mxu0 %v216
  %256 = vmatprep.subr.bf16.mxu0 0
  %257 = vmatpush1.bf16.msra.mxu0 %v217
  %258 = vmatprep.subr.bf16.mxu0 0
  %259 = vmatpush1.bf16.msra.mxu0 %v218
  %260 = vmatprep.subr.bf16.mxu0 0
  %261 = vmatpush1.bf16.msra.mxu0 %v219
  %262 = vmatprep.subr.bf16.mxu0 0
  %263 = vmatpush1.bf16.msra.mxu0 %v220
  %264 = vmatprep.subr.bf16.mxu0 0
  %265 = vmatpush1.bf16.msra.mxu0 %v221
  %266 = vmatprep.subr.bf16.mxu0 0
  %267 = vmatpush1.bf16.msra.mxu0 %v222
  %268 = vmatprep.subr.bf16.mxu0 0
  %269 = vmatpush1.bf16.msra.mxu0 %v223
  %270 = vmatprep.subr.bf16.mxu0 0
  %271 = vmatpush1.bf16.msra.mxu0 %v224
  %272 = vmatprep.subr.bf16.mxu0 0
  %273 = vmatpush1.bf16.msra.mxu0 %v225
  %274 = vmatprep.mubr.bf16.mxu0 %v115
  %275 = vmatmul.mubr.bf16.gmra.mrb[0].mxu0 %v114
  %v276 = vpop.f32.mrb[0].mxu0
  %v277 = vadd.f32 0.0, %v276
  %v278 = vpop.f32.mrb[0].mxu0
  %v279 = vpop.f32.mrb[0].mxu0
  %v280 = vadd.f32 0.0, %v279
  %v281 = vpop.f32.mrb[0].mxu0
  %282 = vmatprep.mubr.bf16.mxu0 %v117
  %283 = vmatmul.mubr.bf16.gmra.mrb[0].mxu0 %v116
  %v284 = vpop.f32.mrb[0].mxu0
  %v285 = vadd.f32 0.0, %v284
  %v286 = vpop.f32.mrb[0].mxu0
  %v287 = vpop.f32.mrb[0].mxu0
  %v288 = vadd.f32 0.0, %v287
  %v289 = vpop.f32.mrb[0].mxu0
  %290 = vmatprep.mubr.bf16.mxu0 %v119
  %291 = vmatmul.mubr.bf16.gmra.mrb[0].mxu0 %v118
  %v292 = vpop.f32.mrb[0].mxu0
  %v293 = vadd.f32 0.0, %v292
  %v294 = vpop.f32.mrb[0].mxu0
  %v295 = vpop.f32.mrb[0].mxu0
  %v296 = vadd.f32 0.0, %v295
  %v297 = vpop.f32.mrb[0].mxu0
  %298 = vmatprep.mubr.bf16.mxu0 %v121
  %299 = vmatmul.mubr.bf16.gmra.mrb[0].mxu0 %v120
  %v300 = vpop.f32.mrb[0].mxu0
  %v301 = vadd.f32 0.0, %v300
  %v302 = vpop.f32.mrb[0].mxu0
  %v303 = vpop.f32.mrb[0].mxu0
  %v304 = vadd.f32 0.0, %v303
  %v305 = vpop.f32.mrb[0].mxu0
  %306 = vmatprep.mubr.bf16.mxu0 %v123
  %307 = vmatmul.mubr.bf16.gmra.mrb[0].mxu0 %v122
  %v308 = vpop.f32.mrb[0].mxu0
  %v309 = vadd.f32 0.0, %v308
  %v310 = vpop.f32.mrb[0].mxu0
  %v311 = vpop.f32.mrb[0].mxu0
  %v312 = vadd.f32 0.0, %v311
  %v313 = vpop.f32.mrb[0].mxu0
  %314 = vmatprep.mubr.bf16.mxu0 %v125
  %315 = vmatmul.mubr.bf16.gmra.mrb[0].mxu0 %v124
  %v316 = vpop.f32.mrb[0].mxu0
  %v317 = vadd.f32 0.0, %v316
  %v318 = vpop.f32.mrb[0].mxu0
  %v319 = vpop.f32.mrb[0].mxu0
  %v320 = vadd.f32 0.0, %v319
  %v321 = vpop.f32.mrb[0].mxu0
  %322 = vmatprep.mubr.bf16.mxu0 %v127
  %323 = vmatmul.mubr.bf16.gmra.mrb[0].mxu0 %v126
  %v324 = vpop.f32.mrb[0].mxu0
  %v325 = vadd.f32 0.0, %v324
  %v326 = vpop.f32.mrb[0].mxu0
  %v327 = vpop.f32.mrb[0].mxu0
  %v328 = vadd.f32 0.0, %v327
  %v329 = vpop.f32.mrb[0].mxu0
  %330 = vmatprep.mubr.bf16.mxu0 %v129
  %331 = vmatmul.mubr.bf16.gmra.mrb[0].mxu0 %v128
  %v332 = vpop.f32.mrb[0].mxu0
  %v333 = vadd.f32 0.0, %v332
  %v334 = vpop.f32.mrb[0].mxu0
  %v335 = vpop.f32.mrb[0].mxu0
  %v336 = vadd.f32 0.0, %v335
  %v337 = vpop.f32.mrb[0].mxu0
  %338 = vdwg.mxu0
  %vm339 = vcmask 261120
  %v340 = vsel %vm339, %v277, 0.0
  %v341 = vsel %vm339, %v280, 0.0
  %v342 = vadd.f32 %v340, %v341
  %v343 = vsel %vm339, %v285, 0.0
  %v344 = vadd.f32 %v342, %v343
  %v345 = vsel %vm339, %v288, 0.0
  %v346 = vadd.f32 %v344, %v345
  %v347 = vsel %vm339, %v293, 0.0
  %v348 = vadd.f32 %v346, %v347
  %v349 = vsel %vm339, %v296, 0.0
  %v350 = vadd.f32 %v348, %v349
  %v351 = vsel %vm339, %v301, 0.0
  %v352 = vadd.f32 %v350, %v351
  %v353 = vsel %vm339, %v304, 0.0
  %v354 = vadd.f32 %v352, %v353
  %v355 = vsel %vm339, %v309, 0.0
  %v356 = vadd.f32 %v354, %v355
  %v357 = vsel %vm339, %v312, 0.0
  %v358 = vadd.f32 %v356, %v357
  %v359 = vsel %vm339, %v317, 0.0
  %v360 = vadd.f32 %v358, %v359
  %v361 = vsel %vm339, %v320, 0.0
  %v362 = vadd.f32 %v360, %v361
  %v363 = vsel %vm339, %v325, 0.0
  %v364 = vadd.f32 %v362, %v363
  %v365 = vsel %vm339, %v328, 0.0
  %v366 = vadd.f32 %v364, %v365
  %v367 = vsel %vm339, %v333, 0.0
  %v368 = vadd.f32 %v366, %v367
  %v369 = vsel %vm339, %v336, 0.0
  %v370 = vadd.f32 %v368, %v369
  %v371 = vrot.slane %v370, 4
  %v372 = vadd.f32 %v370, %v371
  %v373 = vrot.slane %v372, 2
  %v374 = vadd.f32 %v372, %v373
  %v375 = vrot.slane %v374, 1
  %v376 = vadd.f32 %v374, %v375
  %v377 = vmul.f32 %v376, 0.0078125
  %v378 = vmul.f32 %v277, %v277
  %v379 = vmul.f32 %v280, %v280
  %v380 = vmul.f32 %v285, %v285
  %v381 = vmul.f32 %v288, %v288
  %v382 = vmul.f32 %v293, %v293
  %v383 = vmul.f32 %v296, %v296
  %v384 = vmul.f32 %v301, %v301
  %v385 = vmul.f32 %v304, %v304
  %v386 = vmul.f32 %v309, %v309
  %v387 = vmul.f32 %v312, %v312
  %v388 = vmul.f32 %v317, %v317
  %v389 = vmul.f32 %v320, %v320
  %v390 = vmul.f32 %v325, %v325
  %v391 = vmul.f32 %v328, %v328
  %v392 = vmul.f32 %v333, %v333
  %v393 = vmul.f32 %v336, %v336
  %v394 = vsel %vm339, %v378, 0.0
  %v395 = vsel %vm339, %v379, 0.0
  %v396 = vadd.f32 %v394, %v395
  %v397 = vsel %vm339, %v380, 0.0
  %v398 = vadd.f32 %v396, %v397
  %v399 = vsel %vm339, %v381, 0.0
  %v400 = vadd.f32 %v398, %v399
  %v401 = vsel %vm339, %v382, 0.0
  %v402 = vadd.f32 %v400, %v401
  %v403 = vsel %vm339, %v383, 0.0
  %v404 = vadd.f32 %v402, %v403
  %v405 = vsel %vm339, %v384, 0.0
  %v406 = vadd.f32 %v404, %v405
  %v407 = vsel %vm339, %v385, 0.0
  %v408 = vadd.f32 %v406, %v407
  %v409 = vsel %vm339, %v386, 0.0
  %v410 = vadd.f32 %v408, %v409
  %v411 = vsel %vm339, %v387, 0.0
  %v412 = vadd.f32 %v410, %v411
  %v413 = vsel %vm339, %v388, 0.0
  %v414 = vadd.f32 %v412, %v413
  %v415 = vsel %vm339, %v389, 0.0
  %v416 = vadd.f32 %v414, %v415
  %v417 = vsel %vm339, %v390, 0.0
  %v418 = vadd.f32 %v416, %v417
  %v419 = vsel %vm339, %v391, 0.0
  %v420 = vadd.f32 %v418, %v419
  %v421 = vsel %vm339, %v392, 0.0
  %v422 = vadd.f32 %v420, %v421
  %v423 = vsel %vm339, %v393, 0.0
  %v424 = vadd.f32 %v422, %v423
  %v425 = vrot.slane %v424, 4
  %v426 = vadd.f32 %v424, %v425
  %v427 = vrot.slane %v426, 2
  %v428 = vadd.f32 %v426, %v427
  %v429 = vrot.slane %v428, 1
  %v430 = vadd.f32 %v428, %v429
  %v431 = vmul.f32 %v430, 0.0078125
  %v432 = vmul.f32 %v377, %v377
  %v433 = vsub.f32 %v431, %v432
  %v434 = vmax.f32 %v433, 0.0
  %v435 = vld [vmem:[%s2] sm:$0x1]
  %v436 = vadd.f32 %v434, 1e-05
  %v437 = vrsqrt.pop %v436
  %v438 = vmul.f32 %v435, %v437
  %v439 = vld [vmem:[%s3] sm:$0x1]
  %v440 = vmul.f32 %v377, %v438
  %v441 = vsub.f32 %v439, %v440
  %v443 = vlaneseq
  %v444 = vshrl.u32 %v443, 7
  %v445 = vsub.s32 0, %v444
  %v446 = vrot.slane %v438, %v445
  %v448 = vmul.f32 %v277, %v446
  %v449 = vmul.f32 %v280, %v446
  %v450 = vmul.f32 %v285, %v446
  %v451 = vmul.f32 %v288, %v446
  %v452 = vmul.f32 %v293, %v446
  %v453 = vmul.f32 %v296, %v446
  %v454 = vmul.f32 %v301, %v446
  %v455 = vmul.f32 %v304, %v446
  %v456 = vmul.f32 %v309, %v446
  %v457 = vmul.f32 %v312, %v446
  %v458 = vmul.f32 %v317, %v446
  %v459 = vmul.f32 %v320, %v446
  %v460 = vmul.f32 %v325, %v446
  %v461 = vmul.f32 %v328, %v446
  %v462 = vmul.f32 %v333, %v446
  %v463 = vmul.f32 %v336, %v446
  %v465 = vlaneseq
  %v466 = vshrl.u32 %v465, 7
  %v467 = vsub.s32 0, %v466
  %v468 = vrot.slane %v441, %v467
  %v470 = vadd.f32 %v448, %v468
  %v471 = vadd.f32 %v449, %v468
  %v472 = vadd.f32 %v450, %v468
  %v473 = vadd.f32 %v451, %v468
  %v474 = vadd.f32 %v452, %v468
  %v475 = vadd.f32 %v453, %v468
  %v476 = vadd.f32 %v454, %v468
  %v477 = vadd.f32 %v455, %v468
  %v478 = vadd.f32 %v456, %v468
  %v479 = vadd.f32 %v457, %v468
  %v480 = vadd.f32 %v458, %v468
  %v481 = vadd.f32 %v459, %v468
  %v482 = vadd.f32 %v460, %v468
  %v483 = vadd.f32 %v461, %v468
  %v484 = vadd.f32 %v462, %v468
  %v485 = vadd.f32 %v463, %v468
  %v486 = vmul.f32 %v470, 0.2
  %v487 = vmul.f32 %v471, 0.2
  %v488 = vmul.f32 %v472, 0.2
  %v489 = vmul.f32 %v473, 0.2
  %v490 = vmul.f32 %v474, 0.2
  %v491 = vmul.f32 %v475, 0.2
  %v492 = vmul.f32 %v476, 0.2
  %v493 = vmul.f32 %v477, 0.2
  %v494 = vmul.f32 %v478, 0.2
  %v495 = vmul.f32 %v479, 0.2
  %v496 = vmul.f32 %v480, 0.2
  %v497 = vmul.f32 %v481, 0.2
  %v498 = vmul.f32 %v482, 0.2
  %v499 = vmul.f32 %v483, 0.2
  %v500 = vmul.f32 %v484, 0.2
  %v501 = vmul.f32 %v485, 0.2
  %v502 = vmax.f32 %v470, %v486
  %v503 = vmax.f32 %v471, %v487
  %v504 = vmax.f32 %v472, %v488
  %v505 = vmax.f32 %v473, %v489
  %v506 = vmax.f32 %v474, %v490
  %v507 = vmax.f32 %v475, %v491
  %v508 = vmax.f32 %v476, %v492
  %v509 = vmax.f32 %v477, %v493
  %v510 = vmax.f32 %v478, %v494
  %v511 = vmax.f32 %v479, %v495
  %v512 = vmax.f32 %v480, %v496
  %v513 = vmax.f32 %v481, %v497
  %v514 = vmax.f32 %v482, %v498
  %v515 = vmax.f32 %v483, %v499
  %v516 = vmax.f32 %v484, %v500
  %v517 = vmax.f32 %v485, %v501
  %v518 = vpack.c.bf16 %v503, %v502
  %v519 = vpack.c.bf16 %v505, %v504
  %v520 = vpack.c.bf16 %v507, %v506
  %v521 = vpack.c.bf16 %v509, %v508
  %v522 = vpack.c.bf16 %v511, %v510
  %v523 = vpack.c.bf16 %v513, %v512
  %v524 = vpack.c.bf16 %v515, %v514
  %v525 = vpack.c.bf16 %v517, %v516
  %v534 = vunpack.c.l.b16 %v518
  %v535 = vunpack.c.h.b16 %v518
  %v536 = vunpack.c.l.b16 %v519
  %v537 = vunpack.c.h.b16 %v519
  %v538 = vunpack.c.l.b16 %v520
  %v539 = vunpack.c.h.b16 %v520
  %v540 = vunpack.c.l.b16 %v521
  %v541 = vunpack.c.h.b16 %v521
  %v542 = vunpack.c.l.b16 %v522
  %v543 = vunpack.c.h.b16 %v522
  %v544 = vunpack.c.l.b16 %v523
  %v545 = vunpack.c.h.b16 %v523
  %v546 = vunpack.c.l.b16 %v524
  %v547 = vunpack.c.h.b16 %v524
  %v548 = vunpack.c.l.b16 %v525
  %v549 = vunpack.c.h.b16 %v525
  %v550 = vpack.c.b16 %v534, %v534
  %v551 = vpack.c.b16 %v535, %v535
  %v552 = vpack.c.b16 %v536, %v536
  %v553 = vpack.c.b16 %v537, %v537
  %v554 = vpack.c.b16 %v538, %v538
  %v555 = vpack.c.b16 %v539, %v539
  %v556 = vpack.c.b16 %v540, %v540
  %v557 = vpack.c.b16 %v541, %v541
  %v558 = vpack.c.b16 %v542, %v542
  %v559 = vpack.c.b16 %v543, %v543
  %v560 = vpack.c.b16 %v544, %v544
  %v561 = vpack.c.b16 %v545, %v545
  %v562 = vpack.c.b16 %v546, %v546
  %v563 = vpack.c.b16 %v547, %v547
  %v564 = vpack.c.b16 %v548, %v548
  %v565 = vpack.c.b16 %v549, %v549
  %vm582 = vcmask 257024
  %583 = vst.msk [vmem:[%s4] sm:$0xf] %vm582, %v550
  %584 = vst.msk [vmem:[%s4 + $0x4] sm:$0xf] %vm582, %v551
  %585 = vst.msk [vmem:[%s4 + $0x8] sm:$0xf] %vm582, %v552
  %586 = vst.msk [vmem:[%s4 + $0xc] sm:$0xf] %vm582, %v553
  %587 = vst.msk [vmem:[%s4 + $0x10] sm:$0xf] %vm582, %v554
  %588 = vst.msk [vmem:[%s4 + $0x14] sm:$0xf] %vm582, %v555
  %589 = vst.msk [vmem:[%s4 + $0x18] sm:$0xf] %vm582, %v556
  %590 = vst.msk [vmem:[%s4 + $0x1c] sm:$0xf] %vm582, %v557
  %591 = vst.msk [vmem:[%s4 + $0x20] sm:$0xf] %vm582, %v558
  %592 = vst.msk [vmem:[%s4 + $0x24] sm:$0xf] %vm582, %v559
  %593 = vst.msk [vmem:[%s4 + $0x28] sm:$0xf] %vm582, %v560
  %594 = vst.msk [vmem:[%s4 + $0x2c] sm:$0xf] %vm582, %v561
  %595 = vst.msk [vmem:[%s4 + $0x30] sm:$0xf] %vm582, %v562
  %596 = vst.msk [vmem:[%s4 + $0x34] sm:$0xf] %vm582, %v563
  %597 = vst.msk [vmem:[%s4 + $0x38] sm:$0xf] %vm582, %v564
  %598 = vst.msk [vmem:[%s4 + $0x3c] sm:$0xf] %vm582, %v565
  // Predicated region
  $region18: #{netd_forward.7} parent=0 // pred_check
    _
  $region19: #{netd_forward.7} parent=0 // pred_check_branch
    %600 = sbr.rel (0) target = $region21
  $region20: #{netd_forward.7} parent=0 // pred_region
    _
  $region21: #{netd_forward.7} parent=0 // pred_fallthru
    _
  // Predicated region
  $region22: #{netd_forward.7} parent=0 // pred_check
    _
  $region23: #{netd_forward.7} parent=0 // pred_check_branch
    %602 = sbr.rel (0) target = $region25
  $region24: #{netd_forward.7} parent=0 // pred_region
    _
  $region25: #{netd_forward.7} parent=0 // pred_fallthru
    _

// kernel: netd_forward.8
$region0: #{netd_forward.8}
  #allocation0 [shape = 'u32[]', space=smem, size = 0x4, offset = 0x4, fixed_abs, tag = 'smem constant byte address 0x4 - core index']
  #allocation1 [shape = 'u32[144,128]{1,0:T(1,128)}', space=vmem, size = 0x12000, scoped, tag = 'internal scratch']
  %s0 = inlined_call_operand.vmem [shape: bf16[32,512], index: 0, kind: input, shape index: {}]
  %s1 = inlined_call_operand.vmem [shape: bf16[512,128], index: 1, kind: input, shape index: {}]
  %s2 = inlined_call_operand.vmem [shape: f32[1,64], index: 2, kind: input, shape index: {}]
  %s3 = inlined_call_operand.vmem [shape: f32[1,64], index: 3, kind: input, shape index: {}]
  %s4 = inlined_call_operand.vmem [shape: bf16[32,64], index: 4, kind: output, shape index: {}]
  %s5 = sld [smem:[#allocation0]]
  $region26: #{netd_forward.8} parent=0
    _
  %s7 = ssub.s32 1, %s5
  %s8 = scalar_select 0, %s7, %s5
  // Predicated region
  $region2: #{netd_forward.8} parent=0 // pred_check
    _
  $region3: #{netd_forward.8} parent=0 // pred_check_branch
    %10 = sbr.rel (0) target = $region5
  $region4: #{netd_forward.8} parent=0 // pred_region
    _
  $region5: #{netd_forward.8} parent=0 // pred_fallthru
    _
  // Predicated region
  $region6: #{netd_forward.8} parent=0 // pred_check
    _
  $region7: #{netd_forward.8} parent=0 // pred_check_branch
    %12 = sbr.rel (0) target = $region9
  $region8: #{netd_forward.8} parent=0 // pred_region
    _
  $region9: #{netd_forward.8} parent=0 // pred_fallthru
    _
  // Predicated region
  $region10: #{netd_forward.8} parent=0 // pred_check
    _
  $region11: #{netd_forward.8} parent=0 // pred_check_branch
    %14 = sbr.rel (0) target = $region13
  $region12: #{netd_forward.8} parent=0 // pred_region
    _
  $region13: #{netd_forward.8} parent=0 // pred_fallthru
    _
  // Predicated region
  $region14: #{netd_forward.8} parent=0 // pred_check
    _
  $region15: #{netd_forward.8} parent=0 // pred_check_branch
    %16 = sbr.rel (0) target = $region17
  $region16: #{netd_forward.8} parent=0 // pred_region
    _
  $region17: #{netd_forward.8} parent=0 // pred_fallthru
    _
  %v18 = vld [vmem:[%s0] sm:$0xff]
  %v19 = vld [vmem:[%s0 + $0x8] sm:$0xff]
  %v20 = vld [vmem:[%s0 + $0x10] sm:$0xff]
  %v21 = vld [vmem:[%s0 + $0x18] sm:$0xff]
  %v22 = vld [vmem:[%s0 + $0x20] sm:$0xff]
  %v23 = vld [vmem:[%s0 + $0x28] sm:$0xff]
  %v24 = vld [vmem:[%s0 + $0x30] sm:$0xff]
  %v25 = vld [vmem:[%s0 + $0x38] sm:$0xff]
  %v26 = vld [vmem:[%s1] sm:$0xf]
  %v27 = vld [vmem:[%s1 + $0x4] sm:$0xf]
  %v28 = vld [vmem:[%s1 + $0x8] sm:$0xf]
  %v29 = vld [vmem:[%s1 + $0xc] sm:$0xf]
  %v30 = vld [vmem:[%s1 + $0x10] sm:$0xf]
  %v31 = vld [vmem:[%s1 + $0x14] sm:$0xf]
  %v32 = vld [vmem:[%s1 + $0x18] sm:$0xf]
  %v33 = vld [vmem:[%s1 + $0x1c] sm:$0xf]
  %v34 = vld [vmem:[%s1 + $0x20] sm:$0xf]
  %v35 = vld [vmem:[%s1 + $0x24] sm:$0xf]
  %v36 = vld [vmem:[%s1 + $0x28] sm:$0xf]
  %v37 = vld [vmem:[%s1 + $0x2c] sm:$0xf]
  %v38 = vld [vmem:[%s1 + $0x30] sm:$0xf]
  %v39 = vld [vmem:[%s1 + $0x34] sm:$0xf]
  %v40 = vld [vmem:[%s1 + $0x38] sm:$0xf]
  %v41 = vld [vmem:[%s1 + $0x3c] sm:$0xf]
  %v42 = vld [vmem:[%s1 + $0x40] sm:$0xf]
  %v43 = vld [vmem:[%s1 + $0x44] sm:$0xf]
  %v44 = vld [vmem:[%s1 + $0x48] sm:$0xf]
  %v45 = vld [vmem:[%s1 + $0x4c] sm:$0xf]
  %v46 = vld [vmem:[%s1 + $0x50] sm:$0xf]
  %v47 = vld [vmem:[%s1 + $0x54] sm:$0xf]
  %v48 = vld [vmem:[%s1 + $0x58] sm:$0xf]
  %v49 = vld [vmem:[%s1 + $0x5c] sm:$0xf]
  %v50 = vld [vmem:[%s1 + $0x60] sm:$0xf]
  %v51 = vld [vmem:[%s1 + $0x64] sm:$0xf]
  %v52 = vld [vmem:[%s1 + $0x68] sm:$0xf]
  %v53 = vld [vmem:[%s1 + $0x6c] sm:$0xf]
  %v54 = vld [vmem:[%s1 + $0x70] sm:$0xf]
  %v55 = vld [vmem:[%s1 + $0x74] sm:$0xf]
  %v56 = vld [vmem:[%s1 + $0x78] sm:$0xf]
  %v57 = vld [vmem:[%s1 + $0x7c] sm:$0xf]
  %v58 = vld [vmem:[%s1 + $0x80] sm:$0xf]
  %v59 = vld [vmem:[%s1 + $0x84] sm:$0xf]
  %v60 = vld [vmem:[%s1 + $0x88] sm:$0xf]
  %v61 = vld [vmem:[%s1 + $0x8c] sm:$0xf]
  %v62 = vld [vmem:[%s1 + $0x90] sm:$0xf]
  %v63 = vld [vmem:[%s1 + $0x94] sm:$0xf]
  %v64 = vld [vmem:[%s1 + $0x98] sm:$0xf]
  %v65 = vld [vmem:[%s1 + $0x9c] sm:$0xf]
  %v66 = vld [vmem:[%s1 + $0xa0] sm:$0xf]
  %v67 = vld [vmem:[%s1 + $0xa4] sm:$0xf]
  %v68 = vld [vmem:[%s1 + $0xa8] sm:$0xf]
  %v69 = vld [vmem:[%s1 + $0xac] sm:$0xf]
  %v70 = vld [vmem:[%s1 + $0xb0] sm:$0xf]
  %v71 = vld [vmem:[%s1 + $0xb4] sm:$0xf]
  %v72 = vld [vmem:[%s1 + $0xb8] sm:$0xf]
  %v73 = vld [vmem:[%s1 + $0xbc] sm:$0xf]
  %v74 = vld [vmem:[%s1 + $0xc0] sm:$0xf]
  %v75 = vld [vmem:[%s1 + $0xc4] sm:$0xf]
  %v76 = vld [vmem:[%s1 + $0xc8] sm:$0xf]
  %v77 = vld [vmem:[%s1 + $0xcc] sm:$0xf]
  %v78 = vld [vmem:[%s1 + $0xd0] sm:$0xf]
  %v79 = vld [vmem:[%s1 + $0xd4] sm:$0xf]
  %v80 = vld [vmem:[%s1 + $0xd8] sm:$0xf]
  %v81 = vld [vmem:[%s1 + $0xdc] sm:$0xf]
  %v82 = vld [vmem:[%s1 + $0xe0] sm:$0xf]
  %v83 = vld [vmem:[%s1 + $0xe4] sm:$0xf]
  %v84 = vld [vmem:[%s1 + $0xe8] sm:$0xf]
  %v85 = vld [vmem:[%s1 + $0xec] sm:$0xf]
  %v86 = vld [vmem:[%s1 + $0xf0] sm:$0xf]
  %v87 = vld [vmem:[%s1 + $0xf4] sm:$0xf]
  %v88 = vld [vmem:[%s1 + $0xf8] sm:$0xf]
  %v89 = vld [vmem:[%s1 + $0xfc] sm:$0xf]
  %v98 = vunpack.c.l.b16 %v18
  %v99 = vunpack.c.h.b16 %v18
  %v100 = vunpack.c.l.b16 %v19
  %v101 = vunpack.c.h.b16 %v19
  %v102 = vunpack.c.l.b16 %v20
  %v103 = vunpack.c.h.b16 %v20
  %v104 = vunpack.c.l.b16 %v21
  %v105 = vunpack.c.h.b16 %v21
  %v106 = vunpack.c.l.b16 %v22
  %v107 = vunpack.c.h.b16 %v22
  %v108 = vunpack.c.l.b16 %v23
  %v109 = vunpack.c.h.b16 %v23
  %v110 = vunpack.c.l.b16 %v24
  %v111 = vunpack.c.h.b16 %v24
  %v112 = vunpack.c.l.b16 %v25
  %v113 = vunpack.c.h.b16 %v25
  %v114 = vpack.c.b16 %v102, %v98
  %v115 = vpack.c.b16 %v103, %v99
  %v116 = vpack.c.b16 %v104, %v100
  %v117 = vpack.c.b16 %v105, %v101
  %v118 = vpack.c.b16 %v110, %v106
  %v119 = vpack.c.b16 %v111, %v107
  %v120 = vpack.c.b16 %v112, %v108
  %v121 = vpack.c.b16 %v113, %v109
  %v194 = vunpack.c.l.b16 %v26
  %v195 = vunpack.c.l.b16 %v27
  %v196 = vunpack.c.l.b16 %v28
  %v197 = vunpack.c.l.b16 %v29
  %v198 = vunpack.c.l.b16 %v30
  %v199 = vunpack.c.l.b16 %v31
  %v200 = vunpack.c.l.b16 %v32
  %v201 = vunpack.c.l.b16 %v33
  %v202 = vunpack.c.l.b16 %v34
  %v203 = vunpack.c.l.b16 %v35
  %v204 = vunpack.c.l.b16 %v36
  %v205 = vunpack.c.l.b16 %v37
  %v206 = vunpack.c.l.b16 %v38
  %v207 = vunpack.c.l.b16 %v39
  %v208 = vunpack.c.l.b16 %v40
  %v209 = vunpack.c.l.b16 %v41
  %v210 = vunpack.c.l.b16 %v42
  %v211 = vunpack.c.l.b16 %v43
  %v212 = vunpack.c.l.b16 %v44
  %v213 = vunpack.c.l.b16 %v45
  %v214 = vunpack.c.l.b16 %v46
  %v215 = vunpack.c.l.b16 %v47
  %v216 = vunpack.c.l.b16 %v48
  %v217 = vunpack.c.l.b16 %v49
  %v218 = vunpack.c.l.b16 %v50
  %v219 = vunpack.c.l.b16 %v51
  %v220 = vunpack.c.l.b16 %v52
  %v221 = vunpack.c.l.b16 %v53
  %v222 = vunpack.c.l.b16 %v54
  %v223 = vunpack.c.l.b16 %v55
  %v224 = vunpack.c.l.b16 %v56
  %v225 = vunpack.c.l.b16 %v57
  %v226 = vunpack.c.l.b16 %v58
  %v227 = vunpack.c.l.b16 %v59
  %v228 = vunpack.c.l.b16 %v60
  %v229 = vunpack.c.l.b16 %v61
  %v230 = vunpack.c.l.b16 %v62
  %v231 = vunpack.c.l.b16 %v63
  %v232 = vunpack.c.l.b16 %v64
  %v233 = vunpack.c.l.b16 %v65
  %v234 = vunpack.c.l.b16 %v66
  %v235 = vunpack.c.l.b16 %v67
  %v236 = vunpack.c.l.b16 %v68
  %v237 = vunpack.c.l.b16 %v69
  %v238 = vunpack.c.l.b16 %v70
  %v239 = vunpack.c.l.b16 %v71
  %v240 = vunpack.c.l.b16 %v72
  %v241 = vunpack.c.l.b16 %v73
  %v242 = vunpack.c.l.b16 %v74
  %v243 = vunpack.c.l.b16 %v75
  %v244 = vunpack.c.l.b16 %v76
  %v245 = vunpack.c.l.b16 %v77
  %v246 = vunpack.c.l.b16 %v78
  %v247 = vunpack.c.l.b16 %v79
  %v248 = vunpack.c.l.b16 %v80
  %v249 = vunpack.c.l.b16 %v81
  %v250 = vunpack.c.l.b16 %v82
  %v251 = vunpack.c.l.b16 %v83
  %v252 = vunpack.c.l.b16 %v84
  %v253 = vunpack.c.l.b16 %v85
  %v254 = vunpack.c.l.b16 %v86
  %v255 = vunpack.c.l.b16 %v87
  %v256 = vunpack.c.l.b16 %v88
  %v257 = vunpack.c.l.b16 %v89
  %v258 = vpack.c.b16 %v195, %v194
  %v259 = vpack.c.b16 %v197, %v196
  %v260 = vpack.c.b16 %v199, %v198
  %v261 = vpack.c.b16 %v201, %v200
  %v262 = vpack.c.b16 %v203, %v202
  %v263 = vpack.c.b16 %v205, %v204
  %v264 = vpack.c.b16 %v207, %v206
  %v265 = vpack.c.b16 %v209, %v208
  %v266 = vpack.c.b16 %v211, %v210
  %v267 = vpack.c.b16 %v213, %v212
  %v268 = vpack.c.b16 %v215, %v214
  %v269 = vpack.c.b16 %v217, %v216
  %v270 = vpack.c.b16 %v219, %v218
  %v271 = vpack.c.b16 %v221, %v220
  %v272 = vpack.c.b16 %v223, %v222
  %v273 = vpack.c.b16 %v225, %v224
  %v274 = vpack.c.b16 %v227, %v226
  %v275 = vpack.c.b16 %v229, %v228
  %v276 = vpack.c.b16 %v231, %v230
  %v277 = vpack.c.b16 %v233, %v232
  %v278 = vpack.c.b16 %v235, %v234
  %v279 = vpack.c.b16 %v237, %v236
  %v280 = vpack.c.b16 %v239, %v238
  %v281 = vpack.c.b16 %v241, %v240
  %v282 = vpack.c.b16 %v243, %v242
  %v283 = vpack.c.b16 %v245, %v244
  %v284 = vpack.c.b16 %v247, %v246
  %v285 = vpack.c.b16 %v249, %v248
  %v286 = vpack.c.b16 %v251, %v250
  %v287 = vpack.c.b16 %v253, %v252
  %v288 = vpack.c.b16 %v255, %v254
  %v289 = vpack.c.b16 %v257, %v256
  %322 = vmatprep.subr.bf16.mxu0 0
  %323 = vmatpush1.bf16.msra.mxu0 %v258
  %324 = vmatprep.subr.bf16.mxu0 0
  %325 = vmatpush1.bf16.msra.mxu0 %v259
  %326 = vmatprep.subr.bf16.mxu0 0
  %327 = vmatpush1.bf16.msra.mxu0 %v260
  %328 = vmatprep.subr.bf16.mxu0 0
  %329 = vmatpush1.bf16.msra.mxu0 %v261
  %330 = vmatprep.subr.bf16.mxu0 0
  %331 = vmatpush1.bf16.msra.mxu0 %v262
  %332 = vmatprep.subr.bf16.mxu0 0
  %333 = vmatpush1.bf16.msra.mxu0 %v263
  %334 = vmatprep.subr.bf16.mxu0 0
  %335 = vmatpush1.bf16.msra.mxu0 %v264
  %336 = vmatprep.subr.bf16.mxu0 0
  %337 = vmatpush1.bf16.msra.mxu0 %v265
  %338 = vmatprep.subr.bf16.mxu0 0
  %339 = vmatpush1.bf16.msra.mxu0 %v266
  %340 = vmatprep.subr.bf16.mxu0 0
  %341 = vmatpush1.bf16.msra.mxu0 %v267
  %342 = vmatprep.subr.bf16.mxu0 0
  %343 = vmatpush1.bf16.msra.mxu0 %v268
  %344 = vmatprep.subr.bf16.mxu0 0
  %345 = vmatpush1.bf16.msra.mxu0 %v269
  %346 = vmatprep.subr.bf16.mxu0 0
  %347 = vmatpush1.bf16.msra.mxu0 %v270
  %348 = vmatprep.subr.bf16.mxu0 0
  %349 = vmatpush1.bf16.msra.mxu0 %v271
  %350 = vmatprep.subr.bf16.mxu0 0
  %351 = vmatpush1.bf16.msra.mxu0 %v272
  %352 = vmatprep.subr.bf16.mxu0 0
  %353 = vmatpush1.bf16.msra.mxu0 %v273
  %354 = vmatprep.mubr.bf16.mxu0 %v115
  %355 = vmatmul.mubr.bf16.gmra.mrb[0].mxu0 %v114
  %v356 = vpop.f32.mrb[0].mxu0
  %v357 = vadd.f32 0.0, %v356
  %v358 = vpop.f32.mrb[0].mxu0
  %v359 = vpop.f32.mrb[0].mxu0
  %v360 = vadd.f32 0.0, %v359
  %v361 = vpop.f32.mrb[0].mxu0
  %362 = vmatprep.mubr.bf16.mxu0 %v119
  %363 = vmatmul.mubr.bf16.gmra.mrb[0].mxu0 %v118
  %v364 = vpop.f32.mrb[0].mxu0
  %v365 = vadd.f32 0.0, %v364
  %v366 = vpop.f32.mrb[0].mxu0
  %v367 = vpop.f32.mrb[0].mxu0
  %v368 = vadd.f32 0.0, %v367
  %v369 = vpop.f32.mrb[0].mxu0
  %370 = vdwg.mxu0
  %371 = vmatprep.subr.bf16.mxu0 0
  %372 = vmatpush1.bf16.msra.mxu0 %v274
  %373 = vmatprep.subr.bf16.mxu0 0
  %374 = vmatpush1.bf16.msra.mxu0 %v275
  %375 = vmatprep.subr.bf16.mxu0 0
  %376 = vmatpush1.bf16.msra.mxu0 %v276
  %377 = vmatprep.subr.bf16.mxu0 0
  %378 = vmatpush1.bf16.msra.mxu0 %v277
  %379 = vmatprep.subr.bf16.mxu0 0
  %380 = vmatpush1.bf16.msra.mxu0 %v278
  %381 = vmatprep.subr.bf16.mxu0 0
  %382 = vmatpush1.bf16.msra.mxu0 %v279
  %383 = vmatprep.subr.bf16.mxu0 0
  %384 = vmatpush1.bf16.msra.mxu0 %v280
  %385 = vmatprep.subr.bf16.mxu0 0
  %386 = vmatpush1.bf16.msra.mxu0 %v281
  %387 = vmatprep.subr.bf16.mxu0 0
  %388 = vmatpush1.bf16.msra.mxu0 %v282
  %389 = vmatprep.subr.bf16.mxu0 0
  %390 = vmatpush1.bf16.msra.mxu0 %v283
  %391 = vmatprep.subr.bf16.mxu0 0
  %392 = vmatpush1.bf16.msra.mxu0 %v284
  %393 = vmatprep.subr.bf16.mxu0 0
  %394 = vmatpush1.bf16.msra.mxu0 %v285
  %395 = vmatprep.subr.bf16.mxu0 0
  %396 = vmatpush1.bf16.msra.mxu0 %v286
  %397 = vmatprep.subr.bf16.mxu0 0
  %398 = vmatpush1.bf16.msra.mxu0 %v287
  %399 = vmatprep.subr.bf16.mxu0 0
  %400 = vmatpush1.bf16.msra.mxu0 %v288
  %401 = vmatprep.subr.bf16.mxu0 0
  %402 = vmatpush1.bf16.msra.mxu0 %v289
  %403 = vmatprep.mubr.bf16.mxu0 %v117
  %404 = vmatmul.mubr.bf16.gmra.mrb[0].mxu0 %v116
  %v405 = vpop.f32.mrb[0].mxu0
  %v406 = vadd.f32 %v357, %v405
  %v407 = vpop.f32.mrb[0].mxu0
  %v408 = vpop.f32.mrb[0].mxu0
  %v409 = vadd.f32 %v360, %v408
  %v410 = vpop.f32.mrb[0].mxu0
  %411 = vmatprep.mubr.bf16.mxu0 %v121
  %412 = vmatmul.mubr.bf16.gmra.mrb[0].mxu0 %v120
  %v413 = vpop.f32.mrb[0].mxu0
  %v414 = vadd.f32 %v365, %v413
  %v415 = vpop.f32.mrb[0].mxu0
  %v416 = vpop.f32.mrb[0].mxu0
  %v417 = vadd.f32 %v368, %v416
  %v418 = vpop.f32.mrb[0].mxu0
  %419 = vdwg.mxu0
  %vm420 = vcmask 523264
  %v421 = vsel %vm420, %v406, 0.0
  %v422 = vsel %vm420, %v409, 0.0
  %v423 = vadd.f32 %v421, %v422
  %v424 = vsel %vm420, %v414, 0.0
  %v425 = vadd.f32 %v423, %v424
  %v426 = vsel %vm420, %v417, 0.0
  %v427 = vadd.f32 %v425, %v426
  %v428 = vrot.slane %v427, 4
  %v429 = vadd.f32 %v427, %v428
  %v430 = vrot.slane %v429, 2
  %v431 = vadd.f32 %v429, %v430
  %v432 = vrot.slane %v431, 1
  %v433 = vadd.f32 %v431, %v432
  %v434 = vmul.f32 %v433, 0.03125
  %v435 = vmul.f32 %v406, %v406
  %v436 = vmul.f32 %v409, %v409
  %v437 = vmul.f32 %v414, %v414
  %v438 = vmul.f32 %v417, %v417
  %v439 = vsel %vm420, %v435, 0.0
  %v440 = vsel %vm420, %v436, 0.0
  %v441 = vadd.f32 %v439, %v440
  %v442 = vsel %vm420, %v437, 0.0
  %v443 = vadd.f32 %v441, %v442
  %v444 = vsel %vm420, %v438, 0.0
  %v445 = vadd.f32 %v443, %v444
  %v446 = vrot.slane %v445, 4
  %v447 = vadd.f32 %v445, %v446
  %v448 = vrot.slane %v447, 2
  %v449 = vadd.f32 %v447, %v448
  %v450 = vrot.slane %v449, 1
  %v451 = vadd.f32 %v449, %v450
  %v452 = vmul.f32 %v451, 0.03125
  %v453 = vmul.f32 %v434, %v434
  %v454 = vsub.f32 %v452, %v453
  %v455 = vmax.f32 %v454, 0.0
  %v456 = vld [vmem:[%s2] sm:$0x1]
  %v457 = vadd.f32 %v455, 1e-05
  %v458 = vrsqrt.pop %v457
  %v459 = vmul.f32 %v456, %v458
  %v460 = vld [vmem:[%s3] sm:$0x1]
  %v461 = vmul.f32 %v434, %v459
  %v462 = vsub.f32 %v460, %v461
  %v464 = vlaneseq
  %v465 = vshrl.u32 %v464, 7
  %v466 = vsub.s32 0, %v465
  %v467 = vrot.slane %v459, %v466
  %v469 = vmul.f32 %v406, %v467
  %v470 = vmul.f32 %v409, %v467
  %v471 = vmul.f32 %v414, %v467
  %v472 = vmul.f32 %v417, %v467
  %v474 = vlaneseq
  %v475 = vshrl.u32 %v474, 7
  %v476 = vsub.s32 0, %v475
  %v477 = vrot.slane %v462, %v476
  %v479 = vadd.f32 %v469, %v477
  %v480 = vadd.f32 %v470, %v477
  %v481 = vadd.f32 %v471, %v477
  %v482 = vadd.f32 %v472, %v477
  %v483 = vmul.f32 %v479, 0.2
  %v484 = vmul.f32 %v480, 0.2
  %v485 = vmul.f32 %v481, 0.2
  %v486 = vmul.f32 %v482, 0.2
  %v487 = vmax.f32 %v479, %v483
  %v488 = vmax.f32 %v480, %v484
  %v489 = vmax.f32 %v481, %v485
  %v490 = vmax.f32 %v482, %v486
  %v491 = vpack.c.bf16 %v488, %v487
  %v492 = vpack.c.bf16 %v490, %v489
  %v495 = vunpack.c.l.b16 %v491
  %v496 = vunpack.c.h.b16 %v491
  %v497 = vunpack.c.l.b16 %v492
  %v498 = vunpack.c.h.b16 %v492
  %v499 = vpack.c.b16 %v495, %v495
  %v500 = vpack.c.b16 %v496, %v496
  %v501 = vpack.c.b16 %v497, %v497
  %v502 = vpack.c.b16 %v498, %v498
  %vm507 = vcmask 519168
  %508 = vst.msk [vmem:[%s4] sm:$0xf] %vm507, %v499
  %509 = vst.msk [vmem:[%s4 + $0x4] sm:$0xf] %vm507, %v500
  %510 = vst.msk [vmem:[%s4 + $0x8] sm:$0xf] %vm507, %v501
  %511 = vst.msk [vmem:[%s4 + $0xc] sm:$0xf] %vm507, %v502
  // Predicated region
  $region18: #{netd_forward.8} parent=0 // pred_check
    _
  $region19: #{netd_forward.8} parent=0 // pred_check_branch
    %513 = sbr.rel (0) target = $region21
  $region20: #{netd_forward.8} parent=0 // pred_region
    _
  $region21: #{netd_forward.8} parent=0 // pred_fallthru
    _
  // Predicated region
  $region22: #{netd_forward.8} parent=0 // pred_check
    _
  $region23: #{netd_forward.8} parent=0 // pred_check_branch
    %515 = sbr.rel (0) target = $region25
  $region24: #{netd_forward.8} parent=0 // pred_region
    _
  $region25: #{netd_forward.8} parent=0 // pred_fallthru
    _

// kernel: netd_forward.9
$region0: #{netd_forward.9}
  #allocation0 [shape = 'u32[]', space=smem, size = 0x4, offset = 0x4, fixed_abs, tag = 'smem constant byte address 0x4 - core index']
  #allocation1 [shape = 'u32[144,128]{1,0:T(1,128)}', space=vmem, size = 0x12000, scoped, tag = 'internal scratch']
  %s0 = inlined_call_operand.vmem [shape: bf16[2,1024], index: 0, kind: input, shape index: {}]
  %s1 = inlined_call_operand.vmem [shape: bf16[1024,128], index: 1, kind: input, shape index: {}]
  %s2 = inlined_call_operand.vmem [shape: bf16[128,128], index: 2, kind: input, shape index: {}]
  %s3 = inlined_call_operand.vmem [shape: f32[1,128], index: 3, kind: input, shape index: {}]
  %s4 = inlined_call_operand.hbm [shape: f32[2,128], index: 4, kind: output, shape index: {}]
  %s5 = sld [smem:[#allocation0]]
  $region26: #{netd_forward.9} parent=0
    _
  %s7 = ssub.s32 1, %s5
  %s8 = scalar_select 0, %s7, %s5
  $region1: #{netd_forward.9} parent=0
    #allocation2 [shape = 'u8[1024]{0}', space=vmem, size = 0x400, scoped, tag = 'output window, operand 0, single buffered']
    #allocation3 [shape = 's32[1]{0}', space=sflag, size = 0x4, scoped, tag = 'scoped memory for netd_forward.9']
    %9 = vsyncpa [#allocation3], 0
    // Predicated region
    $region2: #{netd_forward.9} parent=1 // pred_check
      _
    $region3: #{netd_forward.9} parent=1 // pred_check_branch
      %11 = sbr.rel (0) target = $region5
    $region4: #{netd_forward.9} parent=1 // pred_region
      _
    $region5: #{netd_forward.9} parent=1 // pred_fallthru
      _
    // Predicated region
    $region6: #{netd_forward.9} parent=1 // pred_check
      _
    $region7: #{netd_forward.9} parent=1 // pred_check_branch
      %13 = sbr.rel (0) target = $region9
    $region8: #{netd_forward.9} parent=1 // pred_region
      _
    $region9: #{netd_forward.9} parent=1 // pred_fallthru
      _
    // Predicated region
    $region10: #{netd_forward.9} parent=1 // pred_check
      _
    $region11: #{netd_forward.9} parent=1 // pred_check_branch
      %15 = sbr.rel (0) target = $region13
    $region12: #{netd_forward.9} parent=1 // pred_region
      _
    $region13: #{netd_forward.9} parent=1 // pred_fallthru
      _
    // Predicated region
    $region14: #{netd_forward.9} parent=1 // pred_check
      _
    $region15: #{netd_forward.9} parent=1 // pred_check_branch
      %17 = sbr.rel (0) target = $region17
    $region16: #{netd_forward.9} parent=1 // pred_region
      _
    $region17: #{netd_forward.9} parent=1 // pred_fallthru
      _
    %v19 = vld [vmem:[%s0] sm:$0xff]
    %v20 = vld [vmem:[%s1] sm:$0xf]
    %v21 = vld [vmem:[%s1 + $0x4] sm:$0xf]
    %v22 = vld [vmem:[%s1 + $0x8] sm:$0xf]
    %v23 = vld [vmem:[%s1 + $0xc] sm:$0xf]
    %v24 = vld [vmem:[%s1 + $0x10] sm:$0xf]
    %v25 = vld [vmem:[%s1 + $0x14] sm:$0xf]
    %v26 = vld [vmem:[%s1 + $0x18] sm:$0xf]
    %v27 = vld [vmem:[%s1 + $0x1c] sm:$0xf]
    %v28 = vld [vmem:[%s1 + $0x20] sm:$0xf]
    %v29 = vld [vmem:[%s1 + $0x24] sm:$0xf]
    %v30 = vld [vmem:[%s1 + $0x28] sm:$0xf]
    %v31 = vld [vmem:[%s1 + $0x2c] sm:$0xf]
    %v32 = vld [vmem:[%s1 + $0x30] sm:$0xf]
    %v33 = vld [vmem:[%s1 + $0x34] sm:$0xf]
    %v34 = vld [vmem:[%s1 + $0x38] sm:$0xf]
    %v35 = vld [vmem:[%s1 + $0x3c] sm:$0xf]
    %v36 = vld [vmem:[%s1 + $0x40] sm:$0xf]
    %v37 = vld [vmem:[%s1 + $0x44] sm:$0xf]
    %v38 = vld [vmem:[%s1 + $0x48] sm:$0xf]
    %v39 = vld [vmem:[%s1 + $0x4c] sm:$0xf]
    %v40 = vld [vmem:[%s1 + $0x50] sm:$0xf]
    %v41 = vld [vmem:[%s1 + $0x54] sm:$0xf]
    %v42 = vld [vmem:[%s1 + $0x58] sm:$0xf]
    %v43 = vld [vmem:[%s1 + $0x5c] sm:$0xf]
    %v44 = vld [vmem:[%s1 + $0x60] sm:$0xf]
    %v45 = vld [vmem:[%s1 + $0x64] sm:$0xf]
    %v46 = vld [vmem:[%s1 + $0x68] sm:$0xf]
    %v47 = vld [vmem:[%s1 + $0x6c] sm:$0xf]
    %v48 = vld [vmem:[%s1 + $0x70] sm:$0xf]
    %v49 = vld [vmem:[%s1 + $0x74] sm:$0xf]
    %v50 = vld [vmem:[%s1 + $0x78] sm:$0xf]
    %v51 = vld [vmem:[%s1 + $0x7c] sm:$0xf]
    %v52 = vld [vmem:[%s1 + $0x80] sm:$0xf]
    %v53 = vld [vmem:[%s1 + $0x84] sm:$0xf]
    %v54 = vld [vmem:[%s1 + $0x88] sm:$0xf]
    %v55 = vld [vmem:[%s1 + $0x8c] sm:$0xf]
    %v56 = vld [vmem:[%s1 + $0x90] sm:$0xf]
    %v57 = vld [vmem:[%s1 + $0x94] sm:$0xf]
    %v58 = vld [vmem:[%s1 + $0x98] sm:$0xf]
    %v59 = vld [vmem:[%s1 + $0x9c] sm:$0xf]
    %v60 = vld [vmem:[%s1 + $0xa0] sm:$0xf]
    %v61 = vld [vmem:[%s1 + $0xa4] sm:$0xf]
    %v62 = vld [vmem:[%s1 + $0xa8] sm:$0xf]
    %v63 = vld [vmem:[%s1 + $0xac] sm:$0xf]
    %v64 = vld [vmem:[%s1 + $0xb0] sm:$0xf]
    %v65 = vld [vmem:[%s1 + $0xb4] sm:$0xf]
    %v66 = vld [vmem:[%s1 + $0xb8] sm:$0xf]
    %v67 = vld [vmem:[%s1 + $0xbc] sm:$0xf]
    %v68 = vld [vmem:[%s1 + $0xc0] sm:$0xf]
    %v69 = vld [vmem:[%s1 + $0xc4] sm:$0xf]
    %v70 = vld [vmem:[%s1 + $0xc8] sm:$0xf]
    %v71 = vld [vmem:[%s1 + $0xcc] sm:$0xf]
    %v72 = vld [vmem:[%s1 + $0xd0] sm:$0xf]
    %v73 = vld [vmem:[%s1 + $0xd4] sm:$0xf]
    %v74 = vld [vmem:[%s1 + $0xd8] sm:$0xf]
    %v75 = vld [vmem:[%s1 + $0xdc] sm:$0xf]
    %v76 = vld [vmem:[%s1 + $0xe0] sm:$0xf]
    %v77 = vld [vmem:[%s1 + $0xe4] sm:$0xf]
    %v78 = vld [vmem:[%s1 + $0xe8] sm:$0xf]
    %v79 = vld [vmem:[%s1 + $0xec] sm:$0xf]
    %v80 = vld [vmem:[%s1 + $0xf0] sm:$0xf]
    %v81 = vld [vmem:[%s1 + $0xf4] sm:$0xf]
    %v82 = vld [vmem:[%s1 + $0xf8] sm:$0xf]
    %v83 = vld [vmem:[%s1 + $0xfc] sm:$0xf]
    %v84 = vld [vmem:[%s1 + $0x100] sm:$0xf]
    %v85 = vld [vmem:[%s1 + $0x104] sm:$0xf]
    %v86 = vld [vmem:[%s1 + $0x108] sm:$0xf]
    %v87 = vld [vmem:[%s1 + $0x10c] sm:$0xf]
    %v88 = vld [vmem:[%s1 + $0x110] sm:$0xf]
    %v89 = vld [vmem:[%s1 + $0x114] sm:$0xf]
    %v90 = vld [vmem:[%s1 + $0x118] sm:$0xf]
    %v91 = vld [vmem:[%s1 + $0x11c] sm:$0xf]
    %v92 = vld [vmem:[%s1 + $0x120] sm:$0xf]
    %v93 = vld [vmem:[%s1 + $0x124] sm:$0xf]
    %v94 = vld [vmem:[%s1 + $0x128] sm:$0xf]
    %v95 = vld [vmem:[%s1 + $0x12c] sm:$0xf]
    %v96 = vld [vmem:[%s1 + $0x130] sm:$0xf]
    %v97 = vld [vmem:[%s1 + $0x134] sm:$0xf]
    %v98 = vld [vmem:[%s1 + $0x138] sm:$0xf]
    %v99 = vld [vmem:[%s1 + $0x13c] sm:$0xf]
    %v100 = vld [vmem:[%s1 + $0x140] sm:$0xf]
    %v101 = vld [vmem:[%s1 + $0x144] sm:$0xf]
    %v102 = vld [vmem:[%s1 + $0x148] sm:$0xf]
    %v103 = vld [vmem:[%s1 + $0x14c] sm:$0xf]
    %v104 = vld [vmem:[%s1 + $0x150] sm:$0xf]
    %v105 = vld [vmem:[%s1 + $0x154] sm:$0xf]
    %v106 = vld [vmem:[%s1 + $0x158] sm:$0xf]
    %v107 = vld [vmem:[%s1 + $0x15c] sm:$0xf]
    %v108 = vld [vmem:[%s1 + $0x160] sm:$0xf]
    %v109 = vld [vmem:[%s1 + $0x164] sm:$0xf]
    %v110 = vld [vmem:[%s1 + $0x168] sm:$0xf]
    %v111 = vld [vmem:[%s1 + $0x16c] sm:$0xf]
    %v112 = vld [vmem:[%s1 + $0x170] sm:$0xf]
    %v113 = vld [vmem:[%s1 + $0x174] sm:$0xf]
    %v114 = vld [vmem:[%s1 + $0x178] sm:$0xf]
    %v115 = vld [vmem:[%s1 + $0x17c] sm:$0xf]
    %v116 = vld [vmem:[%s1 + $0x180] sm:$0xf]
    %v117 = vld [vmem:[%s1 + $0x184] sm:$0xf]
    %v118 = vld [vmem:[%s1 + $0x188] sm:$0xf]
    %v119 = vld [vmem:[%s1 + $0x18c] sm:$0xf]
    %v120 = vld [vmem:[%s1 + $0x190] sm:$0xf]
    %v121 = vld [vmem:[%s1 + $0x194] sm:$0xf]
    %v122 = vld [vmem:[%s1 + $0x198] sm:$0xf]
    %v123 = vld [vmem:[%s1 + $0x19c] sm:$0xf]
    %v124 = vld [vmem:[%s1 + $0x1a0] sm:$0xf]
    %v125 = vld [vmem:[%s1 + $0x1a4] sm:$0xf]
    %v126 = vld [vmem:[%s1 + $0x1a8] sm:$0xf]
    %v127 = vld [vmem:[%s1 + $0x1ac] sm:$0xf]
    %v128 = vld [vmem:[%s1 + $0x1b0] sm:$0xf]
    %v129 = vld [vmem:[%s1 + $0x1b4] sm:$0xf]
    %v130 = vld [vmem:[%s1 + $0x1b8] sm:$0xf]
    %v131 = vld [vmem:[%s1 + $0x1bc] sm:$0xf]
    %v132 = vld [vmem:[%s1 + $0x1c0] sm:$0xf]
    %v133 = vld [vmem:[%s1 + $0x1c4] sm:$0xf]
    %v134 = vld [vmem:[%s1 + $0x1c8] sm:$0xf]
    %v135 = vld [vmem:[%s1 + $0x1cc] sm:$0xf]
    %v136 = vld [vmem:[%s1 + $0x1d0] sm:$0xf]
    %v137 = vld [vmem:[%s1 + $0x1d4] sm:$0xf]
    %v138 = vld [vmem:[%s1 + $0x1d8] sm:$0xf]
    %v139 = vld [vmem:[%s1 + $0x1dc] sm:$0xf]
    %v140 = vld [vmem:[%s1 + $0x1e0] sm:$0xf]
    %v141 = vld [vmem:[%s1 + $0x1e4] sm:$0xf]
    %v142 = vld [vmem:[%s1 + $0x1e8] sm:$0xf]
    %v143 = vld [vmem:[%s1 + $0x1ec] sm:$0xf]
    %v144 = vld [vmem:[%s1 + $0x1f0] sm:$0xf]
    %v145 = vld [vmem:[%s1 + $0x1f4] sm:$0xf]
    %v146 = vld [vmem:[%s1 + $0x1f8] sm:$0xf]
    %v147 = vld [vmem:[%s1 + $0x1fc] sm:$0xf]
    %v149 = vcombine.high %v19, %v19
    %v151 = vunpack.c.l.s4 1966171168
    %v152 = vunpack.c.0.s8 %v151
    %v153 = vlaneseq
    %v154 = vshrl.u32 %v153, 7
    %v155 = vsub.s32 %v152, %v154
    %v156 = vrot.slane %v19, %v155
    %v158 = vunpack.c.l.s4 1966171168
    %v159 = vunpack.c.0.s8 %v158
    %v160 = vlaneseq
    %v161 = vshrl.u32 %v160, 7
    %v162 = vsub.s32 %v159, %v161
    %v163 = vrot.slane %v149, %v162
    %v164 = vcombine.high %v156, %v156
    %v165 = vcombine.high %v163, %v163
    %v167 = vunpack.c.l.s4 1966171168
    %v168 = vunpack.c.0.s8 %v167
    %v169 = vlaneseq
    %v170 = vshrl.u32 %v169, 7
    %v171 = vsub.s32 %v168, %v170
    %v172 = vrot.slane %v156, %v171
    %v174 = vunpack.c.l.s4 1966171168
    %v175 = vunpack.c.0.s8 %v174
    %v176 = vlaneseq
    %v177 = vshrl.u32 %v176, 7
    %v178 = vsub.s32 %v175, %v177
    %v179 = vrot.slane %v163, %v178
    %v181 = vunpack.c.l.s4 1966171168
    %v182 = vunpack.c.0.s8 %v181
    %v183 = vlaneseq
    %v184 = vshrl.u32 %v183, 7
    %v185 = vsub.s32 %v182, %v184
    %v186 = vrot.slane %v164, %v185
    %v188 = vunpack.c.l.s4 1966171168
    %v189 = vunpack.c.0.s8 %v188
    %v190 = vlaneseq
    %v191 = vshrl.u32 %v190, 7
    %v192 = vsub.s32 %v189, %v191
    %v193 = vrot.slane %v165, %v192
    %v194 = vcombine.high %v172, %v172
    %v195 = vcombine.high %v179, %v179
    %v196 = vcombine.high %v186, %v186
    %v197 = vcombine.high %v193, %v193
    %v334 = vunpack.c.l.b16 %v20
    %v335 = vunpack.c.l.b16 %v21
    %v336 = vunpack.c.l.b16 %v22
    %v337 = vunpack.c.l.b16 %v23
    %v338 = vunpack.c.l.b16 %v24
    %v339 = vunpack.c.l.b16 %v25
    %v340 = vunpack.c.l.b16 %v26
    %v341 = vunpack.c.l.b16 %v27
    %v342 = vunpack.c.l.b16 %v28
    %v343 = vunpack.c.l.b16 %v29
    %v344 = vunpack.c.l.b16 %v30
    %v345 = vunpack.c.l.b16 %v31
    %v346 = vunpack.c.l.b16 %v32
    %v347 = vunpack.c.l.b16 %v33
    %v348 = vunpack.c.l.b16 %v34
    %v349 = vunpack.c.l.b16 %v35
    %v350 = vunpack.c.l.b16 %v36
    %v351 = vunpack.c.l.b16 %v37
    %v352 = vunpack.c.l.b16 %v38
    %v353 = vunpack.c.l.b16 %v39
    %v354 = vunpack.c.l.b16 %v40
    %v355 = vunpack.c.l.b16 %v41
    %v356 = vunpack.c.l.b16 %v42
    %v357 = vunpack.c.l.b16 %v43
    %v358 = vunpack.c.l.b16 %v44
    %v359 = vunpack.c.l.b16 %v45
    %v360 = vunpack.c.l.b16 %v46
    %v361 = vunpack.c.l.b16 %v47
    %v362 = vunpack.c.l.b16 %v48
    %v363 = vunpack.c.l.b16 %v49
    %v364 = vunpack.c.l.b16 %v50
    %v365 = vunpack.c.l.b16 %v51
    %v366 = vunpack.c.l.b16 %v52
    %v367 = vunpack.c.l.b16 %v53
    %v368 = vunpack.c.l.b16 %v54
    %v369 = vunpack.c.l.b16 %v55
    %v370 = vunpack.c.l.b16 %v56
    %v371 = vunpack.c.l.b16 %v57
    %v372 = vunpack.c.l.b16 %v58
    %v373 = vunpack.c.l.b16 %v59
    %v374 = vunpack.c.l.b16 %v60
    %v375 = vunpack.c.l.b16 %v61
    %v376 = vunpack.c.l.b16 %v62
    %v377 = vunpack.c.l.b16 %v63
    %v378 = vunpack.c.l.b16 %v64
    %v379 = vunpack.c.l.b16 %v65
    %v380 = vunpack.c.l.b16 %v66
    %v381 = vunpack.c.l.b16 %v67
    %v382 = vunpack.c.l.b16 %v68
    %v383 = vunpack.c.l.b16 %v69
    %v384 = vunpack.c.l.b16 %v70
    %v385 = vunpack.c.l.b16 %v71
    %v386 = vunpack.c.l.b16 %v72
    %v387 = vunpack.c.l.b16 %v73
    %v388 = vunpack.c.l.b16 %v74
    %v389 = vunpack.c.l.b16 %v75
    %v390 = vunpack.c.l.b16 %v76
    %v391 = vunpack.c.l.b16 %v77
    %v392 = vunpack.c.l.b16 %v78
    %v393 = vunpack.c.l.b16 %v79
    %v394 = vunpack.c.l.b16 %v80
    %v395 = vunpack.c.l.b16 %v81
    %v396 = vunpack.c.l.b16 %v82
    %v397 = vunpack.c.l.b16 %v83
    %v398 = vunpack.c.l.b16 %v84
    %v399 = vunpack.c.l.b16 %v85
    %v400 = vunpack.c.l.b16 %v86
    %v401 = vunpack.c.l.b16 %v87
    %v402 = vunpack.c.l.b16 %v88
    %v403 = vunpack.c.l.b16 %v89
    %v404 = vunpack.c.l.b16 %v90
    %v405 = vunpack.c.l.b16 %v91
    %v406 = vunpack.c.l.b16 %v92
    %v407 = vunpack.c.l.b16 %v93
    %v408 = vunpack.c.l.b16 %v94
    %v409 = vunpack.c.l.b16 %v95
    %v410 = vunpack.c.l.b16 %v96
    %v411 = vunpack.c.l.b16 %v97
    %v412 = vunpack.c.l.b16 %v98
    %v413 = vunpack.c.l.b16 %v99
    %v414 = vunpack.c.l.b16 %v100
    %v415 = vunpack.c.l.b16 %v101
    %v416 = vunpack.c.l.b16 %v102
    %v417 = vunpack.c.l.b16 %v103
    %v418 = vunpack.c.l.b16 %v104
    %v419 = vunpack.c.l.b16 %v105
    %v420 = vunpack.c.l.b16 %v106
    %v421 = vunpack.c.l.b16 %v107
    %v422 = vunpack.c.l.b16 %v108
    %v423 = vunpack.c.l.b16 %v109
    %v424 = vunpack.c.l.b16 %v110
    %v425 = vunpack.c.l.b16 %v111
    %v426 = vunpack.c.l.b16 %v112
    %v427 = vunpack.c.l.b16 %v113
    %v428 = vunpack.c.l.b16 %v114
    %v429 = vunpack.c.l.b16 %v115
    %v430 = vunpack.c.l.b16 %v116
    %v431 = vunpack.c.l.b16 %v117
    %v432 = vunpack.c.l.b16 %v118
    %v433 = vunpack.c.l.b16 %v119
    %v434 = vunpack.c.l.b16 %v120
    %v435 = vunpack.c.l.b16 %v121
    %v436 = vunpack.c.l.b16 %v122
    %v437 = vunpack.c.l.b16 %v123
    %v438 = vunpack.c.l.b16 %v124
    %v439 = vunpack.c.l.b16 %v125
    %v440 = vunpack.c.l.b16 %v126
    %v441 = vunpack.c.l.b16 %v127
    %v442 = vunpack.c.l.b16 %v128
    %v443 = vunpack.c.l.b16 %v129
    %v444 = vunpack.c.l.b16 %v130
    %v445 = vunpack.c.l.b16 %v131
    %v446 = vunpack.c.l.b16 %v132
    %v447 = vunpack.c.l.b16 %v133
    %v448 = vunpack.c.l.b16 %v134
    %v449 = vunpack.c.l.b16 %v135
    %v450 = vunpack.c.l.b16 %v136
    %v451 = vunpack.c.l.b16 %v137
    %v452 = vunpack.c.l.b16 %v138
    %v453 = vunpack.c.l.b16 %v139
    %v454 = vunpack.c.l.b16 %v140
    %v455 = vunpack.c.l.b16 %v141
    %v456 = vunpack.c.l.b16 %v142
    %v457 = vunpack.c.l.b16 %v143
    %v458 = vunpack.c.l.b16 %v144
    %v459 = vunpack.c.l.b16 %v145
    %v460 = vunpack.c.l.b16 %v146
    %v461 = vunpack.c.l.b16 %v147
    %v462 = vpack.c.b16 %v335, %v334
    %v463 = vpack.c.b16 %v337, %v336
    %v464 = vpack.c.b16 %v339, %v338
    %v465 = vpack.c.b16 %v341, %v340
    %v466 = vpack.c.b16 %v343, %v342
    %v467 = vpack.c.b16 %v345, %v344
    %v468 = vpack.c.b16 %v347, %v346
    %v469 = vpack.c.b16 %v349, %v348
    %v470 = vpack.c.b16 %v351, %v350
    %v471 = vpack.c.b16 %v353, %v352
    %v472 = vpack.c.b16 %v355, %v354
    %v473 = vpack.c.b16 %v357, %v356
    %v474 = vpack.c.b16 %v359, %v358
    %v475 = vpack.c.b16 %v361, %v360
    %v476 = vpack.c.b16 %v363, %v362
    %v477 = vpack.c.b16 %v365, %v364
    %v478 = vpack.c.b16 %v367, %v366
    %v479 = vpack.c.b16 %v369, %v368
    %v480 = vpack.c.b16 %v371, %v370
    %v481 = vpack.c.b16 %v373, %v372
    %v482 = vpack.c.b16 %v375, %v374
    %v483 = vpack.c.b16 %v377, %v376
    %v484 = vpack.c.b16 %v379, %v378
    %v485 = vpack.c.b16 %v381, %v380
    %v486 = vpack.c.b16 %v383, %v382
    %v487 = vpack.c.b16 %v385, %v384
    %v488 = vpack.c.b16 %v387, %v386
    %v489 = vpack.c.b16 %v389, %v388
    %v490 = vpack.c.b16 %v391, %v390
    %v491 = vpack.c.b16 %v393, %v392
    %v492 = vpack.c.b16 %v395, %v394
    %v493 = vpack.c.b16 %v397, %v396
    %v494 = vpack.c.b16 %v399, %v398
    %v495 = vpack.c.b16 %v401, %v400
    %v496 = vpack.c.b16 %v403, %v402
    %v497 = vpack.c.b16 %v405, %v404
    %v498 = vpack.c.b16 %v407, %v406
    %v499 = vpack.c.b16 %v409, %v408
    %v500 = vpack.c.b16 %v411, %v410
    %v501 = vpack.c.b16 %v413, %v412
    %v502 = vpack.c.b16 %v415, %v414
    %v503 = vpack.c.b16 %v417, %v416
    %v504 = vpack.c.b16 %v419, %v418
    %v505 = vpack.c.b16 %v421, %v420
    %v506 = vpack.c.b16 %v423, %v422
    %v507 = vpack.c.b16 %v425, %v424
    %v508 = vpack.c.b16 %v427, %v426
    %v509 = vpack.c.b16 %v429, %v428
    %v510 = vpack.c.b16 %v431, %v430
    %v511 = vpack.c.b16 %v433, %v432
    %v512 = vpack.c.b16 %v435, %v434
    %v513 = vpack.c.b16 %v437, %v436
    %v514 = vpack.c.b16 %v439, %v438
    %v515 = vpack.c.b16 %v441, %v440
    %v516 = vpack.c.b16 %v443, %v442
    %v517 = vpack.c.b16 %v445, %v444
    %v518 = vpack.c.b16 %v447, %v446
    %v519 = vpack.c.b16 %v449, %v448
    %v520 = vpack.c.b16 %v451, %v450
    %v521 = vpack.c.b16 %v453, %v452
    %v522 = vpack.c.b16 %v455, %v454
    %v523 = vpack.c.b16 %v457, %v456
    %v524 = vpack.c.b16 %v459, %v458
    %v525 = vpack.c.b16 %v461, %v460
    %590 = vmatprep.subr.bf16.mxu0 0
    %591 = vmatpush1.bf16.msra.mxu0 %v462
    %592 = vmatprep.subr.bf16.mxu0 0
    %593 = vmatpush1.bf16.msra.mxu0 %v463
    %594 = vmatprep.subr.bf16.mxu0 0
    %595 = vmatpush1.bf16.msra.mxu0 %v464
    %596 = vmatprep.subr.bf16.mxu0 0
    %597 = vmatpush1.bf16.msra.mxu0 %v465
    %598 = vmatprep.subr.bf16.mxu0 0
    %599 = vmatpush1.bf16.msra.mxu0 %v466
    %600 = vmatprep.subr.bf16.mxu0 0
    %601 = vmatpush1.bf16.msra.mxu0 %v467
    %602 = vmatprep.subr.bf16.mxu0 0
    %603 = vmatpush1.bf16.msra.mxu0 %v468
    %604 = vmatprep.subr.bf16.mxu0 0
    %605 = vmatpush1.bf16.msra.mxu0 %v469
    %606 = vmatprep.subr.bf16.mxu0 0
    %607 = vmatpush1.bf16.msra.mxu0 %v470
    %608 = vmatprep.subr.bf16.mxu0 0
    %609 = vmatpush1.bf16.msra.mxu0 %v471
    %610 = vmatprep.subr.bf16.mxu0 0
    %611 = vmatpush1.bf16.msra.mxu0 %v472
    %612 = vmatprep.subr.bf16.mxu0 0
    %613 = vmatpush1.bf16.msra.mxu0 %v473
    %614 = vmatprep.subr.bf16.mxu0 0
    %615 = vmatpush1.bf16.msra.mxu0 %v474
    %616 = vmatprep.subr.bf16.mxu0 0
    %617 = vmatpush1.bf16.msra.mxu0 %v475
    %618 = vmatprep.subr.bf16.mxu0 0
    %619 = vmatpush1.bf16.msra.mxu0 %v476
    %620 = vmatprep.subr.bf16.mxu0 0
    %621 = vmatpush1.bf16.msra.mxu0 %v477
    %622 = vmatprep.mubr.bf16.mxu0 %v186
    %623 = vmatmul.mubr.bf16.gmra.mrb[0].mxu0 %v172
    %v624 = vpop.f32.mrb[0].mxu0
    %v625 = vadd.f32 0.0, %v624
    %v626 = vpop.f32.mrb[0].mxu0
    %v627 = vpop.f32.mrb[0].mxu0
    %v628 = vpop.f32.mrb[0].mxu0
    %629 = vdwg.mxu0
    %630 = vmatprep.subr.bf16.mxu0 0
    %631 = vmatpush1.bf16.msra.mxu0 %v478
    %632 = vmatprep.subr.bf16.mxu0 0
    %633 = vmatpush1.bf16.msra.mxu0 %v479
    %634 = vmatprep.subr.bf16.mxu0 0
    %635 = vmatpush1.bf16.msra.mxu0 %v480
    %636 = vmatprep.subr.bf16.mxu0 0
    %637 = vmatpush1.bf16.msra.mxu0 %v481
    %638 = vmatprep.subr.bf16.mxu0 0
    %639 = vmatpush1.bf16.msra.mxu0 %v482
    %640 = vmatprep.subr.bf16.mxu0 0
    %641 = vmatpush1.bf16.msra.mxu0 %v483
    %642 = vmatprep.subr.bf16.mxu0 0
    %643 = vmatpush1.bf16.msra.mxu0 %v484
    %644 = vmatprep.subr.bf16.mxu0 0
    %645 = vmatpush1.bf16.msra.mxu0 %v485
    %646 = vmatprep.subr.bf16.mxu0 0
    %647 = vmatpush1.bf16.msra.mxu0 %v486
    %648 = vmatprep.subr.bf16.mxu0 0
    %649 = vmatpush1.bf16.msra.mxu0 %v487
    %650 = vmatprep.subr.bf16.mxu0 0
    %651 = vmatpush1.bf16.msra.mxu0 %v488
    %652 = vmatprep.subr.bf16.mxu0 0
    %653 = vmatpush1.bf16.msra.mxu0 %v489
    %654 = vmatprep.subr.bf16.mxu0 0
    %655 = vmatpush1.bf16.msra.mxu0 %v490
    %656 = vmatprep.subr.bf16.mxu0 0
    %657 = vmatpush1.bf16.msra.mxu0 %v491
    %658 = vmatprep.subr.bf16.mxu0 0
    %659 = vmatpush1.bf16.msra.mxu0 %v492
    %660 = vmatprep.subr.bf16.mxu0 0
    %661 = vmatpush1.bf16.msra.mxu0 %v493
    %662 = vmatprep.mubr.bf16.mxu0 %v196
    %663 = vmatmul.mubr.bf16.gmra.mrb[0].mxu0 %v194
    %v664 = vpop.f32.mrb[0].mxu0
    %v665 = vadd.f32 %v625, %v664
    %v666 = vpop.f32.mrb[0].mxu0
    %v667 = vpop.f32.mrb[0].mxu0
    %v668 = vpop.f32.mrb[0].mxu0
    %669 = vdwg.mxu0
    %670 = vmatprep.subr.bf16.mxu0 0
    %671 = vmatpush1.bf16.msra.mxu0 %v494
    %672 = vmatprep.subr.bf16.mxu0 0
    %673 = vmatpush1.bf16.msra.mxu0 %v495
    %674 = vmatprep.subr.bf16.mxu0 0
    %675 = vmatpush1.bf16.msra.mxu0 %v496
    %676 = vmatprep.subr.bf16.mxu0 0
    %677 = vmatpush1.bf16.msra.mxu0 %v497
    %678 = vmatprep.subr.bf16.mxu0 0
    %679 = vmatpush1.bf16.msra.mxu0 %v498
    %680 = vmatprep.subr.bf16.mxu0 0
    %681 = vmatpush1.bf16.msra.mxu0 %v499
    %682 = vmatprep.subr.bf16.mxu0 0
    %683 = vmatpush1.bf16.msra.mxu0 %v500
    %684 = vmatprep.subr.bf16.mxu0 0
    %685 = vmatpush1.bf16.msra.mxu0 %v501
    %686 = vmatprep.subr.bf16.mxu0 0
    %687 = vmatpush1.bf16.msra.mxu0 %v502
    %688 = vmatprep.subr.bf16.mxu0 0
    %689 = vmatpush1.bf16.msra.mxu0 %v503
    %690 = vmatprep.subr.bf16.mxu0 0
    %691 = vmatpush1.bf16.msra.mxu0 %v504
    %692 = vmatprep.subr.bf16.mxu0 0
    %693 = vmatpush1.bf16.msra.mxu0 %v505
    %694 = vmatprep.subr.bf16.mxu0 0
    %695 = vmatpush1.bf16.msra.mxu0 %v506
    %696 = vmatprep.subr.bf16.mxu0 0
    %697 = vmatpush1.bf16.msra.mxu0 %v507
    %698 = vmatprep.subr.bf16.mxu0 0
    %699 = vmatpush1.bf16.msra.mxu0 %v508
    %700 = vmatprep.subr.bf16.mxu0 0
    %701 = vmatpush1.bf16.msra.mxu0 %v509
    %702 = vmatprep.mubr.bf16.mxu0 %v193
    %703 = vmatmul.mubr.bf16.gmra.mrb[0].mxu0 %v179
    %v704 = vpop.f32.mrb[0].mxu0
    %v705 = vadd.f32 %v665, %v704
    %v706 = vpop.f32.mrb[0].mxu0
    %v707 = vpop.f32.mrb[0].mxu0
    %v708 = vpop.f32.mrb[0].mxu0
    %709 = vdwg.mxu0
    %710 = vmatprep.subr.bf16.mxu0 0
    %711 = vmatpush1.bf16.msra.mxu0 %v510
    %712 = vmatprep.subr.bf16.mxu0 0
    %713 = vmatpush1.bf16.msra.mxu0 %v511
    %714 = vmatprep.subr.bf16.mxu0 0
    %715 = vmatpush1.bf16.msra.mxu0 %v512
    %716 = vmatprep.subr.bf16.mxu0 0
    %717 = vmatpush1.bf16.msra.mxu0 %v513
    %718 = vmatprep.subr.bf16.mxu0 0
    %719 = vmatpush1.bf16.msra.mxu0 %v514
    %720 = vmatprep.subr.bf16.mxu0 0
    %721 = vmatpush1.bf16.msra.mxu0 %v515
    %722 = vmatprep.subr.bf16.mxu0 0
    %723 = vmatpush1.bf16.msra.mxu0 %v516
    %724 = vmatprep.subr.bf16.mxu0 0
    %725 = vmatpush1.bf16.msra.mxu0 %v517
    %726 = vmatprep.subr.bf16.mxu0 0
    %727 = vmatpush1.bf16.msra.mxu0 %v518
    %728 = vmatprep.subr.bf16.mxu0 0
    %729 = vmatpush1.bf16.msra.mxu0 %v519
    %730 = vmatprep.subr.bf16.mxu0 0
    %731 = vmatpush1.bf16.msra.mxu0 %v520
    %732 = vmatprep.subr.bf16.mxu0 0
    %733 = vmatpush1.bf16.msra.mxu0 %v521
    %734 = vmatprep.subr.bf16.mxu0 0
    %735 = vmatpush1.bf16.msra.mxu0 %v522
    %736 = vmatprep.subr.bf16.mxu0 0
    %737 = vmatpush1.bf16.msra.mxu0 %v523
    %738 = vmatprep.subr.bf16.mxu0 0
    %739 = vmatpush1.bf16.msra.mxu0 %v524
    %740 = vmatprep.subr.bf16.mxu0 0
    %741 = vmatpush1.bf16.msra.mxu0 %v525
    %742 = vmatprep.mubr.bf16.mxu0 %v197
    %743 = vmatmul.mubr.bf16.gmra.mrb[0].mxu0 %v195
    %v744 = vpop.f32.mrb[0].mxu0
    %v745 = vadd.f32 %v705, %v744
    %v746 = vpop.f32.mrb[0].mxu0
    %v747 = vpop.f32.mrb[0].mxu0
    %v748 = vpop.f32.mrb[0].mxu0
    %749 = vdwg.mxu0
    %v750 = vpack.c.bf16 %v745, %v745
    %v751 = vld [vmem:[%s2] sm:$0xf]
    %v752 = vld [vmem:[%s2 + $0x4] sm:$0xf]
    %v753 = vld [vmem:[%s2 + $0x8] sm:$0xf]
    %v754 = vld [vmem:[%s2 + $0xc] sm:$0xf]
    %v755 = vld [vmem:[%s2 + $0x10] sm:$0xf]
    %v756 = vld [vmem:[%s2 + $0x14] sm:$0xf]
    %v757 = vld [vmem:[%s2 + $0x18] sm:$0xf]
    %v758 = vld [vmem:[%s2 + $0x1c] sm:$0xf]
    %v759 = vld [vmem:[%s2 + $0x20] sm:$0xf]
    %v760 = vld [vmem:[%s2 + $0x24] sm:$0xf]
    %v761 = vld [vmem:[%s2 + $0x28] sm:$0xf]
    %v762 = vld [vmem:[%s2 + $0x2c] sm:$0xf]
    %v763 = vld [vmem:[%s2 + $0x30] sm:$0xf]
    %v764 = vld [vmem:[%s2 + $0x34] sm:$0xf]
    %v765 = vld [vmem:[%s2 + $0x38] sm:$0xf]
    %v766 = vld [vmem:[%s2 + $0x3c] sm:$0xf]
    %v767 = vld [vmem:[%s3] sm:$0x1]
    %v769 = vlaneseq
    %v770 = vshrl.u32 %v769, 7
    %v771 = vsub.s32 0, %v770
    %v772 = vrot.slane %v767, %v771
    %v790 = vunpack.c.l.b16 %v751
    %v791 = vunpack.c.l.b16 %v752
    %v792 = vunpack.c.l.b16 %v753
    %v793 = vunpack.c.l.b16 %v754
    %v794 = vunpack.c.l.b16 %v755
    %v795 = vunpack.c.l.b16 %v756
    %v796 = vunpack.c.l.b16 %v757
    %v797 = vunpack.c.l.b16 %v758
    %v798 = vunpack.c.l.b16 %v759
    %v799 = vunpack.c.l.b16 %v760
    %v800 = vunpack.c.l.b16 %v761
    %v801 = vunpack.c.l.b16 %v762
    %v802 = vunpack.c.l.b16 %v763
    %v803 = vunpack.c.l.b16 %v764
    %v804 = vunpack.c.l.b16 %v765
    %v805 = vunpack.c.l.b16 %v766
    %v806 = vpack.c.b16 %v791, %v790
    %v807 = vpack.c.b16 %v793, %v792
    %v808 = vpack.c.b16 %v795, %v794
    %v809 = vpack.c.b16 %v797, %v796
    %v810 = vpack.c.b16 %v799, %v798
    %v811 = vpack.c.b16 %v801, %v800
    %v812 = vpack.c.b16 %v803, %v802
    %v813 = vpack.c.b16 %v805, %v804
    %822 = vmatprep.subr.bf16.mxu0 0
    %823 = vmatpush1.bf16.msra.mxu0 %v806
    %824 = vmatprep.subr.bf16.mxu0 0
    %825 = vmatpush1.bf16.msra.mxu0 %v807
    %826 = vmatprep.subr.bf16.mxu0 0
    %827 = vmatpush1.bf16.msra.mxu0 %v808
    %828 = vmatprep.subr.bf16.mxu0 0
    %829 = vmatpush1.bf16.msra.mxu0 %v809
    %830 = vmatprep.subr.bf16.mxu0 0
    %831 = vmatpush1.bf16.msra.mxu0 %v810
    %832 = vmatprep.subr.bf16.mxu0 0
    %833 = vmatpush1.bf16.msra.mxu0 %v811
    %834 = vmatprep.subr.bf16.mxu0 0
    %835 = vmatpush1.bf16.msra.mxu0 %v812
    %836 = vmatprep.subr.bf16.mxu0 0
    %837 = vmatpush1.bf16.msra.mxu0 %v813
    %838 = vmatprep.subr.bf16.mxu0 0
    %839 = vmatpush1.bf16.msra.mxu0 0
    %840 = vmatprep.subr.bf16.mxu0 0
    %841 = vmatpush1.bf16.msra.mxu0 0
    %842 = vmatprep.subr.bf16.mxu0 0
    %843 = vmatpush1.bf16.msra.mxu0 0
    %844 = vmatprep.subr.bf16.mxu0 0
    %845 = vmatpush1.bf16.msra.mxu0 0
    %846 = vmatprep.subr.bf16.mxu0 0
    %847 = vmatpush1.bf16.msra.mxu0 0
    %848 = vmatprep.subr.bf16.mxu0 0
    %849 = vmatpush1.bf16.msra.mxu0 0
    %850 = vmatprep.subr.bf16.mxu0 0
    %851 = vmatpush1.bf16.msra.mxu0 0
    %852 = vmatprep.subr.bf16.mxu0 0
    %853 = vmatpush1.bf16.msra.mxu0 0
    %854 = vmatprep.mubr.bf16.mxu0 0
    %855 = vmatmul.mubr.bf16.gmra.mrb[0].mxu0 %v750
    %v856 = vpop.f32.mrb[0].mxu0
    %v857 = vadd.f32 %v772, %v856
    %v858 = vpop.f32.mrb[0].mxu0
    %v859 = vpop.f32.mrb[0].mxu0
    %v860 = vpop.f32.mrb[0].mxu0
    %861 = vdwg.mxu0
    %v862 = vlaneseq
    %v863 = vand.u32 %v862, 127
    %vm864 = vcmp.lt.s32.totalorder %v863, 10
    %v865 = vsel %vm864, %v857, -1e+30
    %vm866 = vcmask 1041408
    %v867 = vsel %vm866, %v865, -inf
    %868 = vmax.xlane.f32.xlu0 %v867
    %v869 = vpop.xlane.xlu0 %868
    %v870 = vsub.f32 %v865, %v869
    %v871 = vmul.f32 %v870, 1.442695
    %v872 = vpow.pop %v871
    %v873 = vsel %vm866, %v872, 0.0
    %874 = vadd.xlane.f32.xlu0 %v873
    %v875 = vpop.xlane.xlu0 %874
    %v876 = vlog2.pop %v875
    %v877 = vmul.f32 %v876, 0.6931472
    %v878 = vsub.f32 %v870, %v877
    %879 = vst [vmem:[#allocation2] sm:$0x3] %v878
    // Predicated region
    $region18: #{netd_forward.9} parent=1 // pred_check
      _
    $region19: #{netd_forward.9} parent=1 // pred_check_branch
      %881 = sbr.rel (0) target = $region21
    $region20: #{netd_forward.9} parent=1 // pred_region
      %s883 = ssub.s32 32, 32
      %884 = vsyncadd [#allocation3], %s883
      %s886 = sshll.u32 [#allocation2], 4
      %s887 = int_to_ptr.vmem [resolvable:$true] %s886
      %889 = dma.vmem_to_hbm [thread:$0]  %s887, 32, %s4, [#allocation3]
    $region21: #{netd_forward.9} parent=1 // pred_fallthru
      _
    // Predicated region
    $region22: #{netd_forward.9} parent=1 // pred_check
      _
    $region23: #{netd_forward.9} parent=1 // pred_check_branch
      %891 = sbr.rel (0) target = $region25
    $region24: #{netd_forward.9} parent=1 // pred_region
      %892 = dma.done [#allocation3], 32
    $region25: #{netd_forward.9} parent=1 // pred_fallthru
      _
    %893 = vsyncpa [#allocation3], 1

</llo_original>
